<compile_context>
chip_gen: v7x
topology: tpu7x:2x2x1
jax: 0.10.0
libtpu: 0.0.40
codegen_flags: <defaults>
</compile_context>

<pallas_src>
import functools

import jax
import jax.numpy as jnp
from jax.experimental import pallas as pl
from jax.experimental.pallas import tpu as pltpu

EPS = 1e-5  # torch.nn.InstanceNorm2d default eps


def _dblock_kernel(xp_ref, wp_ref, params_ref, out_ref,
                   *, H, W, Cin, Cout, outermost):
    # xp_ref     : (1, H+2, W+2, Cin) bf16  zero-padded NHWC input (ReLU applied here)
    # wp_ref     : (4, 4*Cin, Cout)   bf16  phase-decomposed, K-fused ConvTranspose2d weights
    # params_ref : (3, Cout)          f32   rows = [conv bias, IN gamma, IN beta]
    # out_ref    : (1, H*W, 4*Cout)   f32   lane layout = (py, px, c), phase = 2*py + px
    x = jnp.maximum(xp_ref[0], 0)                                  # ReLU(True) semantics, bf16

    # 9 distinct shifted windows of the padded input, built once and reused by all
    # 4 phases (each phase consumes 4 of them).
    win = [[x[dy:dy + H, dx:dx + W, :].reshape(H * W, Cin) for dx in range(3)]
           for dy in range(3)]

    ys = []
    for py in range(2):
        for px in range(2):
            ph = 2 * py + px
            # fused-K im2col for this phase: one MXU matmul, f32 accumulation
            lhs = jnp.concatenate(
                [win[py + a][px + b] for a in range(2) for b in range(2)], axis=-1)
            ys.append(jnp.dot(lhs, wp_ref[ph],
                              preferred_element_type=jnp.float32))   # (H*W, Cout) f32

    params = params_ref[...].astype(jnp.float32)                     # (3, Cout)
    if outermost:
        # outermost=True variant: ReLU -> upconv -> Tanh (no norm)
        bias = params[0:1, :]                                        # (1, Cout)
        outs = [jnp.tanh(y + bias) for y in ys]
    else:
        # InstanceNorm2d(affine=True): per-sample, per-channel, biased variance over
        # all 2H*2W output pixels (= 4 phases x H x W).  The conv bias is a per-channel
        # constant, so it cancels out of (y - mean); stats are taken bias-free and the
        # affine is pre-folded into a single per-channel scale/shift FMA.
        s1 = sum(jnp.sum(y, axis=0, keepdims=True) for y in ys)      # (1, Cout)
        s2 = sum(jnp.sum(y * y, axis=0, keepdims=True) for y in ys)  # (1, Cout)
        inv_n = 1.0 / (4 * H * W)
        mean = s1 * inv_n
        var = jnp.maximum(s2 * inv_n - mean * mean, 0.0)
        gamma = params[1:2, :]
        beta = params[2:3, :]
        scale = gamma * jax.lax.rsqrt(var + EPS)
        shift = beta - mean * scale
        outs = [y * scale + shift for y in ys]

    out_ref[0] = jnp.concatenate(outs, axis=-1).astype(out_ref.dtype)


def unet_skip_connection_dblock(x_nchw, w_convT, bias, gamma, beta, *, outermost=False):
    """Forward pass of UnetSkipConnectionDBlock."""
    N, Cin, H, W = x_nchw.shape
    Cout = w_convT.shape[1]

    # NHWC + zero pad 1 (ReLU(0)=0, so pad-then-ReLU == ReLU-then-pad) + bf16 cast for
    # the MXU (accumulation stays f32 in the kernel).
    x_nhwc = jnp.transpose(x_nchw, (0, 2, 3, 1)).astype(jnp.bfloat16)
    xp = jnp.pad(x_nhwc, ((0, 0), (1, 1), (1, 1), (0, 0)))

    # Phase-decomposed, K-fused ConvTranspose2d weights:
    #   out[n, 2q+py, 2r+px, co] = bias[co]
    #     + sum_{a,b,ci} xp[n, q+py+a, r+px+b, ci] * W[ci, co, 3-2a-py, 3-2b-px]
    # For each phase ph = 2*py+px the 4 taps are stacked along the contraction axis so
    # the kernel does ONE (H*W, 4*Cin) x (4*Cin, Cout) matmul per phase.
    wp = jnp.stack([
        jnp.concatenate([w_convT[:, :, 3 - 2 * a - py, 3 - 2 * b - px]
                         for a in range(2) for b in range(2)], axis=0)
        for py in range(2) for px in range(2)], axis=0).astype(jnp.bfloat16)  # (4, 4*Cin, Cout)

    # bias / gamma / beta packed into one small f32 operand.
    params = jnp.stack([bias, gamma, beta], axis=0).astype(jnp.float32)       # (3, Cout)

    kernel = functools.partial(_dblock_kernel, H=H, W=W, Cin=Cin, Cout=Cout,
                               outermost=outermost)

    # Generation-aware scoped-VMEM budget: double-buffered input / weight / param /
    # output blocks plus the in-kernel window / im2col / accumulator intermediates,
    # clamped to 64 MiB (safe on v7x as well).
    in_bytes = (H + 2) * (W + 2) * Cin * 2
    w_bytes = 4 * 4 * Cin * Cout * 2
    p_bytes = 3 * Cout * 4
    out_bytes = H * W * 4 * Cout * 4
    work_bytes = (9 * H * W * Cin * 2        # shifted windows
                  + H * W * 4 * Cin * 2      # per-phase fused-K lhs (reused)
                  + 2 * H * W * 4 * Cout * 4)  # f32 phase results + concat staging
    vmem_limit = int(min(max(2 * (in_bytes + w_bytes + p_bytes + out_bytes)
                             + 2 * work_bytes, 32 << 20), 64 << 20))

    out_ph = pl.pallas_call(
        kernel,
        out_shape=jax.ShapeDtypeStruct((N, H * W, 4 * Cout), jnp.float32),
        grid=(N,),
        in_specs=[
            pl.BlockSpec((1, H + 2, W + 2, Cin), lambda n: (n, 0, 0, 0)),
            pl.BlockSpec((4, 4 * Cin, Cout), lambda n: (0, 0, 0)),
            pl.BlockSpec((3, Cout), lambda n: (0, 0)),
        ],
        out_specs=pl.BlockSpec((1, H * W, 4 * Cout), lambda n: (n, 0, 0)),
        compiler_params=pltpu.CompilerParams(
            dimension_semantics=("parallel",),
            vmem_limit_bytes=vmem_limit),
    )(xp, wp, params)

    # Lane layout is (py, px, c): one transpose interleaves the 4 phases AND converts
    # to NCHW in a single XLA copy.
    out = out_ph.reshape(N, H, W, 2, 2, Cout)
    out = jnp.transpose(out, (0, 5, 1, 3, 2, 4)).reshape(N, Cout, 2 * H, 2 * W)
    return out


def _reference(x_nchw, w_convT, bias, gamma, beta, *, outermost=False):
    """Pure-JAX f32 reference reproducing the PyTorch module semantics."""
    xr = jnp.maximum(x_nchw, 0.0)
    w_flip = jnp.transpose(w_convT, (1, 0, 2, 3))[:, :, ::-1, ::-1]   # (Cout, Cin, 4, 4)
    y = jax.lax.conv_general_dilated(
        xr, w_flip, window_strides=(1, 1), padding=((2, 2), (2, 2)),
        lhs_dilation=(2, 2), dimension_numbers=("NCHW", "OIHW", "NCHW"),
        precision=jax.lax.Precision.HIGHEST)
    y = y + bias[None, :, None, None]
    if outermost:
        return jnp.tanh(y)
    mean = jnp.mean(y, axis=(2, 3), keepdims=True)
    var = jnp.mean((y - mean) ** 2, axis=(2, 3), keepdims=True)
    return ((y - mean) / jnp.sqrt(var + EPS)
            * gamma[None, :, None, None] + beta[None, :, None, None])


if __name__ == "__main__":
    key = jax.random.PRNGKey(0)
    k1, k2, k3, k4, k5 = jax.random.split(key, 5)

    N, inner_nc, outer_nc, H, W = 2, 8, 4, 16, 16

    x = jax.random.normal(k1, (N, inner_nc, H, W), jnp.float32)
    # ConvTranspose2d(inner_nc, outer_nc, kernel_size=4): weight shape (Cin, Cout, 4, 4)
    bound = 1.0 / jnp.sqrt(jnp.float32(inner_nc * 4 * 4))
    w = jax.random.uniform(k2, (inner_nc, outer_nc, 4, 4), jnp.float32, -bound, bound)
    b = jax.random.uniform(k3, (outer_nc,), jnp.float32, -bound, bound)
    # InstanceNorm2d(affine=True) params (torch inits to 1/0; perturb for a non-trivial test)
    gamma = 1.0 + 0.1 * jax.random.normal(k4, (outer_nc,), jnp.float32)
    beta = 0.1 * jax.random.normal(k5, (outer_nc,), jnp.float32)

    # default / innermost path: ReLU -> upconv -> InstanceNorm
    out = unet_skip_connection_dblock(x, w, b, gamma, beta, outermost=False)
    out = jax.block_until_ready(out)
    ref = _reference(x, w, b, gamma, beta, outermost=False)
    assert out.shape == (N, outer_nc, 2 * H, 2 * W), out.shape
    # bf16 MXU operands (f32 accumulation) vs an f32 HIGHEST-precision reference.
    if not jnp.allclose(out, ref, rtol=2e-2, atol=2e-2):
        max_err = float(jnp.max(jnp.abs(out - ref)))
        raise AssertionError(f"norm path mismatch vs reference (max abs err {max_err})")

    # outermost path: ReLU -> upconv -> Tanh
    out_t = unet_skip_connection_dblock(x, w, b, gamma, beta, outermost=True)
    out_t = jax.block_until_ready(out_t)
    ref_t = _reference(x, w, b, gamma, beta, outermost=True)
    if not jnp.allclose(out_t, ref_t, rtol=2e-2, atol=2e-2):
        max_err = float(jnp.max(jnp.abs(out_t - ref_t)))
        raise AssertionError(f"tanh path mismatch vs reference (max abs err {max_err})")

    print("KERNEL_OK")
</pallas_src>

<mosaic_0001>
module attributes {stable_mosaic.version = 11 : i64} {
  func.func @_dblock_kernel(%arg0: i32, %arg1: memref<1x18x18x8xbf16, #tpu.memory_space<vmem>>, %arg2: memref<4x32x4xbf16, #tpu.memory_space<vmem>>, %arg3: memref<3x4xf32, #tpu.memory_space<vmem>>, %arg4: memref<1x256x16xf32, #tpu.memory_space<vmem>>) attributes {dimension_semantics = [#tpu.dimension_semantics<parallel>], iteration_bounds = array<i64: 2>, scalar_prefetch = 0 : i64, scratch_operands = 0 : i64, tpu.core_type = #tpu.core_type<tc>, window_params = [{transform_indices = @transform_0, window_bounds = array<i64: 1, 18, 18, 8>}, {pipeline_mode = #tpu.pipeline_mode<synchronous>, transform_indices = @transform_1, window_bounds = array<i64: 4, 32, 4>}, {pipeline_mode = #tpu.pipeline_mode<synchronous>, transform_indices = @transform_2, window_bounds = array<i64: 3, 4>}, {transform_indices = @transform_3, window_bounds = array<i64: 1, 256, 16>}]} {
    %c0 = arith.constant 0 : index
    %c0_0 = arith.constant 0 : index
    %c0_1 = arith.constant 0 : index
    %c0_2 = arith.constant 0 : index
    %0 = vector.load %arg1[%c0, %c0_0, %c0_1, %c0_2] : memref<1x18x18x8xbf16, #tpu.memory_space<vmem>>, vector<1x18x18x8xbf16>
    %1 = vector.shape_cast %0 : vector<1x18x18x8xbf16> to vector<18x18x8xbf16>
    %cst = arith.constant 0.000000e+00 : bf16
    %2 = vector.broadcast %cst : bf16 to vector<18x18x8xbf16>
    %3 = arith.maximumf %1, %2 : vector<18x18x8xbf16>
    %4 = vector.extract_strided_slice %3 {offsets = [0, 0, 0], sizes = [16, 16, 8], strides = [1, 1, 1]} : vector<18x18x8xbf16> to vector<16x16x8xbf16>
    %5 = vector.shape_cast %4 : vector<16x16x8xbf16> to vector<256x8xbf16>
    %6 = vector.extract_strided_slice %3 {offsets = [0, 1, 0], sizes = [16, 16, 8], strides = [1, 1, 1]} : vector<18x18x8xbf16> to vector<16x16x8xbf16>
    %7 = vector.shape_cast %6 : vector<16x16x8xbf16> to vector<256x8xbf16>
    %8 = vector.extract_strided_slice %3 {offsets = [0, 2, 0], sizes = [16, 16, 8], strides = [1, 1, 1]} : vector<18x18x8xbf16> to vector<16x16x8xbf16>
    %9 = vector.shape_cast %8 : vector<16x16x8xbf16> to vector<256x8xbf16>
    %10 = vector.extract_strided_slice %3 {offsets = [1, 0, 0], sizes = [16, 16, 8], strides = [1, 1, 1]} : vector<18x18x8xbf16> to vector<16x16x8xbf16>
    %11 = vector.shape_cast %10 : vector<16x16x8xbf16> to vector<256x8xbf16>
    %12 = vector.extract_strided_slice %3 {offsets = [1, 1, 0], sizes = [16, 16, 8], strides = [1, 1, 1]} : vector<18x18x8xbf16> to vector<16x16x8xbf16>
    %13 = vector.shape_cast %12 : vector<16x16x8xbf16> to vector<256x8xbf16>
    %14 = vector.extract_strided_slice %3 {offsets = [1, 2, 0], sizes = [16, 16, 8], strides = [1, 1, 1]} : vector<18x18x8xbf16> to vector<16x16x8xbf16>
    %15 = vector.shape_cast %14 : vector<16x16x8xbf16> to vector<256x8xbf16>
    %16 = vector.extract_strided_slice %3 {offsets = [2, 0, 0], sizes = [16, 16, 8], strides = [1, 1, 1]} : vector<18x18x8xbf16> to vector<16x16x8xbf16>
    %17 = vector.shape_cast %16 : vector<16x16x8xbf16> to vector<256x8xbf16>
    %18 = vector.extract_strided_slice %3 {offsets = [2, 1, 0], sizes = [16, 16, 8], strides = [1, 1, 1]} : vector<18x18x8xbf16> to vector<16x16x8xbf16>
    %19 = vector.shape_cast %18 : vector<16x16x8xbf16> to vector<256x8xbf16>
    %20 = vector.extract_strided_slice %3 {offsets = [2, 2, 0], sizes = [16, 16, 8], strides = [1, 1, 1]} : vector<18x18x8xbf16> to vector<16x16x8xbf16>
    %21 = vector.shape_cast %20 : vector<16x16x8xbf16> to vector<256x8xbf16>
    %22 = tpu.concatenate %5, %7, %11, %13 in 1 : vector<256x8xbf16>, vector<256x8xbf16>, vector<256x8xbf16>, vector<256x8xbf16> -> vector<256x32xbf16>
    %c0_3 = arith.constant 0 : index
    %c0_4 = arith.constant 0 : index
    %c0_5 = arith.constant 0 : index
    %23 = vector.load %arg2[%c0_3, %c0_4, %c0_5] : memref<4x32x4xbf16, #tpu.memory_space<vmem>>, vector<1x32x4xbf16>
    %24 = vector.shape_cast %23 : vector<1x32x4xbf16> to vector<32x4xbf16>
    %cst_6 = arith.constant dense<0.000000e+00> : vector<256x4xf32>
    %25 = tpu.matmul %22, %24, %cst_6 {dimension_numbers = #tpu.dot_dimension_numbers<[1], [0], [0], [1], [0, 0, 1, 1], [], []>} : vector<256x32xbf16>, vector<32x4xbf16>, vector<256x4xf32> -> vector<256x4xf32>
    %26 = tpu.concatenate %7, %9, %13, %15 in 1 : vector<256x8xbf16>, vector<256x8xbf16>, vector<256x8xbf16>, vector<256x8xbf16> -> vector<256x32xbf16>
    %c1 = arith.constant 1 : index
    %c0_7 = arith.constant 0 : index
    %c0_8 = arith.constant 0 : index
    %27 = vector.load %arg2[%c1, %c0_7, %c0_8] : memref<4x32x4xbf16, #tpu.memory_space<vmem>>, vector<1x32x4xbf16>
    %28 = vector.shape_cast %27 : vector<1x32x4xbf16> to vector<32x4xbf16>
    %cst_9 = arith.constant dense<0.000000e+00> : vector<256x4xf32>
    %29 = tpu.matmul %26, %28, %cst_9 {dimension_numbers = #tpu.dot_dimension_numbers<[1], [0], [0], [1], [0, 0, 1, 1], [], []>} : vector<256x32xbf16>, vector<32x4xbf16>, vector<256x4xf32> -> vector<256x4xf32>
    %30 = tpu.concatenate %11, %13, %17, %19 in 1 : vector<256x8xbf16>, vector<256x8xbf16>, vector<256x8xbf16>, vector<256x8xbf16> -> vector<256x32xbf16>
    %c2 = arith.constant 2 : index
    %c0_10 = arith.constant 0 : index
    %c0_11 = arith.constant 0 : index
    %31 = vector.load %arg2[%c2, %c0_10, %c0_11] : memref<4x32x4xbf16, #tpu.memory_space<vmem>>, vector<1x32x4xbf16>
    %32 = vector.shape_cast %31 : vector<1x32x4xbf16> to vector<32x4xbf16>
    %cst_12 = arith.constant dense<0.000000e+00> : vector<256x4xf32>
    %33 = tpu.matmul %30, %32, %cst_12 {dimension_numbers = #tpu.dot_dimension_numbers<[1], [0], [0], [1], [0, 0, 1, 1], [], []>} : vector<256x32xbf16>, vector<32x4xbf16>, vector<256x4xf32> -> vector<256x4xf32>
    %34 = tpu.concatenate %13, %15, %19, %21 in 1 : vector<256x8xbf16>, vector<256x8xbf16>, vector<256x8xbf16>, vector<256x8xbf16> -> vector<256x32xbf16>
    %c3 = arith.constant 3 : index
    %c0_13 = arith.constant 0 : index
    %c0_14 = arith.constant 0 : index
    %35 = vector.load %arg2[%c3, %c0_13, %c0_14] : memref<4x32x4xbf16, #tpu.memory_space<vmem>>, vector<1x32x4xbf16>
    %36 = vector.shape_cast %35 : vector<1x32x4xbf16> to vector<32x4xbf16>
    %cst_15 = arith.constant dense<0.000000e+00> : vector<256x4xf32>
    %37 = tpu.matmul %34, %36, %cst_15 {dimension_numbers = #tpu.dot_dimension_numbers<[1], [0], [0], [1], [0, 0, 1, 1], [], []>} : vector<256x32xbf16>, vector<32x4xbf16>, vector<256x4xf32> -> vector<256x4xf32>
    %c0_16 = arith.constant 0 : index
    %c0_17 = arith.constant 0 : index
    %38 = vector.load %arg3[%c0_16, %c0_17] : memref<3x4xf32, #tpu.memory_space<vmem>>, vector<3x4xf32>
    %cst_18 = arith.constant dense<0.000000e+00> : vector<4xf32>
    %39 = vector.multi_reduction <add>, %25, %cst_18 [0] : vector<256x4xf32> to vector<4xf32>
    %40 = vector.shape_cast %39 : vector<4xf32> to vector<1x4xf32>
    %cst_19 = arith.constant 0.000000e+00 : f32
    %41 = vector.broadcast %cst_19 : f32 to vector<1x4xf32>
    %42 = arith.addf %41, %40 : vector<1x4xf32>
    %cst_20 = arith.constant dense<0.000000e+00> : vector<4xf32>
    %43 = vector.multi_reduction <add>, %29, %cst_20 [0] : vector<256x4xf32> to vector<4xf32>
    %44 = vector.shape_cast %43 : vector<4xf32> to vector<1x4xf32>
    %45 = arith.addf %42, %44 : vector<1x4xf32>
    %cst_21 = arith.constant dense<0.000000e+00> : vector<4xf32>
    %46 = vector.multi_reduction <add>, %33, %cst_21 [0] : vector<256x4xf32> to vector<4xf32>
    %47 = vector.shape_cast %46 : vector<4xf32> to vector<1x4xf32>
    %48 = arith.addf %45, %47 : vector<1x4xf32>
    %cst_22 = arith.constant dense<0.000000e+00> : vector<4xf32>
    %49 = vector.multi_reduction <add>, %37, %cst_22 [0] : vector<256x4xf32> to vector<4xf32>
    %50 = vector.shape_cast %49 : vector<4xf32> to vector<1x4xf32>
    %51 = arith.addf %48, %50 : vector<1x4xf32>
    %52 = arith.mulf %25, %25 : vector<256x4xf32>
    %cst_23 = arith.constant dense<0.000000e+00> : vector<4xf32>
    %53 = vector.multi_reduction <add>, %52, %cst_23 [0] : vector<256x4xf32> to vector<4xf32>
    %54 = vector.shape_cast %53 : vector<4xf32> to vector<1x4xf32>
    %cst_24 = arith.constant 0.000000e+00 : f32
    %55 = vector.broadcast %cst_24 : f32 to vector<1x4xf32>
    %56 = arith.addf %55, %54 : vector<1x4xf32>
    %57 = arith.mulf %29, %29 : vector<256x4xf32>
    %cst_25 = arith.constant dense<0.000000e+00> : vector<4xf32>
    %58 = vector.multi_reduction <add>, %57, %cst_25 [0] : vector<256x4xf32> to vector<4xf32>
    %59 = vector.shape_cast %58 : vector<4xf32> to vector<1x4xf32>
    %60 = arith.addf %56, %59 : vector<1x4xf32>
    %61 = arith.mulf %33, %33 : vector<256x4xf32>
    %cst_26 = arith.constant dense<0.000000e+00> : vector<4xf32>
    %62 = vector.multi_reduction <add>, %61, %cst_26 [0] : vector<256x4xf32> to vector<4xf32>
    %63 = vector.shape_cast %62 : vector<4xf32> to vector<1x4xf32>
    %64 = arith.addf %60, %63 : vector<1x4xf32>
    %65 = arith.mulf %37, %37 : vector<256x4xf32>
    %cst_27 = arith.constant dense<0.000000e+00> : vector<4xf32>
    %66 = vector.multi_reduction <add>, %65, %cst_27 [0] : vector<256x4xf32> to vector<4xf32>
    %67 = vector.shape_cast %66 : vector<4xf32> to vector<1x4xf32>
    %68 = arith.addf %64, %67 : vector<1x4xf32>
    %cst_28 = arith.constant 9.765625E-4 : f32
    %69 = vector.broadcast %cst_28 : f32 to vector<1x4xf32>
    %70 = arith.mulf %51, %69 : vector<1x4xf32>
    %cst_29 = arith.constant 9.765625E-4 : f32
    %71 = vector.broadcast %cst_29 : f32 to vector<1x4xf32>
    %72 = arith.mulf %68, %71 : vector<1x4xf32>
    %73 = arith.mulf %70, %70 : vector<1x4xf32>
    %74 = arith.subf %72, %73 : vector<1x4xf32>
    %cst_30 = arith.constant 0.000000e+00 : f32
    %75 = vector.broadcast %cst_30 : f32 to vector<1x4xf32>
    %76 = arith.maximumf %74, %75 : vector<1x4xf32>
    %77 = vector.extract_strided_slice %38 {offsets = [1, 0], sizes = [1, 4], strides = [1, 1]} : vector<3x4xf32> to vector<1x4xf32>
    %78 = vector.extract_strided_slice %38 {offsets = [2, 0], sizes = [1, 4], strides = [1, 1]} : vector<3x4xf32> to vector<1x4xf32>
    %cst_31 = arith.constant 9.99999974E-6 : f32
    %79 = vector.broadcast %cst_31 : f32 to vector<1x4xf32>
    %80 = arith.addf %76, %79 : vector<1x4xf32>
    %81 = math.rsqrt %80 : vector<1x4xf32>
    %82 = arith.mulf %77, %81 : vector<1x4xf32>
    %83 = arith.mulf %70, %82 : vector<1x4xf32>
    %84 = arith.subf %78, %83 : vector<1x4xf32>
    %85 = vector.broadcast %82 : vector<1x4xf32> to vector<256x4xf32>
    %86 = arith.mulf %25, %85 : vector<256x4xf32>
    %87 = vector.broadcast %84 : vector<1x4xf32> to vector<256x4xf32>
    %88 = arith.addf %86, %87 : vector<256x4xf32>
    %89 = vector.broadcast %82 : vector<1x4xf32> to vector<256x4xf32>
    %90 = arith.mulf %29, %89 : vector<256x4xf32>
    %91 = vector.broadcast %84 : vector<1x4xf32> to vector<256x4xf32>
    %92 = arith.addf %90, %91 : vector<256x4xf32>
    %93 = vector.broadcast %82 : vector<1x4xf32> to vector<256x4xf32>
    %94 = arith.mulf %33, %93 : vector<256x4xf32>
    %95 = vector.broadcast %84 : vector<1x4xf32> to vector<256x4xf32>
    %96 = arith.addf %94, %95 : vector<256x4xf32>
    %97 = vector.broadcast %82 : vector<1x4xf32> to vector<256x4xf32>
    %98 = arith.mulf %37, %97 : vector<256x4xf32>
    %99 = vector.broadcast %84 : vector<1x4xf32> to vector<256x4xf32>
    %100 = arith.addf %98, %99 : vector<256x4xf32>
    %101 = tpu.concatenate %88, %92, %96, %100 in 1 : vector<256x4xf32>, vector<256x4xf32>, vector<256x4xf32>, vector<256x4xf32> -> vector<256x16xf32>
    %c0_32 = arith.constant 0 : index
    %c0_33 = arith.constant 0 : index
    %c0_34 = arith.constant 0 : index
    %102 = vector.load %arg4[%c0_32, %c0_33, %c0_34] : memref<1x256x16xf32, #tpu.memory_space<vmem>>, vector<1x256x16xf32>
    %103 = vector.shape_cast %102 : vector<1x256x16xf32> to vector<256x16xf32>
    %104 = vector.shape_cast %101 : vector<256x16xf32> to vector<1x256x16xf32>
    tpu.vector_store %arg4[%c0_32, %c0_33, %c0_34], %104 {strides = array<i32>} : memref<1x256x16xf32, #tpu.memory_space<vmem>>, vector<1x256x16xf32>,
    return
  }
  func.func @transform_0(%arg0: i32) -> (i32, i32, i32, i32) {
    %c0_i32 = arith.constant 0 : i32
    %c0_i32_0 = arith.constant 0 : i32
    %c0_i32_1 = arith.constant 0 : i32
    %c0_i32_2 = arith.constant 0 : i32
    return %arg0, %c0_i32, %c0_i32_0, %c0_i32_1 : i32, i32, i32, i32
  }
  func.func @transform_1(%arg0: i32) -> (i32, i32, i32) {
    %c0_i32 = arith.constant 0 : i32
    %c0_i32_0 = arith.constant 0 : i32
    %c0_i32_1 = arith.constant 0 : i32
    %c0_i32_2 = arith.constant 0 : i32
    return %c0_i32, %c0_i32_0, %c0_i32_1 : i32, i32, i32
  }
  func.func @transform_2(%arg0: i32) -> (i32, i32) {
    %c0_i32 = arith.constant 0 : i32
    %c0_i32_0 = arith.constant 0 : i32
    %c0_i32_1 = arith.constant 0 : i32
    return %c0_i32, %c0_i32_0 : i32, i32
  }
  func.func @transform_3(%arg0: i32) -> (i32, i32, i32) {
    %c0_i32 = arith.constant 0 : i32
    %c0_i32_0 = arith.constant 0 : i32
    %c0_i32_1 = arith.constant 0 : i32
    return %arg0, %c0_i32, %c0_i32_0 : i32, i32, i32
  }
}

</mosaic_0001>

<llo_original>
// kernel: tpu_custom_call.1
$region0: #{tpu_custom_call.1}
  #allocation0 [shape = 'u32[]', space=smem, size = 0x4, offset = 0x4, fixed_abs, tag = 'smem constant byte address 0x4 - core index']
  #allocation1 [shape = 'u32[144,128]{1,0:T(1,128)}', space=vmem, size = 0x12000, scoped, tag = 'internal scratch']
  %s0 = inlined_call_operand.vmem [shape: bf16[2,18,18,8], index: 0, kind: input, shape index: {}]
  %s1 = inlined_call_operand.vmem [shape: bf16[4,32,4], index: 1, kind: input, shape index: {}]
  %s2 = inlined_call_operand.vmem [shape: f32[3,4], index: 2, kind: input, shape index: {}]
  %s3 = inlined_call_operand.vmem [shape: f32[2,256,16], index: 3, kind: output, shape index: {}]
  %s4 = sld [smem:[#allocation0]]
  $region45: #{tpu_custom_call.1} parent=0
    _
  %s6 = ssub.s32 1, %s4
  %s7 = scalar_select 0, %s6, %s4
  loop: start=0, step=1, limit=4
  $region2: #{tpu_custom_call.1} parent=0 // loop_pre_header
    _
  $region3: #{tpu_custom_call.1} parent=0 // loop_header
    %s9 = sphi 0, %s13
    %p10 = scmp.ge.s32.totalorder %s9, 4
    %s19 = sphi 0, %s21
    %s22 = sphi 0, %s19
    %s23 = sphi 0, %s22
    %s39 = sphi 0, %s23
    %s43 = sphi 0, %s43
    %s45 = sphi 0, %s43
    %s46 = sphi 0, %s45
    %s60 = sphi 0, %s46
    %s64 = sphi 0, %s64
    %s66 = sphi 0, %s64
    %s67 = sphi 0, %s66
    %s81 = sphi 0, %s67
    %s87 = sphi 0, %s89
    %s90 = sphi 0, %s87
    %s91 = sphi 0, %s90
    %s107 = sphi 0, %s91
  $region4: #{tpu_custom_call.1} parent=0 // loop_header_branch
    %12 = sbr.rel (%p10) target = $region8
  $region5: #{tpu_custom_call.1} parent=0 // loop_body
    %s14 = ssub.s32 %s9, 1
    %s15 = ssub.s32 %s9, 2
    %s16 = sadd.s32 %s9, 1
    %s17 = ssub.s32 %s9, %s16
    %p18 = scmp.eq.s32.totalorder %s17, 0
    %s20 = sadd.s32 %s19, 1
    %s21 = scalar_select %p18, %s19, %s20
    %p24 = pneg %p18
    %p25 = scmp.eq.s32.totalorder %s9, 1
    %p26 = por %p24, %p25
    %p27 = scmp.ne.s32.totalorder %s19, %s22
    %p28 = scmp.eq.s32.totalorder %s9, 0
    %p29 = por %p27, %p28
    %p30 = scmp.ne.s32.totalorder %s19, %s22
    %p31 = scmp.eq.s32.totalorder %s14, 1
    %p32 = por %p30, %p31
    %p33 = scmp.ne.s32.totalorder %s22, %s23
    %p34 = scmp.eq.s32.totalorder %s14, 0
    %p35 = por %p33, %p34
    %p36 = scmp.ne.s32.totalorder %s22, %s23
    %p37 = scmp.eq.s32.totalorder %s15, 1
    %p38 = por %p36, %p37
    %p40 = scmp.ne.s32.totalorder %s23, %s39
    %p41 = scmp.eq.s32.totalorder %s15, 0
    %p42 = por %p40, %p41
    %s44 = sadd.s32 %s43, 1
    %p47 = scmp.eq.s32.totalorder %s9, 1
    %p48 = scmp.ne.s32.totalorder %s43, %s45
    %p49 = scmp.eq.s32.totalorder %s9, 0
    %p50 = por %p48, %p49
    %p51 = scmp.ne.s32.totalorder %s43, %s45
    %p52 = scmp.eq.s32.totalorder %s14, 1
    %p53 = por %p51, %p52
    %p54 = scmp.ne.s32.totalorder %s45, %s46
    %p55 = scmp.eq.s32.totalorder %s14, 0
    %p56 = por %p54, %p55
    %p57 = scmp.ne.s32.totalorder %s45, %s46
    %p58 = scmp.eq.s32.totalorder %s15, 1
    %p59 = por %p57, %p58
    %p61 = scmp.ne.s32.totalorder %s46, %s60
    %p62 = scmp.eq.s32.totalorder %s15, 0
    %p63 = por %p61, %p62
    %s65 = sadd.s32 %s64, 1
    %p68 = scmp.eq.s32.totalorder %s9, 1
    %p69 = scmp.ne.s32.totalorder %s64, %s66
    %p70 = scmp.eq.s32.totalorder %s9, 0
    %p71 = por %p69, %p70
    %p72 = scmp.ne.s32.totalorder %s64, %s66
    %p73 = scmp.eq.s32.totalorder %s14, 1
    %p74 = por %p72, %p73
    %p75 = scmp.ne.s32.totalorder %s66, %s67
    %p76 = scmp.eq.s32.totalorder %s14, 0
    %p77 = por %p75, %p76
    %p78 = scmp.ne.s32.totalorder %s66, %s67
    %p79 = scmp.eq.s32.totalorder %s15, 1
    %p80 = por %p78, %p79
    %p82 = scmp.ne.s32.totalorder %s67, %s81
    %p83 = scmp.eq.s32.totalorder %s15, 0
    %p84 = por %p82, %p83
    %s85 = ssub.s32 %s9, %s16
    %p86 = scmp.eq.s32.totalorder %s85, 0
    %s88 = sadd.s32 %s87, 1
    %s89 = scalar_select %p86, %s87, %s88
    %p92 = pneg %p86
    %p93 = scmp.eq.s32.totalorder %s9, 1
    %p94 = por %p92, %p93
    %p95 = scmp.ne.s32.totalorder %s87, %s90
    %p96 = scmp.eq.s32.totalorder %s9, 0
    %p97 = por %p95, %p96
    %p98 = scmp.ne.s32.totalorder %s87, %s90
    %p99 = scmp.eq.s32.totalorder %s14, 1
    %p100 = por %p98, %p99
    %p101 = scmp.ne.s32.totalorder %s90, %s91
    %p102 = scmp.eq.s32.totalorder %s14, 0
    %p103 = por %p101, %p102
    %p104 = scmp.ne.s32.totalorder %s90, %s91
    %p105 = scmp.eq.s32.totalorder %s15, 1
    %p106 = por %p104, %p105
    %p108 = scmp.ne.s32.totalorder %s91, %s107
    %p109 = scmp.eq.s32.totalorder %s15, 0
    %p110 = por %p108, %p109
    %p111 = scmp.le.s32.totalorder 1, %s9
    %p112 = scmp.lt.s32.totalorder %s9, 3
    %p113 = pnand %p111, %p112
    %p114 = pneg %p113
    // Predicated region
    $region9: #{tpu_custom_call.1} parent=5 // pred_check
      _
    $region10: #{tpu_custom_call.1} parent=5 // pred_check_branch
      %116 = sbr.rel (%p113) target = $region12
    $region11: #{tpu_custom_call.1} parent=5 // pred_region
      %s117 = ssub.s32 %s9, 1
      // Predicated region
      $region13: #{tpu_custom_call.1} parent=11 // pred_check
        %p118 = pneg %p56
      $region14: #{tpu_custom_call.1} parent=11 // pred_check_branch
        %120 = sbr.rel (%p118) target = $region16
      $region15: #{tpu_custom_call.1} parent=11 // pred_region
        _
      $region16: #{tpu_custom_call.1} parent=11 // pred_fallthru
        _
      // Predicated region
      $region17: #{tpu_custom_call.1} parent=11 // pred_check
        %p121 = pneg %p77
      $region18: #{tpu_custom_call.1} parent=11 // pred_check_branch
        %123 = sbr.rel (%p121) target = $region20
      $region19: #{tpu_custom_call.1} parent=11 // pred_region
        _
      $region20: #{tpu_custom_call.1} parent=11 // pred_fallthru
        _
    $region12: #{tpu_custom_call.1} parent=5 // pred_fallthru
      _
    %p124 = scmp.lt.s32.totalorder %s9, 2
    // Predicated region
    $region21: #{tpu_custom_call.1} parent=5 // pred_check
      %p125 = pneg %p124
    $region22: #{tpu_custom_call.1} parent=5 // pred_check_branch
      %127 = sbr.rel (%p125) target = $region24
    $region23: #{tpu_custom_call.1} parent=5 // pred_region
      // Predicated region
      $region25: #{tpu_custom_call.1} parent=23 // pred_check
        %p128 = pneg %p29
      $region26: #{tpu_custom_call.1} parent=23 // pred_check_branch
        %130 = sbr.rel (%p128) target = $region28
      $region27: #{tpu_custom_call.1} parent=23 // pred_region
        %p131 = scmp.lt.s32.totalorder %s9, 1
        %s132 = scalar_select %p131, %s9, 1
        %s133 = smul.addr %s132, 54
        %s134 = smul.addr %s133, 4
        %s135 = scalar_lea.vmem %s0, %s134
      $region28: #{tpu_custom_call.1} parent=23 // pred_fallthru
        _
    $region24: #{tpu_custom_call.1} parent=5 // pred_fallthru
      _
    %p136 = scmp.le.s32.totalorder 1, %s9
    %p137 = scmp.lt.s32.totalorder %s9, 3
    %p138 = pnand %p136, %p137
    %p139 = pneg %p138
    // Predicated region
    $region29: #{tpu_custom_call.1} parent=5 // pred_check
      _
    $region30: #{tpu_custom_call.1} parent=5 // pred_check_branch
      %141 = sbr.rel (%p138) target = $region32
    $region31: #{tpu_custom_call.1} parent=5 // pred_region
      %s142 = ssub.s32 %s9, 1
      %p143 = scmp.lt.s32.totalorder %s14, 1
      %s144 = scalar_select %p143, %s14, 1
      %s145 = smul.addr %s144, 54
      %s146 = smul.addr %s145, 4
      %s147 = scalar_lea.vmem %s0, %s146
      %p148 = pneg %p35
      %p149 = pneg %p32
      %p150 = pneg %p56
      %p151 = pneg %p53
      %p152 = pneg %p77
      %p153 = pneg %p74
      %p154 = pneg %p103
      %p155 = pneg %p100
      %p156 = scmp.lt.s32.totalorder %s14, 1
      %s157 = scalar_select %p156, %s14, 1
      %s158 = smul.addr %s157, 32
      %s159 = smul.addr %s158, 8
      %s160 = scalar_lea.vmem %s3, %s159
      %p161 = scmp.lt.s32.totalorder %s14, 1
      %s162 = scalar_select %p161, %s14, 1
      %s163 = smul.addr %s162, 54
      %s164 = smul.addr %s163, 4
      %s165 = scalar_lea.vmem %s0, %s164
      %p166 = scmp.lt.s32.totalorder %s14, 1
      %s167 = scalar_select %p166, %s14, 1
      %s168 = smul.addr %s167, 32
      %s169 = smul.addr %s168, 8
      %s170 = scalar_lea.vmem %s3, %s169
      %v172 = vld [vmem:[%s165] sm:$0xf]
      %v173 = vld [vmem:[%s165 + $0x4] sm:$0xf]
      %v174 = vld [vmem:[%s165 + $0x8] sm:$0x1]
      %v175 = vld [vmem:[%s165 + $0xc] sm:$0xf]
      %v176 = vld [vmem:[%s165 + $0x10] sm:$0xf]
      %v177 = vld [vmem:[%s165 + $0x14] sm:$0x1]
      %v178 = vld [vmem:[%s165 + $0x18] sm:$0xf]
      %v179 = vld [vmem:[%s165 + $0x1c] sm:$0xf]
      %v180 = vld [vmem:[%s165 + $0x20] sm:$0x1]
      %v181 = vld [vmem:[%s165 + $0x24] sm:$0xf]
      %v182 = vld [vmem:[%s165 + $0x28] sm:$0xf]
      %v183 = vld [vmem:[%s165 + $0x2c] sm:$0x1]
      %v184 = vld [vmem:[%s165 + $0x30] sm:$0xf]
      %v185 = vld [vmem:[%s165 + $0x34] sm:$0xf]
      %v186 = vld [vmem:[%s165 + $0x38] sm:$0x1]
      %v187 = vld [vmem:[%s165 + $0x3c] sm:$0xf]
      %v188 = vld [vmem:[%s165 + $0x40] sm:$0xf]
      %v189 = vld [vmem:[%s165 + $0x44] sm:$0x1]
      %v190 = vld [vmem:[%s165 + $0x48] sm:$0xf]
      %v191 = vld [vmem:[%s165 + $0x4c] sm:$0xf]
      %v192 = vld [vmem:[%s165 + $0x50] sm:$0x1]
      %v193 = vld [vmem:[%s165 + $0x54] sm:$0xf]
      %v194 = vld [vmem:[%s165 + $0x58] sm:$0xf]
      %v195 = vld [vmem:[%s165 + $0x5c] sm:$0x1]
      %v196 = vld [vmem:[%s165 + $0x60] sm:$0xf]
      %v197 = vld [vmem:[%s165 + $0x64] sm:$0xf]
      %v198 = vld [vmem:[%s165 + $0x68] sm:$0x1]
      %v199 = vld [vmem:[%s165 + $0x6c] sm:$0xf]
      %v200 = vld [vmem:[%s165 + $0x70] sm:$0xf]
      %v201 = vld [vmem:[%s165 + $0x74] sm:$0x1]
      %v202 = vld [vmem:[%s165 + $0x78] sm:$0xf]
      %v203 = vld [vmem:[%s165 + $0x7c] sm:$0xf]
      %v204 = vld [vmem:[%s165 + $0x80] sm:$0x1]
      %v205 = vld [vmem:[%s165 + $0x84] sm:$0xf]
      %v206 = vld [vmem:[%s165 + $0x88] sm:$0xf]
      %v207 = vld [vmem:[%s165 + $0x8c] sm:$0x1]
      %v208 = vld [vmem:[%s165 + $0x90] sm:$0xf]
      %v209 = vld [vmem:[%s165 + $0x94] sm:$0xf]
      %v210 = vld [vmem:[%s165 + $0x98] sm:$0x1]
      %v211 = vld [vmem:[%s165 + $0x9c] sm:$0xf]
      %v212 = vld [vmem:[%s165 + $0xa0] sm:$0xf]
      %v213 = vld [vmem:[%s165 + $0xa4] sm:$0x1]
      %v214 = vld [vmem:[%s165 + $0xa8] sm:$0xf]
      %v215 = vld [vmem:[%s165 + $0xac] sm:$0xf]
      %v216 = vld [vmem:[%s165 + $0xb0] sm:$0x1]
      %v217 = vld [vmem:[%s165 + $0xb4] sm:$0xf]
      %v218 = vld [vmem:[%s165 + $0xb8] sm:$0xf]
      %v219 = vld [vmem:[%s165 + $0xbc] sm:$0x1]
      %v220 = vld [vmem:[%s165 + $0xc0] sm:$0xf]
      %v221 = vld [vmem:[%s165 + $0xc4] sm:$0xf]
      %v222 = vld [vmem:[%s165 + $0xc8] sm:$0x1]
      %v223 = vld [vmem:[%s165 + $0xcc] sm:$0xf]
      %v224 = vld [vmem:[%s165 + $0xd0] sm:$0xf]
      %v225 = vld [vmem:[%s165 + $0xd4] sm:$0x1]
      %v226 = vmax.bf16 %v172, 0
      %v227 = vmax.bf16 %v173, 0
      %v228 = vmax.bf16 %v174, 0
      %v229 = vmax.bf16 %v175, 0
      %v230 = vmax.bf16 %v176, 0
      %v231 = vmax.bf16 %v177, 0
      %v232 = vmax.bf16 %v178, 0
      %v233 = vmax.bf16 %v179, 0
      %v234 = vmax.bf16 %v180, 0
      %v235 = vmax.bf16 %v181, 0
      %v236 = vmax.bf16 %v182, 0
      %v237 = vmax.bf16 %v183, 0
      %v238 = vmax.bf16 %v184, 0
      %v239 = vmax.bf16 %v185, 0
      %v240 = vmax.bf16 %v186, 0
      %v241 = vmax.bf16 %v187, 0
      %v242 = vmax.bf16 %v188, 0
      %v243 = vmax.bf16 %v189, 0
      %v244 = vmax.bf16 %v190, 0
      %v245 = vmax.bf16 %v191, 0
      %v246 = vmax.bf16 %v192, 0
      %v247 = vmax.bf16 %v193, 0
      %v248 = vmax.bf16 %v194, 0
      %v249 = vmax.bf16 %v195, 0
      %v250 = vmax.bf16 %v196, 0
      %v251 = vmax.bf16 %v197, 0
      %v252 = vmax.bf16 %v198, 0
      %v253 = vmax.bf16 %v199, 0
      %v254 = vmax.bf16 %v200, 0
      %v255 = vmax.bf16 %v201, 0
      %v256 = vmax.bf16 %v202, 0
      %v257 = vmax.bf16 %v203, 0
      %v258 = vmax.bf16 %v204, 0
      %v259 = vmax.bf16 %v205, 0
      %v260 = vmax.bf16 %v206, 0
      %v261 = vmax.bf16 %v207, 0
      %v262 = vmax.bf16 %v208, 0
      %v263 = vmax.bf16 %v209, 0
      %v264 = vmax.bf16 %v210, 0
      %v265 = vmax.bf16 %v211, 0
      %v266 = vmax.bf16 %v212, 0
      %v267 = vmax.bf16 %v213, 0
      %v268 = vmax.bf16 %v214, 0
      %v269 = vmax.bf16 %v215, 0
      %v270 = vmax.bf16 %v216, 0
      %v271 = vmax.bf16 %v217, 0
      %v272 = vmax.bf16 %v218, 0
      %v273 = vmax.bf16 %v219, 0
      %v274 = vmax.bf16 %v220, 0
      %v275 = vmax.bf16 %v221, 0
      %v276 = vmax.bf16 %v222, 0
      %v277 = vmax.bf16 %v223, 0
      %v278 = vmax.bf16 %v224, 0
      %v279 = vmax.bf16 %v225, 0
      %vm280 = vsmask.f32 3328
      %vm281 = vsmask.f32 7440
      %vm282 = vmor %vm280, %vm281
      %v284 = vshrl.u32 %v226, 16
      %v286 = vrot.slane %v284, 4
      %v287 = vshll.u32 %v226, 16
      %v289 = vrot.slane %v287, 5
      %v290 = vor.u32 %v286, %v289
      %v291 = vrot.slane %v290, 4
      %v293 = vshll.u32 %v227, 16
      %v295 = vrot.slane %v293, 5
      %v296 = vsel %vm282, %v291, %v295
      %v297 = vshrl.u32 %v227, 16
      %v299 = vrot.slane %v297, 4
      %v300 = vor.u32 %v299, %v295
      %v301 = vrot.slane %v300, 4
      %v303 = vshll.u32 %v228, 16
      %v305 = vrot.slane %v303, 5
      %v306 = vsel %vm282, %v301, %v305
      %v308 = vshrl.u32 %v229, 16
      %v310 = vrot.slane %v308, 4
      %v311 = vshll.u32 %v229, 16
      %v313 = vrot.slane %v311, 5
      %v314 = vor.u32 %v310, %v313
      %v315 = vrot.slane %v314, 4
      %v317 = vshll.u32 %v230, 16
      %v319 = vrot.slane %v317, 5
      %v320 = vsel %vm282, %v315, %v319
      %v321 = vshrl.u32 %v230, 16
      %v323 = vrot.slane %v321, 4
      %v324 = vor.u32 %v323, %v319
      %v325 = vrot.slane %v324, 4
      %v327 = vshll.u32 %v231, 16
      %v329 = vrot.slane %v327, 5
      %v330 = vsel %vm282, %v325, %v329
      %v332 = vshrl.u32 %v232, 16
      %v334 = vrot.slane %v332, 4
      %v335 = vshll.u32 %v232, 16
      %v337 = vrot.slane %v335, 5
      %v338 = vor.u32 %v334, %v337
      %v339 = vrot.slane %v338, 4
      %v341 = vshll.u32 %v233, 16
      %v343 = vrot.slane %v341, 5
      %v344 = vsel %vm282, %v339, %v343
      %v345 = vshrl.u32 %v233, 16
      %v347 = vrot.slane %v345, 4
      %v348 = vor.u32 %v347, %v343
      %v349 = vrot.slane %v348, 4
      %v351 = vshll.u32 %v234, 16
      %v353 = vrot.slane %v351, 5
      %v354 = vsel %vm282, %v349, %v353
      %v356 = vshrl.u32 %v235, 16
      %v358 = vrot.slane %v356, 4
      %v359 = vshll.u32 %v235, 16
      %v361 = vrot.slane %v359, 5
      %v362 = vor.u32 %v358, %v361
      %v363 = vrot.slane %v362, 4
      %v365 = vshll.u32 %v236, 16
      %v367 = vrot.slane %v365, 5
      %v368 = vsel %vm282, %v363, %v367
      %v369 = vshrl.u32 %v236, 16
      %v371 = vrot.slane %v369, 4
      %v372 = vor.u32 %v371, %v367
      %v373 = vrot.slane %v372, 4
      %v375 = vshll.u32 %v237, 16
      %v377 = vrot.slane %v375, 5
      %v378 = vsel %vm282, %v373, %v377
      %v380 = vshrl.u32 %v238, 16
      %v382 = vrot.slane %v380, 4
      %v383 = vshll.u32 %v238, 16
      %v385 = vrot.slane %v383, 5
      %v386 = vor.u32 %v382, %v385
      %v387 = vrot.slane %v386, 4
      %v389 = vshll.u32 %v239, 16
      %v391 = vrot.slane %v389, 5
      %v392 = vsel %vm282, %v387, %v391
      %v393 = vshrl.u32 %v239, 16
      %v395 = vrot.slane %v393, 4
      %v396 = vor.u32 %v395, %v391
      %v397 = vrot.slane %v396, 4
      %v399 = vshll.u32 %v240, 16
      %v401 = vrot.slane %v399, 5
      %v402 = vsel %vm282, %v397, %v401
      %v404 = vshrl.u32 %v241, 16
      %v406 = vrot.slane %v404, 4
      %v407 = vshll.u32 %v241, 16
      %v409 = vrot.slane %v407, 5
      %v410 = vor.u32 %v406, %v409
      %v411 = vrot.slane %v410, 4
      %v413 = vshll.u32 %v242, 16
      %v415 = vrot.slane %v413, 5
      %v416 = vsel %vm282, %v411, %v415
      %v417 = vshrl.u32 %v242, 16
      %v419 = vrot.slane %v417, 4
      %v420 = vor.u32 %v419, %v415
      %v421 = vrot.slane %v420, 4
      %v423 = vshll.u32 %v243, 16
      %v425 = vrot.slane %v423, 5
      %v426 = vsel %vm282, %v421, %v425
      %v428 = vshrl.u32 %v244, 16
      %v430 = vrot.slane %v428, 4
      %v431 = vshll.u32 %v244, 16
      %v433 = vrot.slane %v431, 5
      %v434 = vor.u32 %v430, %v433
      %v435 = vrot.slane %v434, 4
      %v437 = vshll.u32 %v245, 16
      %v439 = vrot.slane %v437, 5
      %v440 = vsel %vm282, %v435, %v439
      %v441 = vshrl.u32 %v245, 16
      %v443 = vrot.slane %v441, 4
      %v444 = vor.u32 %v443, %v439
      %v445 = vrot.slane %v444, 4
      %v447 = vshll.u32 %v246, 16
      %v449 = vrot.slane %v447, 5
      %v450 = vsel %vm282, %v445, %v449
      %v452 = vshrl.u32 %v247, 16
      %v454 = vrot.slane %v452, 4
      %v455 = vshll.u32 %v247, 16
      %v457 = vrot.slane %v455, 5
      %v458 = vor.u32 %v454, %v457
      %v459 = vrot.slane %v458, 4
      %v461 = vshll.u32 %v248, 16
      %v463 = vrot.slane %v461, 5
      %v464 = vsel %vm282, %v459, %v463
      %v465 = vshrl.u32 %v248, 16
      %v467 = vrot.slane %v465, 4
      %v468 = vor.u32 %v467, %v463
      %v469 = vrot.slane %v468, 4
      %v471 = vshll.u32 %v249, 16
      %v473 = vrot.slane %v471, 5
      %v474 = vsel %vm282, %v469, %v473
      %v476 = vshrl.u32 %v250, 16
      %v478 = vrot.slane %v476, 4
      %v479 = vshll.u32 %v250, 16
      %v481 = vrot.slane %v479, 5
      %v482 = vor.u32 %v478, %v481
      %v483 = vrot.slane %v482, 4
      %v485 = vshll.u32 %v251, 16
      %v487 = vrot.slane %v485, 5
      %v488 = vsel %vm282, %v483, %v487
      %v489 = vshrl.u32 %v251, 16
      %v491 = vrot.slane %v489, 4
      %v492 = vor.u32 %v491, %v487
      %v493 = vrot.slane %v492, 4
      %v495 = vshll.u32 %v252, 16
      %v497 = vrot.slane %v495, 5
      %v498 = vsel %vm282, %v493, %v497
      %v500 = vshrl.u32 %v253, 16
      %v502 = vrot.slane %v500, 4
      %v503 = vshll.u32 %v253, 16
      %v505 = vrot.slane %v503, 5
      %v506 = vor.u32 %v502, %v505
      %v507 = vrot.slane %v506, 4
      %v509 = vshll.u32 %v254, 16
      %v511 = vrot.slane %v509, 5
      %v512 = vsel %vm282, %v507, %v511
      %v513 = vshrl.u32 %v254, 16
      %v515 = vrot.slane %v513, 4
      %v516 = vor.u32 %v515, %v511
      %v517 = vrot.slane %v516, 4
      %v519 = vshll.u32 %v255, 16
      %v521 = vrot.slane %v519, 5
      %v522 = vsel %vm282, %v517, %v521
      %v524 = vshrl.u32 %v256, 16
      %v526 = vrot.slane %v524, 4
      %v527 = vshll.u32 %v256, 16
      %v529 = vrot.slane %v527, 5
      %v530 = vor.u32 %v526, %v529
      %v531 = vrot.slane %v530, 4
      %v533 = vshll.u32 %v257, 16
      %v535 = vrot.slane %v533, 5
      %v536 = vsel %vm282, %v531, %v535
      %v537 = vshrl.u32 %v257, 16
      %v539 = vrot.slane %v537, 4
      %v540 = vor.u32 %v539, %v535
      %v541 = vrot.slane %v540, 4
      %v543 = vshll.u32 %v258, 16
      %v545 = vrot.slane %v543, 5
      %v546 = vsel %vm282, %v541, %v545
      %v548 = vshrl.u32 %v259, 16
      %v550 = vrot.slane %v548, 4
      %v551 = vshll.u32 %v259, 16
      %v553 = vrot.slane %v551, 5
      %v554 = vor.u32 %v550, %v553
      %v555 = vrot.slane %v554, 4
      %v557 = vshll.u32 %v260, 16
      %v559 = vrot.slane %v557, 5
      %v560 = vsel %vm282, %v555, %v559
      %v561 = vshrl.u32 %v260, 16
      %v563 = vrot.slane %v561, 4
      %v564 = vor.u32 %v563, %v559
      %v565 = vrot.slane %v564, 4
      %v567 = vshll.u32 %v261, 16
      %v569 = vrot.slane %v567, 5
      %v570 = vsel %vm282, %v565, %v569
      %v572 = vshrl.u32 %v262, 16
      %v574 = vrot.slane %v572, 4
      %v575 = vshll.u32 %v262, 16
      %v577 = vrot.slane %v575, 5
      %v578 = vor.u32 %v574, %v577
      %v579 = vrot.slane %v578, 4
      %v581 = vshll.u32 %v263, 16
      %v583 = vrot.slane %v581, 5
      %v584 = vsel %vm282, %v579, %v583
      %v585 = vshrl.u32 %v263, 16
      %v587 = vrot.slane %v585, 4
      %v588 = vor.u32 %v587, %v583
      %v589 = vrot.slane %v588, 4
      %v591 = vshll.u32 %v264, 16
      %v593 = vrot.slane %v591, 5
      %v594 = vsel %vm282, %v589, %v593
      %v596 = vshrl.u32 %v265, 16
      %v598 = vrot.slane %v596, 4
      %v599 = vshll.u32 %v265, 16
      %v601 = vrot.slane %v599, 5
      %v602 = vor.u32 %v598, %v601
      %v603 = vrot.slane %v602, 4
      %v605 = vshll.u32 %v266, 16
      %v607 = vrot.slane %v605, 5
      %v608 = vsel %vm282, %v603, %v607
      %v609 = vshrl.u32 %v266, 16
      %v611 = vrot.slane %v609, 4
      %v612 = vor.u32 %v611, %v607
      %v613 = vrot.slane %v612, 4
      %v615 = vshll.u32 %v267, 16
      %v617 = vrot.slane %v615, 5
      %v618 = vsel %vm282, %v613, %v617
      %v620 = vshrl.u32 %v268, 16
      %v622 = vrot.slane %v620, 4
      %v623 = vshll.u32 %v268, 16
      %v625 = vrot.slane %v623, 5
      %v626 = vor.u32 %v622, %v625
      %v627 = vrot.slane %v626, 4
      %v629 = vshll.u32 %v269, 16
      %v631 = vrot.slane %v629, 5
      %v632 = vsel %vm282, %v627, %v631
      %v633 = vshrl.u32 %v269, 16
      %v635 = vrot.slane %v633, 4
      %v636 = vor.u32 %v635, %v631
      %v637 = vrot.slane %v636, 4
      %v639 = vshll.u32 %v270, 16
      %v641 = vrot.slane %v639, 5
      %v642 = vsel %vm282, %v637, %v641
      %v644 = vshrl.u32 %v271, 16
      %v646 = vrot.slane %v644, 4
      %v647 = vshll.u32 %v271, 16
      %v649 = vrot.slane %v647, 5
      %v650 = vor.u32 %v646, %v649
      %v651 = vrot.slane %v650, 4
      %v653 = vshll.u32 %v272, 16
      %v655 = vrot.slane %v653, 5
      %v656 = vsel %vm282, %v651, %v655
      %v657 = vshrl.u32 %v272, 16
      %v659 = vrot.slane %v657, 4
      %v660 = vor.u32 %v659, %v655
      %v661 = vrot.slane %v660, 4
      %v663 = vshll.u32 %v273, 16
      %v665 = vrot.slane %v663, 5
      %v666 = vsel %vm282, %v661, %v665
      %vm715 = vcmask 1042432
      %vm716 = vcmask 1046532
      %vm717 = vmor %vm715, %vm716
      %v718 = vrot.slane %v226, 5
      %v719 = vrot.slane %v718, 4
      %v720 = vrot.slane %v227, 5
      %v721 = vsel %vm717, %v719, %v720
      %v722 = vrot.slane %v720, 4
      %v723 = vrot.slane %v228, 5
      %v724 = vsel %vm717, %v722, %v723
      %v725 = vrot.slane %v229, 5
      %v726 = vrot.slane %v725, 4
      %v727 = vrot.slane %v230, 5
      %v728 = vsel %vm717, %v726, %v727
      %v729 = vrot.slane %v727, 4
      %v730 = vrot.slane %v231, 5
      %v731 = vsel %vm717, %v729, %v730
      %v732 = vrot.slane %v232, 5
      %v733 = vrot.slane %v732, 4
      %v734 = vrot.slane %v233, 5
      %v735 = vsel %vm717, %v733, %v734
      %v736 = vrot.slane %v734, 4
      %v737 = vrot.slane %v234, 5
      %v738 = vsel %vm717, %v736, %v737
      %v739 = vrot.slane %v235, 5
      %v740 = vrot.slane %v739, 4
      %v741 = vrot.slane %v236, 5
      %v742 = vsel %vm717, %v740, %v741
      %v743 = vrot.slane %v741, 4
      %v744 = vrot.slane %v237, 5
      %v745 = vsel %vm717, %v743, %v744
      %v746 = vrot.slane %v238, 5
      %v747 = vrot.slane %v746, 4
      %v748 = vrot.slane %v239, 5
      %v749 = vsel %vm717, %v747, %v748
      %v750 = vrot.slane %v748, 4
      %v751 = vrot.slane %v240, 5
      %v752 = vsel %vm717, %v750, %v751
      %v753 = vrot.slane %v241, 5
      %v754 = vrot.slane %v753, 4
      %v755 = vrot.slane %v242, 5
      %v756 = vsel %vm717, %v754, %v755
      %v757 = vrot.slane %v755, 4
      %v758 = vrot.slane %v243, 5
      %v759 = vsel %vm717, %v757, %v758
      %v760 = vrot.slane %v244, 5
      %v761 = vrot.slane %v760, 4
      %v762 = vrot.slane %v245, 5
      %v763 = vsel %vm717, %v761, %v762
      %v764 = vrot.slane %v762, 4
      %v765 = vrot.slane %v246, 5
      %v766 = vsel %vm717, %v764, %v765
      %v767 = vrot.slane %v247, 5
      %v768 = vrot.slane %v767, 4
      %v769 = vrot.slane %v248, 5
      %v770 = vsel %vm717, %v768, %v769
      %v771 = vrot.slane %v769, 4
      %v772 = vrot.slane %v249, 5
      %v773 = vsel %vm717, %v771, %v772
      %v774 = vrot.slane %v250, 5
      %v775 = vrot.slane %v774, 4
      %v776 = vrot.slane %v251, 5
      %v777 = vsel %vm717, %v775, %v776
      %v778 = vrot.slane %v776, 4
      %v779 = vrot.slane %v252, 5
      %v780 = vsel %vm717, %v778, %v779
      %v781 = vrot.slane %v253, 5
      %v782 = vrot.slane %v781, 4
      %v783 = vrot.slane %v254, 5
      %v784 = vsel %vm717, %v782, %v783
      %v785 = vrot.slane %v783, 4
      %v786 = vrot.slane %v255, 5
      %v787 = vsel %vm717, %v785, %v786
      %v788 = vrot.slane %v256, 5
      %v789 = vrot.slane %v788, 4
      %v790 = vrot.slane %v257, 5
      %v791 = vsel %vm717, %v789, %v790
      %v792 = vrot.slane %v790, 4
      %v793 = vrot.slane %v258, 5
      %v794 = vsel %vm717, %v792, %v793
      %v795 = vrot.slane %v259, 5
      %v796 = vrot.slane %v795, 4
      %v797 = vrot.slane %v260, 5
      %v798 = vsel %vm717, %v796, %v797
      %v799 = vrot.slane %v797, 4
      %v800 = vrot.slane %v261, 5
      %v801 = vsel %vm717, %v799, %v800
      %v802 = vrot.slane %v262, 5
      %v803 = vrot.slane %v802, 4
      %v804 = vrot.slane %v263, 5
      %v805 = vsel %vm717, %v803, %v804
      %v806 = vrot.slane %v804, 4
      %v807 = vrot.slane %v264, 5
      %v808 = vsel %vm717, %v806, %v807
      %v809 = vrot.slane %v265, 5
      %v810 = vrot.slane %v809, 4
      %v811 = vrot.slane %v266, 5
      %v812 = vsel %vm717, %v810, %v811
      %v813 = vrot.slane %v811, 4
      %v814 = vrot.slane %v267, 5
      %v815 = vsel %vm717, %v813, %v814
      %v816 = vrot.slane %v268, 5
      %v817 = vrot.slane %v816, 4
      %v818 = vrot.slane %v269, 5
      %v819 = vsel %vm717, %v817, %v818
      %v820 = vrot.slane %v818, 4
      %v821 = vrot.slane %v270, 5
      %v822 = vsel %vm717, %v820, %v821
      %v823 = vrot.slane %v271, 5
      %v824 = vrot.slane %v823, 4
      %v825 = vrot.slane %v272, 5
      %v826 = vsel %vm717, %v824, %v825
      %v827 = vrot.slane %v825, 4
      %v828 = vrot.slane %v273, 5
      %v829 = vsel %vm717, %v827, %v828
      %v831 = vshrl.u32 %v274, 16
      %v833 = vrot.slane %v831, 4
      %v834 = vshll.u32 %v274, 16
      %v836 = vrot.slane %v834, 5
      %v837 = vor.u32 %v833, %v836
      %v838 = vrot.slane %v837, 4
      %v840 = vshll.u32 %v275, 16
      %v842 = vrot.slane %v840, 5
      %v843 = vsel %vm282, %v838, %v842
      %v844 = vshrl.u32 %v275, 16
      %v846 = vrot.slane %v844, 4
      %v847 = vor.u32 %v846, %v842
      %v848 = vrot.slane %v847, 4
      %v850 = vshll.u32 %v276, 16
      %v852 = vrot.slane %v850, 5
      %v853 = vsel %vm282, %v848, %v852
      %v857 = vrot.slane %v274, 5
      %v858 = vrot.slane %v857, 4
      %v859 = vrot.slane %v275, 5
      %v860 = vsel %vm717, %v858, %v859
      %v861 = vrot.slane %v859, 4
      %v862 = vrot.slane %v276, 5
      %v863 = vsel %vm717, %v861, %v862
      %v865 = vshrl.u32 %v277, 16
      %v867 = vrot.slane %v865, 4
      %v868 = vshll.u32 %v277, 16
      %v870 = vrot.slane %v868, 5
      %v871 = vor.u32 %v867, %v870
      %v872 = vrot.slane %v871, 4
      %v874 = vshll.u32 %v278, 16
      %v876 = vrot.slane %v874, 5
      %v877 = vsel %vm282, %v872, %v876
      %v878 = vshrl.u32 %v278, 16
      %v880 = vrot.slane %v878, 4
      %v881 = vor.u32 %v880, %v876
      %v882 = vrot.slane %v881, 4
      %v884 = vshll.u32 %v279, 16
      %v886 = vrot.slane %v884, 5
      %v887 = vsel %vm282, %v882, %v886
      %v891 = vrot.slane %v277, 5
      %v892 = vrot.slane %v891, 4
      %v893 = vrot.slane %v278, 5
      %v894 = vsel %vm717, %v892, %v893
      %v895 = vrot.slane %v893, 4
      %v896 = vrot.slane %v279, 5
      %v897 = vsel %vm717, %v895, %v896
      %v898 = vunpack.c.l.b16 %v226
      %v899 = vunpack.c.l.b16 %v227
      %v900 = vunpack.c.l.b16 %v229
      %v901 = vunpack.c.l.b16 %v230
      %v902 = vunpack.c.l.b16 %v232
      %v903 = vunpack.c.l.b16 %v233
      %v904 = vunpack.c.l.b16 %v235
      %v905 = vunpack.c.l.b16 %v236
      %v906 = vunpack.c.l.b16 %v238
      %v907 = vunpack.c.l.b16 %v239
      %v908 = vunpack.c.l.b16 %v241
      %v909 = vunpack.c.l.b16 %v242
      %v910 = vunpack.c.l.b16 %v244
      %v911 = vunpack.c.l.b16 %v245
      %v912 = vunpack.c.l.b16 %v247
      %v913 = vunpack.c.l.b16 %v248
      %v914 = vunpack.c.l.b16 %v250
      %v915 = vunpack.c.l.b16 %v251
      %v916 = vunpack.c.l.b16 %v253
      %v917 = vunpack.c.l.b16 %v254
      %v918 = vunpack.c.l.b16 %v256
      %v919 = vunpack.c.l.b16 %v257
      %v920 = vunpack.c.l.b16 %v259
      %v921 = vunpack.c.l.b16 %v260
      %v922 = vunpack.c.l.b16 %v262
      %v923 = vunpack.c.l.b16 %v263
      %v924 = vunpack.c.l.b16 %v265
      %v925 = vunpack.c.l.b16 %v266
      %v926 = vunpack.c.l.b16 %v268
      %v927 = vunpack.c.l.b16 %v269
      %v928 = vunpack.c.l.b16 %v271
      %v929 = vunpack.c.l.b16 %v272
      %v930 = vpack.c.b16 %v899, %v898
      %v931 = vpack.c.b16 %v901, %v900
      %v932 = vpack.c.b16 %v903, %v902
      %v933 = vpack.c.b16 %v905, %v904
      %v934 = vpack.c.b16 %v907, %v906
      %v935 = vpack.c.b16 %v909, %v908
      %v936 = vpack.c.b16 %v911, %v910
      %v937 = vpack.c.b16 %v913, %v912
      %v938 = vpack.c.b16 %v915, %v914
      %v939 = vpack.c.b16 %v917, %v916
      %v940 = vpack.c.b16 %v919, %v918
      %v941 = vpack.c.b16 %v921, %v920
      %v942 = vpack.c.b16 %v923, %v922
      %v943 = vpack.c.b16 %v925, %v924
      %v944 = vpack.c.b16 %v927, %v926
      %v945 = vpack.c.b16 %v929, %v928
      %v946 = vunpack.c.l.b16 %v296
      %v947 = vunpack.c.l.b16 %v306
      %v948 = vunpack.c.l.b16 %v320
      %v949 = vunpack.c.l.b16 %v330
      %v950 = vunpack.c.l.b16 %v344
      %v951 = vunpack.c.l.b16 %v354
      %v952 = vunpack.c.l.b16 %v368
      %v953 = vunpack.c.l.b16 %v378
      %v954 = vunpack.c.l.b16 %v392
      %v955 = vunpack.c.l.b16 %v402
      %v956 = vunpack.c.l.b16 %v416
      %v957 = vunpack.c.l.b16 %v426
      %v958 = vunpack.c.l.b16 %v440
      %v959 = vunpack.c.l.b16 %v450
      %v960 = vunpack.c.l.b16 %v464
      %v961 = vunpack.c.l.b16 %v474
      %v962 = vunpack.c.l.b16 %v488
      %v963 = vunpack.c.l.b16 %v498
      %v964 = vunpack.c.l.b16 %v512
      %v965 = vunpack.c.l.b16 %v522
      %v966 = vunpack.c.l.b16 %v536
      %v967 = vunpack.c.l.b16 %v546
      %v968 = vunpack.c.l.b16 %v560
      %v969 = vunpack.c.l.b16 %v570
      %v970 = vunpack.c.l.b16 %v584
      %v971 = vunpack.c.l.b16 %v594
      %v972 = vunpack.c.l.b16 %v608
      %v973 = vunpack.c.l.b16 %v618
      %v974 = vunpack.c.l.b16 %v632
      %v975 = vunpack.c.l.b16 %v642
      %v976 = vunpack.c.l.b16 %v656
      %v977 = vunpack.c.l.b16 %v666
      %v978 = vpack.c.b16 %v947, %v946
      %v979 = vpack.c.b16 %v949, %v948
      %v980 = vpack.c.b16 %v951, %v950
      %v981 = vpack.c.b16 %v953, %v952
      %v982 = vpack.c.b16 %v955, %v954
      %v983 = vpack.c.b16 %v957, %v956
      %v984 = vpack.c.b16 %v959, %v958
      %v985 = vpack.c.b16 %v961, %v960
      %v986 = vpack.c.b16 %v963, %v962
      %v987 = vpack.c.b16 %v965, %v964
      %v988 = vpack.c.b16 %v967, %v966
      %v989 = vpack.c.b16 %v969, %v968
      %v990 = vpack.c.b16 %v971, %v970
      %v991 = vpack.c.b16 %v973, %v972
      %v992 = vpack.c.b16 %v975, %v974
      %v993 = vpack.c.b16 %v977, %v976
      %994 = vrot.lane.b32.xlu0 %v978, 8
      %v995 = vpop.permute.xlu0 %994
      %996 = vrot.lane.b32.xlu0 %v979, 8
      %v997 = vpop.permute.xlu0 %996
      %998 = vrot.lane.b32.xlu0 %v980, 8
      %v999 = vpop.permute.xlu0 %998
      %1000 = vrot.lane.b32.xlu0 %v981, 8
      %v1001 = vpop.permute.xlu0 %1000
      %1002 = vrot.lane.b32.xlu0 %v982, 8
      %v1003 = vpop.permute.xlu0 %1002
      %1004 = vrot.lane.b32.xlu0 %v983, 8
      %v1005 = vpop.permute.xlu0 %1004
      %1006 = vrot.lane.b32.xlu0 %v984, 8
      %v1007 = vpop.permute.xlu0 %1006
      %1008 = vrot.lane.b32.xlu0 %v985, 8
      %v1009 = vpop.permute.xlu0 %1008
      %1010 = vrot.lane.b32.xlu0 %v986, 8
      %v1011 = vpop.permute.xlu0 %1010
      %1012 = vrot.lane.b32.xlu0 %v987, 8
      %v1013 = vpop.permute.xlu0 %1012
      %1014 = vrot.lane.b32.xlu0 %v988, 8
      %v1015 = vpop.permute.xlu0 %1014
      %1016 = vrot.lane.b32.xlu0 %v989, 8
      %v1017 = vpop.permute.xlu0 %1016
      %1018 = vrot.lane.b32.xlu0 %v990, 8
      %v1019 = vpop.permute.xlu0 %1018
      %1020 = vrot.lane.b32.xlu0 %v991, 8
      %v1021 = vpop.permute.xlu0 %1020
      %1022 = vrot.lane.b32.xlu0 %v992, 8
      %v1023 = vpop.permute.xlu0 %1022
      %1024 = vrot.lane.b32.xlu0 %v993, 8
      %v1025 = vpop.permute.xlu0 %1024
      %v1026 = vunpack.c.l.b16 %v274
      %v1027 = vunpack.c.l.b16 %v275
      %v1028 = vpack.c.b16 %v1027, %v1026
      %1029 = vrot.lane.b32.xlu0 %v931, 16
      %v1030 = vpop.permute.xlu0 %1029
      %1031 = vrot.lane.b32.xlu0 %v932, 16
      %v1032 = vpop.permute.xlu0 %1031
      %1033 = vrot.lane.b32.xlu0 %v933, 16
      %v1034 = vpop.permute.xlu0 %1033
      %1035 = vrot.lane.b32.xlu0 %v934, 16
      %v1036 = vpop.permute.xlu0 %1035
      %1037 = vrot.lane.b32.xlu0 %v935, 16
      %v1038 = vpop.permute.xlu0 %1037
      %1039 = vrot.lane.b32.xlu0 %v936, 16
      %v1040 = vpop.permute.xlu0 %1039
      %1041 = vrot.lane.b32.xlu0 %v937, 16
      %v1042 = vpop.permute.xlu0 %1041
      %1043 = vrot.lane.b32.xlu0 %v938, 16
      %v1044 = vpop.permute.xlu0 %1043
      %1045 = vrot.lane.b32.xlu0 %v939, 16
      %v1046 = vpop.permute.xlu0 %1045
      %1047 = vrot.lane.b32.xlu0 %v940, 16
      %v1048 = vpop.permute.xlu0 %1047
      %1049 = vrot.lane.b32.xlu0 %v941, 16
      %v1050 = vpop.permute.xlu0 %1049
      %1051 = vrot.lane.b32.xlu0 %v942, 16
      %v1052 = vpop.permute.xlu0 %1051
      %1053 = vrot.lane.b32.xlu0 %v943, 16
      %v1054 = vpop.permute.xlu0 %1053
      %1055 = vrot.lane.b32.xlu0 %v944, 16
      %v1056 = vpop.permute.xlu0 %1055
      %1057 = vrot.lane.b32.xlu0 %v945, 16
      %v1058 = vpop.permute.xlu0 %1057
      %1059 = vrot.lane.b32.xlu0 %v1028, 16
      %v1060 = vpop.permute.xlu0 %1059
      %v1061 = vunpack.c.l.b16 %v843
      %v1062 = vunpack.c.l.b16 %v853
      %v1063 = vpack.c.b16 %v1062, %v1061
      %1064 = vrot.lane.b32.xlu0 %v979, 24
      %v1065 = vpop.permute.xlu0 %1064
      %1066 = vrot.lane.b32.xlu0 %v980, 24
      %v1067 = vpop.permute.xlu0 %1066
      %1068 = vrot.lane.b32.xlu0 %v981, 24
      %v1069 = vpop.permute.xlu0 %1068
      %1070 = vrot.lane.b32.xlu0 %v982, 24
      %v1071 = vpop.permute.xlu0 %1070
      %1072 = vrot.lane.b32.xlu0 %v983, 24
      %v1073 = vpop.permute.xlu0 %1072
      %1074 = vrot.lane.b32.xlu0 %v984, 24
      %v1075 = vpop.permute.xlu0 %1074
      %1076 = vrot.lane.b32.xlu0 %v985, 24
      %v1077 = vpop.permute.xlu0 %1076
      %1078 = vrot.lane.b32.xlu0 %v986, 24
      %v1079 = vpop.permute.xlu0 %1078
      %1080 = vrot.lane.b32.xlu0 %v987, 24
      %v1081 = vpop.permute.xlu0 %1080
      %1082 = vrot.lane.b32.xlu0 %v988, 24
      %v1083 = vpop.permute.xlu0 %1082
      %1084 = vrot.lane.b32.xlu0 %v989, 24
      %v1085 = vpop.permute.xlu0 %1084
      %1086 = vrot.lane.b32.xlu0 %v990, 24
      %v1087 = vpop.permute.xlu0 %1086
      %1088 = vrot.lane.b32.xlu0 %v991, 24
      %v1089 = vpop.permute.xlu0 %1088
      %1090 = vrot.lane.b32.xlu0 %v992, 24
      %v1091 = vpop.permute.xlu0 %1090
      %1092 = vrot.lane.b32.xlu0 %v993, 24
      %v1093 = vpop.permute.xlu0 %1092
      %1094 = vrot.lane.b32.xlu0 %v1063, 24
      %v1095 = vpop.permute.xlu0 %1094
      %vm1096 = vcmask 64512
      %v1099 = vsel %vm1096, %v930, %v995
      %v1102 = vsel %vm1096, %v931, %v997
      %v1105 = vsel %vm1096, %v932, %v999
      %v1108 = vsel %vm1096, %v933, %v1001
      %v1111 = vsel %vm1096, %v934, %v1003
      %v1114 = vsel %vm1096, %v935, %v1005
      %v1117 = vsel %vm1096, %v936, %v1007
      %v1120 = vsel %vm1096, %v937, %v1009
      %v1123 = vsel %vm1096, %v938, %v1011
      %v1126 = vsel %vm1096, %v939, %v1013
      %v1129 = vsel %vm1096, %v940, %v1015
      %v1132 = vsel %vm1096, %v941, %v1017
      %v1135 = vsel %vm1096, %v942, %v1019
      %v1138 = vsel %vm1096, %v943, %v1021
      %v1141 = vsel %vm1096, %v944, %v1023
      %v1144 = vsel %vm1096, %v945, %v1025
      %vm1145 = vcmask 130048
      %v1147 = vsel %vm1145, %v1099, %v1030
      %v1149 = vsel %vm1145, %v1102, %v1032
      %v1151 = vsel %vm1145, %v1105, %v1034
      %v1153 = vsel %vm1145, %v1108, %v1036
      %v1155 = vsel %vm1145, %v1111, %v1038
      %v1157 = vsel %vm1145, %v1114, %v1040
      %v1159 = vsel %vm1145, %v1117, %v1042
      %v1161 = vsel %vm1145, %v1120, %v1044
      %v1163 = vsel %vm1145, %v1123, %v1046
      %v1165 = vsel %vm1145, %v1126, %v1048
      %v1167 = vsel %vm1145, %v1129, %v1050
      %v1169 = vsel %vm1145, %v1132, %v1052
      %v1171 = vsel %vm1145, %v1135, %v1054
      %v1173 = vsel %vm1145, %v1138, %v1056
      %v1175 = vsel %vm1145, %v1141, %v1058
      %v1177 = vsel %vm1145, %v1144, %v1060
      %vm1178 = vcmask 195584
      %v1180 = vsel %vm1178, %v1147, %v1065
      %v1182 = vsel %vm1178, %v1149, %v1067
      %v1184 = vsel %vm1178, %v1151, %v1069
      %v1186 = vsel %vm1178, %v1153, %v1071
      %v1188 = vsel %vm1178, %v1155, %v1073
      %v1190 = vsel %vm1178, %v1157, %v1075
      %v1192 = vsel %vm1178, %v1159, %v1077
      %v1194 = vsel %vm1178, %v1161, %v1079
      %v1196 = vsel %vm1178, %v1163, %v1081
      %v1198 = vsel %vm1178, %v1165, %v1083
      %v1200 = vsel %vm1178, %v1167, %v1085
      %v1202 = vsel %vm1178, %v1169, %v1087
      %v1204 = vsel %vm1178, %v1171, %v1089
      %v1206 = vsel %vm1178, %v1173, %v1091
      %v1208 = vsel %vm1178, %v1175, %v1093
      %v1210 = vsel %vm1178, %v1177, %v1095
      %v1211 = vld [vmem:[%s1] sm:$0xf]
      %v1212 = vld [vmem:[%s1 + $0x4] sm:$0xf]
      %v1213 = vld [vmem:[%s1 + $0x8] sm:$0xf]
      %v1214 = vld [vmem:[%s1 + $0xc] sm:$0xf]
      %v1219 = vunpack.c.l.b16 %v1211
      %v1220 = vunpack.c.l.b16 %v1212
      %v1221 = vunpack.c.l.b16 %v1213
      %v1222 = vunpack.c.l.b16 %v1214
      %v1223 = vpack.c.b16 %v1220, %v1219
      %v1224 = vpack.c.b16 %v1222, %v1221
      %vm1227 = vcmask 261120
      %v1228 = vsel %vm1227, %v1180, 0
      %v1230 = vsel %vm1227, %v1182, 0
      %v1232 = vsel %vm1227, %v1184, 0
      %v1234 = vsel %vm1227, %v1186, 0
      %v1236 = vsel %vm1227, %v1188, 0
      %v1238 = vsel %vm1227, %v1190, 0
      %v1240 = vsel %vm1227, %v1192, 0
      %v1242 = vsel %vm1227, %v1194, 0
      %v1244 = vsel %vm1227, %v1196, 0
      %v1246 = vsel %vm1227, %v1198, 0
      %v1248 = vsel %vm1227, %v1200, 0
      %v1250 = vsel %vm1227, %v1202, 0
      %v1252 = vsel %vm1227, %v1204, 0
      %v1254 = vsel %vm1227, %v1206, 0
      %v1256 = vsel %vm1227, %v1208, 0
      %v1258 = vsel %vm1227, %v1210, 0
      %1260 = vmatprep.subr.bf16.mxu0 0
      %1261 = vmatpush1.bf16.msra.mxu0 %v1223
      %1262 = vmatprep.subr.bf16.mxu0 0
      %1263 = vmatpush1.bf16.msra.mxu0 %v1224
      %1264 = vmatprep.subr.bf16.mxu0 0
      %1265 = vmatpush1.bf16.msra.mxu0 0
      %1266 = vmatprep.subr.bf16.mxu0 0
      %1267 = vmatpush1.bf16.msra.mxu0 0
      %1268 = vmatprep.subr.bf16.mxu0 0
      %1269 = vmatpush1.bf16.msra.mxu0 0
      %1270 = vmatprep.subr.bf16.mxu0 0
      %1271 = vmatpush1.bf16.msra.mxu0 0
      %1272 = vmatprep.subr.bf16.mxu0 0
      %1273 = vmatpush1.bf16.msra.mxu0 0
      %1274 = vmatprep.subr.bf16.mxu0 0
      %1275 = vmatpush1.bf16.msra.mxu0 0
      %1276 = vmatprep.subr.bf16.mxu0 0
      %1277 = vmatpush1.bf16.msra.mxu0 0
      %1278 = vmatprep.subr.bf16.mxu0 0
      %1279 = vmatpush1.bf16.msra.mxu0 0
      %1280 = vmatprep.subr.bf16.mxu0 0
      %1281 = vmatpush1.bf16.msra.mxu0 0
      %1282 = vmatprep.subr.bf16.mxu0 0
      %1283 = vmatpush1.bf16.msra.mxu0 0
      %1284 = vmatprep.subr.bf16.mxu0 0
      %1285 = vmatpush1.bf16.msra.mxu0 0
      %1286 = vmatprep.subr.bf16.mxu0 0
      %1287 = vmatpush1.bf16.msra.mxu0 0
      %1288 = vmatprep.subr.bf16.mxu0 0
      %1289 = vmatpush1.bf16.msra.mxu0 0
      %1290 = vmatprep.subr.bf16.mxu0 0
      %1291 = vmatpush1.bf16.msra.mxu0 0
      %1292 = vmatprep.mubr.bf16.mxu0 0
      %1293 = vmatmul.mubr.bf16.gmra.mrb[0].mxu0 %v1228
      %v1294 = vpop.f32.mrb[0].mxu0
      %v1295 = vadd.f32 0.0, %v1294
      %v1296 = vpop.f32.mrb[0].mxu0
      %v1297 = vpop.f32.mrb[0].mxu0
      %v1298 = vadd.f32 0.0, %v1297
      %v1299 = vpop.f32.mrb[0].mxu0
      %1300 = vmatprep.mubr.bf16.mxu0 0
      %1301 = vmatmul.mubr.bf16.gmra.mrb[0].mxu0 %v1230
      %v1302 = vpop.f32.mrb[0].mxu0
      %v1303 = vadd.f32 0.0, %v1302
      %v1304 = vpop.f32.mrb[0].mxu0
      %v1305 = vpop.f32.mrb[0].mxu0
      %v1306 = vadd.f32 0.0, %v1305
      %v1307 = vpop.f32.mrb[0].mxu0
      %1308 = vmatprep.mubr.bf16.mxu0 0
      %1309 = vmatmul.mubr.bf16.gmra.mrb[0].mxu0 %v1232
      %v1310 = vpop.f32.mrb[0].mxu0
      %v1311 = vadd.f32 0.0, %v1310
      %v1312 = vpop.f32.mrb[0].mxu0
      %v1313 = vpop.f32.mrb[0].mxu0
      %v1314 = vadd.f32 0.0, %v1313
      %v1315 = vpop.f32.mrb[0].mxu0
      %1316 = vmatprep.mubr.bf16.mxu0 0
      %1317 = vmatmul.mubr.bf16.gmra.mrb[0].mxu0 %v1234
      %v1318 = vpop.f32.mrb[0].mxu0
      %v1319 = vadd.f32 0.0, %v1318
      %v1320 = vpop.f32.mrb[0].mxu0
      %v1321 = vpop.f32.mrb[0].mxu0
      %v1322 = vadd.f32 0.0, %v1321
      %v1323 = vpop.f32.mrb[0].mxu0
      %1324 = vmatprep.mubr.bf16.mxu0 0
      %1325 = vmatmul.mubr.bf16.gmra.mrb[0].mxu0 %v1236
      %v1326 = vpop.f32.mrb[0].mxu0
      %v1327 = vadd.f32 0.0, %v1326
      %v1328 = vpop.f32.mrb[0].mxu0
      %v1329 = vpop.f32.mrb[0].mxu0
      %v1330 = vadd.f32 0.0, %v1329
      %v1331 = vpop.f32.mrb[0].mxu0
      %1332 = vmatprep.mubr.bf16.mxu0 0
      %1333 = vmatmul.mubr.bf16.gmra.mrb[0].mxu0 %v1238
      %v1334 = vpop.f32.mrb[0].mxu0
      %v1335 = vadd.f32 0.0, %v1334
      %v1336 = vpop.f32.mrb[0].mxu0
      %v1337 = vpop.f32.mrb[0].mxu0
      %v1338 = vadd.f32 0.0, %v1337
      %v1339 = vpop.f32.mrb[0].mxu0
      %1340 = vmatprep.mubr.bf16.mxu0 0
      %1341 = vmatmul.mubr.bf16.gmra.mrb[0].mxu0 %v1240
      %v1342 = vpop.f32.mrb[0].mxu0
      %v1343 = vadd.f32 0.0, %v1342
      %v1344 = vpop.f32.mrb[0].mxu0
      %v1345 = vpop.f32.mrb[0].mxu0
      %v1346 = vadd.f32 0.0, %v1345
      %v1347 = vpop.f32.mrb[0].mxu0
      %1348 = vmatprep.mubr.bf16.mxu0 0
      %1349 = vmatmul.mubr.bf16.gmra.mrb[0].mxu0 %v1242
      %v1350 = vpop.f32.mrb[0].mxu0
      %v1351 = vadd.f32 0.0, %v1350
      %v1352 = vpop.f32.mrb[0].mxu0
      %v1353 = vpop.f32.mrb[0].mxu0
      %v1354 = vadd.f32 0.0, %v1353
      %v1355 = vpop.f32.mrb[0].mxu0
      %1356 = vmatprep.mubr.bf16.mxu0 0
      %1357 = vmatmul.mubr.bf16.gmra.mrb[0].mxu0 %v1244
      %v1358 = vpop.f32.mrb[0].mxu0
      %v1359 = vadd.f32 0.0, %v1358
      %v1360 = vpop.f32.mrb[0].mxu0
      %v1361 = vpop.f32.mrb[0].mxu0
      %v1362 = vadd.f32 0.0, %v1361
      %v1363 = vpop.f32.mrb[0].mxu0
      %1364 = vmatprep.mubr.bf16.mxu0 0
      %1365 = vmatmul.mubr.bf16.gmra.mrb[0].mxu0 %v1246
      %v1366 = vpop.f32.mrb[0].mxu0
      %v1367 = vadd.f32 0.0, %v1366
      %v1368 = vpop.f32.mrb[0].mxu0
      %v1369 = vpop.f32.mrb[0].mxu0
      %v1370 = vadd.f32 0.0, %v1369
      %v1371 = vpop.f32.mrb[0].mxu0
      %1372 = vmatprep.mubr.bf16.mxu0 0
      %1373 = vmatmul.mubr.bf16.gmra.mrb[0].mxu0 %v1248
      %v1374 = vpop.f32.mrb[0].mxu0
      %v1375 = vadd.f32 0.0, %v1374
      %v1376 = vpop.f32.mrb[0].mxu0
      %v1377 = vpop.f32.mrb[0].mxu0
      %v1378 = vadd.f32 0.0, %v1377
      %v1379 = vpop.f32.mrb[0].mxu0
      %1380 = vmatprep.mubr.bf16.mxu0 0
      %1381 = vmatmul.mubr.bf16.gmra.mrb[0].mxu0 %v1250
      %v1382 = vpop.f32.mrb[0].mxu0
      %v1383 = vadd.f32 0.0, %v1382
      %v1384 = vpop.f32.mrb[0].mxu0
      %v1385 = vpop.f32.mrb[0].mxu0
      %v1386 = vadd.f32 0.0, %v1385
      %v1387 = vpop.f32.mrb[0].mxu0
      %1388 = vmatprep.mubr.bf16.mxu0 0
      %1389 = vmatmul.mubr.bf16.gmra.mrb[0].mxu0 %v1252
      %v1390 = vpop.f32.mrb[0].mxu0
      %v1391 = vadd.f32 0.0, %v1390
      %v1392 = vpop.f32.mrb[0].mxu0
      %v1393 = vpop.f32.mrb[0].mxu0
      %v1394 = vadd.f32 0.0, %v1393
      %v1395 = vpop.f32.mrb[0].mxu0
      %1396 = vmatprep.mubr.bf16.mxu0 0
      %1397 = vmatmul.mubr.bf16.gmra.mrb[0].mxu0 %v1254
      %v1398 = vpop.f32.mrb[0].mxu0
      %v1399 = vadd.f32 0.0, %v1398
      %v1400 = vpop.f32.mrb[0].mxu0
      %v1401 = vpop.f32.mrb[0].mxu0
      %v1402 = vadd.f32 0.0, %v1401
      %v1403 = vpop.f32.mrb[0].mxu0
      %1404 = vmatprep.mubr.bf16.mxu0 0
      %1405 = vmatmul.mubr.bf16.gmra.mrb[0].mxu0 %v1256
      %v1406 = vpop.f32.mrb[0].mxu0
      %v1407 = vadd.f32 0.0, %v1406
      %v1408 = vpop.f32.mrb[0].mxu0
      %v1409 = vpop.f32.mrb[0].mxu0
      %v1410 = vadd.f32 0.0, %v1409
      %v1411 = vpop.f32.mrb[0].mxu0
      %1412 = vmatprep.mubr.bf16.mxu0 0
      %1413 = vmatmul.mubr.bf16.gmra.mrb[0].mxu0 %v1258
      %v1414 = vpop.f32.mrb[0].mxu0
      %v1415 = vadd.f32 0.0, %v1414
      %v1416 = vpop.f32.mrb[0].mxu0
      %v1417 = vpop.f32.mrb[0].mxu0
      %v1418 = vadd.f32 0.0, %v1417
      %v1419 = vpop.f32.mrb[0].mxu0
      %1420 = vdwg.mxu0
      %v1421 = vunpack.c.l.b16 %v721
      %v1422 = vunpack.c.l.b16 %v724
      %v1423 = vunpack.c.l.b16 %v728
      %v1424 = vunpack.c.l.b16 %v731
      %v1425 = vunpack.c.l.b16 %v735
      %v1426 = vunpack.c.l.b16 %v738
      %v1427 = vunpack.c.l.b16 %v742
      %v1428 = vunpack.c.l.b16 %v745
      %v1429 = vunpack.c.l.b16 %v749
      %v1430 = vunpack.c.l.b16 %v752
      %v1431 = vunpack.c.l.b16 %v756
      %v1432 = vunpack.c.l.b16 %v759
      %v1433 = vunpack.c.l.b16 %v763
      %v1434 = vunpack.c.l.b16 %v766
      %v1435 = vunpack.c.l.b16 %v770
      %v1436 = vunpack.c.l.b16 %v773
      %v1437 = vunpack.c.l.b16 %v777
      %v1438 = vunpack.c.l.b16 %v780
      %v1439 = vunpack.c.l.b16 %v784
      %v1440 = vunpack.c.l.b16 %v787
      %v1441 = vunpack.c.l.b16 %v791
      %v1442 = vunpack.c.l.b16 %v794
      %v1443 = vunpack.c.l.b16 %v798
      %v1444 = vunpack.c.l.b16 %v801
      %v1445 = vunpack.c.l.b16 %v805
      %v1446 = vunpack.c.l.b16 %v808
      %v1447 = vunpack.c.l.b16 %v812
      %v1448 = vunpack.c.l.b16 %v815
      %v1449 = vunpack.c.l.b16 %v819
      %v1450 = vunpack.c.l.b16 %v822
      %v1451 = vunpack.c.l.b16 %v826
      %v1452 = vunpack.c.l.b16 %v829
      %v1453 = vpack.c.b16 %v1422, %v1421
      %v1454 = vpack.c.b16 %v1424, %v1423
      %v1455 = vpack.c.b16 %v1426, %v1425
      %v1456 = vpack.c.b16 %v1428, %v1427
      %v1457 = vpack.c.b16 %v1430, %v1429
      %v1458 = vpack.c.b16 %v1432, %v1431
      %v1459 = vpack.c.b16 %v1434, %v1433
      %v1460 = vpack.c.b16 %v1436, %v1435
      %v1461 = vpack.c.b16 %v1438, %v1437
      %v1462 = vpack.c.b16 %v1440, %v1439
      %v1463 = vpack.c.b16 %v1442, %v1441
      %v1464 = vpack.c.b16 %v1444, %v1443
      %v1465 = vpack.c.b16 %v1446, %v1445
      %v1466 = vpack.c.b16 %v1448, %v1447
      %v1467 = vpack.c.b16 %v1450, %v1449
      %v1468 = vpack.c.b16 %v1452, %v1451
      %1469 = vrot.lane.b32.xlu0 %v1453, 8
      %v1470 = vpop.permute.xlu0 %1469
      %1471 = vrot.lane.b32.xlu0 %v1454, 8
      %v1472 = vpop.permute.xlu0 %1471
      %1473 = vrot.lane.b32.xlu0 %v1455, 8
      %v1474 = vpop.permute.xlu0 %1473
      %1475 = vrot.lane.b32.xlu0 %v1456, 8
      %v1476 = vpop.permute.xlu0 %1475
      %1477 = vrot.lane.b32.xlu0 %v1457, 8
      %v1478 = vpop.permute.xlu0 %1477
      %1479 = vrot.lane.b32.xlu0 %v1458, 8
      %v1480 = vpop.permute.xlu0 %1479
      %1481 = vrot.lane.b32.xlu0 %v1459, 8
      %v1482 = vpop.permute.xlu0 %1481
      %1483 = vrot.lane.b32.xlu0 %v1460, 8
      %v1484 = vpop.permute.xlu0 %1483
      %1485 = vrot.lane.b32.xlu0 %v1461, 8
      %v1486 = vpop.permute.xlu0 %1485
      %1487 = vrot.lane.b32.xlu0 %v1462, 8
      %v1488 = vpop.permute.xlu0 %1487
      %1489 = vrot.lane.b32.xlu0 %v1463, 8
      %v1490 = vpop.permute.xlu0 %1489
      %1491 = vrot.lane.b32.xlu0 %v1464, 8
      %v1492 = vpop.permute.xlu0 %1491
      %1493 = vrot.lane.b32.xlu0 %v1465, 8
      %v1494 = vpop.permute.xlu0 %1493
      %1495 = vrot.lane.b32.xlu0 %v1466, 8
      %v1496 = vpop.permute.xlu0 %1495
      %1497 = vrot.lane.b32.xlu0 %v1467, 8
      %v1498 = vpop.permute.xlu0 %1497
      %1499 = vrot.lane.b32.xlu0 %v1468, 8
      %v1500 = vpop.permute.xlu0 %1499
      %1501 = vrot.lane.b32.xlu0 %v979, 16
      %v1502 = vpop.permute.xlu0 %1501
      %1503 = vrot.lane.b32.xlu0 %v980, 16
      %v1504 = vpop.permute.xlu0 %1503
      %1505 = vrot.lane.b32.xlu0 %v981, 16
      %v1506 = vpop.permute.xlu0 %1505
      %1507 = vrot.lane.b32.xlu0 %v982, 16
      %v1508 = vpop.permute.xlu0 %1507
      %1509 = vrot.lane.b32.xlu0 %v983, 16
      %v1510 = vpop.permute.xlu0 %1509
      %1511 = vrot.lane.b32.xlu0 %v984, 16
      %v1512 = vpop.permute.xlu0 %1511
      %1513 = vrot.lane.b32.xlu0 %v985, 16
      %v1514 = vpop.permute.xlu0 %1513
      %1515 = vrot.lane.b32.xlu0 %v986, 16
      %v1516 = vpop.permute.xlu0 %1515
      %1517 = vrot.lane.b32.xlu0 %v987, 16
      %v1518 = vpop.permute.xlu0 %1517
      %1519 = vrot.lane.b32.xlu0 %v988, 16
      %v1520 = vpop.permute.xlu0 %1519
      %1521 = vrot.lane.b32.xlu0 %v989, 16
      %v1522 = vpop.permute.xlu0 %1521
      %1523 = vrot.lane.b32.xlu0 %v990, 16
      %v1524 = vpop.permute.xlu0 %1523
      %1525 = vrot.lane.b32.xlu0 %v991, 16
      %v1526 = vpop.permute.xlu0 %1525
      %1527 = vrot.lane.b32.xlu0 %v992, 16
      %v1528 = vpop.permute.xlu0 %1527
      %1529 = vrot.lane.b32.xlu0 %v993, 16
      %v1530 = vpop.permute.xlu0 %1529
      %1531 = vrot.lane.b32.xlu0 %v1063, 16
      %v1532 = vpop.permute.xlu0 %1531
      %v1533 = vunpack.c.l.b16 %v860
      %v1534 = vunpack.c.l.b16 %v863
      %v1535 = vpack.c.b16 %v1534, %v1533
      %1536 = vrot.lane.b32.xlu0 %v1454, 24
      %v1537 = vpop.permute.xlu0 %1536
      %1538 = vrot.lane.b32.xlu0 %v1455, 24
      %v1539 = vpop.permute.xlu0 %1538
      %1540 = vrot.lane.b32.xlu0 %v1456, 24
      %v1541 = vpop.permute.xlu0 %1540
      %1542 = vrot.lane.b32.xlu0 %v1457, 24
      %v1543 = vpop.permute.xlu0 %1542
      %1544 = vrot.lane.b32.xlu0 %v1458, 24
      %v1545 = vpop.permute.xlu0 %1544
      %1546 = vrot.lane.b32.xlu0 %v1459, 24
      %v1547 = vpop.permute.xlu0 %1546
      %1548 = vrot.lane.b32.xlu0 %v1460, 24
      %v1549 = vpop.permute.xlu0 %1548
      %1550 = vrot.lane.b32.xlu0 %v1461, 24
      %v1551 = vpop.permute.xlu0 %1550
      %1552 = vrot.lane.b32.xlu0 %v1462, 24
      %v1553 = vpop.permute.xlu0 %1552
      %1554 = vrot.lane.b32.xlu0 %v1463, 24
      %v1555 = vpop.permute.xlu0 %1554
      %1556 = vrot.lane.b32.xlu0 %v1464, 24
      %v1557 = vpop.permute.xlu0 %1556
      %1558 = vrot.lane.b32.xlu0 %v1465, 24
      %v1559 = vpop.permute.xlu0 %1558
      %1560 = vrot.lane.b32.xlu0 %v1466, 24
      %v1561 = vpop.permute.xlu0 %1560
      %1562 = vrot.lane.b32.xlu0 %v1467, 24
      %v1563 = vpop.permute.xlu0 %1562
      %1564 = vrot.lane.b32.xlu0 %v1468, 24
      %v1565 = vpop.permute.xlu0 %1564
      %1566 = vrot.lane.b32.xlu0 %v1535, 24
      %v1567 = vpop.permute.xlu0 %1566
      %v1570 = vsel %vm1096, %v978, %v1470
      %v1573 = vsel %vm1096, %v979, %v1472
      %v1576 = vsel %vm1096, %v980, %v1474
      %v1579 = vsel %vm1096, %v981, %v1476
      %v1582 = vsel %vm1096, %v982, %v1478
      %v1585 = vsel %vm1096, %v983, %v1480
      %v1588 = vsel %vm1096, %v984, %v1482
      %v1591 = vsel %vm1096, %v985, %v1484
      %v1594 = vsel %vm1096, %v986, %v1486
      %v1597 = vsel %vm1096, %v987, %v1488
      %v1600 = vsel %vm1096, %v988, %v1490
      %v1603 = vsel %vm1096, %v989, %v1492
      %v1606 = vsel %vm1096, %v990, %v1494
      %v1609 = vsel %vm1096, %v991, %v1496
      %v1612 = vsel %vm1096, %v992, %v1498
      %v1615 = vsel %vm1096, %v993, %v1500
      %v1617 = vsel %vm1145, %v1570, %v1502
      %v1619 = vsel %vm1145, %v1573, %v1504
      %v1621 = vsel %vm1145, %v1576, %v1506
      %v1623 = vsel %vm1145, %v1579, %v1508
      %v1625 = vsel %vm1145, %v1582, %v1510
      %v1627 = vsel %vm1145, %v1585, %v1512
      %v1629 = vsel %vm1145, %v1588, %v1514
      %v1631 = vsel %vm1145, %v1591, %v1516
      %v1633 = vsel %vm1145, %v1594, %v1518
      %v1635 = vsel %vm1145, %v1597, %v1520
      %v1637 = vsel %vm1145, %v1600, %v1522
      %v1639 = vsel %vm1145, %v1603, %v1524
      %v1641 = vsel %vm1145, %v1606, %v1526
      %v1643 = vsel %vm1145, %v1609, %v1528
      %v1645 = vsel %vm1145, %v1612, %v1530
      %v1647 = vsel %vm1145, %v1615, %v1532
      %v1649 = vsel %vm1178, %v1617, %v1537
      %v1651 = vsel %vm1178, %v1619, %v1539
      %v1653 = vsel %vm1178, %v1621, %v1541
      %v1655 = vsel %vm1178, %v1623, %v1543
      %v1657 = vsel %vm1178, %v1625, %v1545
      %v1659 = vsel %vm1178, %v1627, %v1547
      %v1661 = vsel %vm1178, %v1629, %v1549
      %v1663 = vsel %vm1178, %v1631, %v1551
      %v1665 = vsel %vm1178, %v1633, %v1553
      %v1667 = vsel %vm1178, %v1635, %v1555
      %v1669 = vsel %vm1178, %v1637, %v1557
      %v1671 = vsel %vm1178, %v1639, %v1559
      %v1673 = vsel %vm1178, %v1641, %v1561
      %v1675 = vsel %vm1178, %v1643, %v1563
      %v1677 = vsel %vm1178, %v1645, %v1565
      %v1679 = vsel %vm1178, %v1647, %v1567
      %s1680 = scalar_lea.vmem %s1, 16
      %v1681 = vld [vmem:[%s1680] sm:$0xf]
      %v1682 = vld [vmem:[%s1680 + $0x4] sm:$0xf]
      %v1683 = vld [vmem:[%s1680 + $0x8] sm:$0xf]
      %v1684 = vld [vmem:[%s1680 + $0xc] sm:$0xf]
      %v1689 = vunpack.c.l.b16 %v1681
      %v1690 = vunpack.c.l.b16 %v1682
      %v1691 = vunpack.c.l.b16 %v1683
      %v1692 = vunpack.c.l.b16 %v1684
      %v1693 = vpack.c.b16 %v1690, %v1689
      %v1694 = vpack.c.b16 %v1692, %v1691
      %v1697 = vsel %vm1227, %v1649, 0
      %v1699 = vsel %vm1227, %v1651, 0
      %v1701 = vsel %vm1227, %v1653, 0
      %v1703 = vsel %vm1227, %v1655, 0
      %v1705 = vsel %vm1227, %v1657, 0
      %v1707 = vsel %vm1227, %v1659, 0
      %v1709 = vsel %vm1227, %v1661, 0
      %v1711 = vsel %vm1227, %v1663, 0
      %v1713 = vsel %vm1227, %v1665, 0
      %v1715 = vsel %vm1227, %v1667, 0
      %v1717 = vsel %vm1227, %v1669, 0
      %v1719 = vsel %vm1227, %v1671, 0
      %v1721 = vsel %vm1227, %v1673, 0
      %v1723 = vsel %vm1227, %v1675, 0
      %v1725 = vsel %vm1227, %v1677, 0
      %v1727 = vsel %vm1227, %v1679, 0
      %1729 = vmatprep.subr.bf16.mxu0 0
      %1730 = vmatpush1.bf16.msra.mxu0 %v1693
      %1731 = vmatprep.subr.bf16.mxu0 0
      %1732 = vmatpush1.bf16.msra.mxu0 %v1694
      %1733 = vmatprep.subr.bf16.mxu0 0
      %1734 = vmatpush1.bf16.msra.mxu0 0
      %1735 = vmatprep.subr.bf16.mxu0 0
      %1736 = vmatpush1.bf16.msra.mxu0 0
      %1737 = vmatprep.subr.bf16.mxu0 0
      %1738 = vmatpush1.bf16.msra.mxu0 0
      %1739 = vmatprep.subr.bf16.mxu0 0
      %1740 = vmatpush1.bf16.msra.mxu0 0
      %1741 = vmatprep.subr.bf16.mxu0 0
      %1742 = vmatpush1.bf16.msra.mxu0 0
      %1743 = vmatprep.subr.bf16.mxu0 0
      %1744 = vmatpush1.bf16.msra.mxu0 0
      %1745 = vmatprep.subr.bf16.mxu0 0
      %1746 = vmatpush1.bf16.msra.mxu0 0
      %1747 = vmatprep.subr.bf16.mxu0 0
      %1748 = vmatpush1.bf16.msra.mxu0 0
      %1749 = vmatprep.subr.bf16.mxu0 0
      %1750 = vmatpush1.bf16.msra.mxu0 0
      %1751 = vmatprep.subr.bf16.mxu0 0
      %1752 = vmatpush1.bf16.msra.mxu0 0
      %1753 = vmatprep.subr.bf16.mxu0 0
      %1754 = vmatpush1.bf16.msra.mxu0 0
      %1755 = vmatprep.subr.bf16.mxu0 0
      %1756 = vmatpush1.bf16.msra.mxu0 0
      %1757 = vmatprep.subr.bf16.mxu0 0
      %1758 = vmatpush1.bf16.msra.mxu0 0
      %1759 = vmatprep.subr.bf16.mxu0 0
      %1760 = vmatpush1.bf16.msra.mxu0 0
      %1761 = vmatprep.mubr.bf16.mxu0 0
      %1762 = vmatmul.mubr.bf16.gmra.mrb[0].mxu0 %v1697
      %v1763 = vpop.f32.mrb[0].mxu0
      %v1764 = vadd.f32 0.0, %v1763
      %v1765 = vpop.f32.mrb[0].mxu0
      %v1766 = vpop.f32.mrb[0].mxu0
      %v1767 = vadd.f32 0.0, %v1766
      %v1768 = vpop.f32.mrb[0].mxu0
      %1769 = vmatprep.mubr.bf16.mxu0 0
      %1770 = vmatmul.mubr.bf16.gmra.mrb[0].mxu0 %v1699
      %v1771 = vpop.f32.mrb[0].mxu0
      %v1772 = vadd.f32 0.0, %v1771
      %v1773 = vpop.f32.mrb[0].mxu0
      %v1774 = vpop.f32.mrb[0].mxu0
      %v1775 = vadd.f32 0.0, %v1774
      %v1776 = vpop.f32.mrb[0].mxu0
      %1777 = vmatprep.mubr.bf16.mxu0 0
      %1778 = vmatmul.mubr.bf16.gmra.mrb[0].mxu0 %v1701
      %v1779 = vpop.f32.mrb[0].mxu0
      %v1780 = vadd.f32 0.0, %v1779
      %v1781 = vpop.f32.mrb[0].mxu0
      %v1782 = vpop.f32.mrb[0].mxu0
      %v1783 = vadd.f32 0.0, %v1782
      %v1784 = vpop.f32.mrb[0].mxu0
      %1785 = vmatprep.mubr.bf16.mxu0 0
      %1786 = vmatmul.mubr.bf16.gmra.mrb[0].mxu0 %v1703
      %v1787 = vpop.f32.mrb[0].mxu0
      %v1788 = vadd.f32 0.0, %v1787
      %v1789 = vpop.f32.mrb[0].mxu0
      %v1790 = vpop.f32.mrb[0].mxu0
      %v1791 = vadd.f32 0.0, %v1790
      %v1792 = vpop.f32.mrb[0].mxu0
      %1793 = vmatprep.mubr.bf16.mxu0 0
      %1794 = vmatmul.mubr.bf16.gmra.mrb[0].mxu0 %v1705
      %v1795 = vpop.f32.mrb[0].mxu0
      %v1796 = vadd.f32 0.0, %v1795
      %v1797 = vpop.f32.mrb[0].mxu0
      %v1798 = vpop.f32.mrb[0].mxu0
      %v1799 = vadd.f32 0.0, %v1798
      %v1800 = vpop.f32.mrb[0].mxu0
      %1801 = vmatprep.mubr.bf16.mxu0 0
      %1802 = vmatmul.mubr.bf16.gmra.mrb[0].mxu0 %v1707
      %v1803 = vpop.f32.mrb[0].mxu0
      %v1804 = vadd.f32 0.0, %v1803
      %v1805 = vpop.f32.mrb[0].mxu0
      %v1806 = vpop.f32.mrb[0].mxu0
      %v1807 = vadd.f32 0.0, %v1806
      %v1808 = vpop.f32.mrb[0].mxu0
      %1809 = vmatprep.mubr.bf16.mxu0 0
      %1810 = vmatmul.mubr.bf16.gmra.mrb[0].mxu0 %v1709
      %v1811 = vpop.f32.mrb[0].mxu0
      %v1812 = vadd.f32 0.0, %v1811
      %v1813 = vpop.f32.mrb[0].mxu0
      %v1814 = vpop.f32.mrb[0].mxu0
      %v1815 = vadd.f32 0.0, %v1814
      %v1816 = vpop.f32.mrb[0].mxu0
      %1817 = vmatprep.mubr.bf16.mxu0 0
      %1818 = vmatmul.mubr.bf16.gmra.mrb[0].mxu0 %v1711
      %v1819 = vpop.f32.mrb[0].mxu0
      %v1820 = vadd.f32 0.0, %v1819
      %v1821 = vpop.f32.mrb[0].mxu0
      %v1822 = vpop.f32.mrb[0].mxu0
      %v1823 = vadd.f32 0.0, %v1822
      %v1824 = vpop.f32.mrb[0].mxu0
      %1825 = vmatprep.mubr.bf16.mxu0 0
      %1826 = vmatmul.mubr.bf16.gmra.mrb[0].mxu0 %v1713
      %v1827 = vpop.f32.mrb[0].mxu0
      %v1828 = vadd.f32 0.0, %v1827
      %v1829 = vpop.f32.mrb[0].mxu0
      %v1830 = vpop.f32.mrb[0].mxu0
      %v1831 = vadd.f32 0.0, %v1830
      %v1832 = vpop.f32.mrb[0].mxu0
      %1833 = vmatprep.mubr.bf16.mxu0 0
      %1834 = vmatmul.mubr.bf16.gmra.mrb[0].mxu0 %v1715
      %v1835 = vpop.f32.mrb[0].mxu0
      %v1836 = vadd.f32 0.0, %v1835
      %v1837 = vpop.f32.mrb[0].mxu0
      %v1838 = vpop.f32.mrb[0].mxu0
      %v1839 = vadd.f32 0.0, %v1838
      %v1840 = vpop.f32.mrb[0].mxu0
      %1841 = vmatprep.mubr.bf16.mxu0 0
      %1842 = vmatmul.mubr.bf16.gmra.mrb[0].mxu0 %v1717
      %v1843 = vpop.f32.mrb[0].mxu0
      %v1844 = vadd.f32 0.0, %v1843
      %v1845 = vpop.f32.mrb[0].mxu0
      %v1846 = vpop.f32.mrb[0].mxu0
      %v1847 = vadd.f32 0.0, %v1846
      %v1848 = vpop.f32.mrb[0].mxu0
      %1849 = vmatprep.mubr.bf16.mxu0 0
      %1850 = vmatmul.mubr.bf16.gmra.mrb[0].mxu0 %v1719
      %v1851 = vpop.f32.mrb[0].mxu0
      %v1852 = vadd.f32 0.0, %v1851
      %v1853 = vpop.f32.mrb[0].mxu0
      %v1854 = vpop.f32.mrb[0].mxu0
      %v1855 = vadd.f32 0.0, %v1854
      %v1856 = vpop.f32.mrb[0].mxu0
      %1857 = vmatprep.mubr.bf16.mxu0 0
      %1858 = vmatmul.mubr.bf16.gmra.mrb[0].mxu0 %v1721
      %v1859 = vpop.f32.mrb[0].mxu0
      %v1860 = vadd.f32 0.0, %v1859
      %v1861 = vpop.f32.mrb[0].mxu0
      %v1862 = vpop.f32.mrb[0].mxu0
      %v1863 = vadd.f32 0.0, %v1862
      %v1864 = vpop.f32.mrb[0].mxu0
      %1865 = vmatprep.mubr.bf16.mxu0 0
      %1866 = vmatmul.mubr.bf16.gmra.mrb[0].mxu0 %v1723
      %v1867 = vpop.f32.mrb[0].mxu0
      %v1868 = vadd.f32 0.0, %v1867
      %v1869 = vpop.f32.mrb[0].mxu0
      %v1870 = vpop.f32.mrb[0].mxu0
      %v1871 = vadd.f32 0.0, %v1870
      %v1872 = vpop.f32.mrb[0].mxu0
      %1873 = vmatprep.mubr.bf16.mxu0 0
      %1874 = vmatmul.mubr.bf16.gmra.mrb[0].mxu0 %v1725
      %v1875 = vpop.f32.mrb[0].mxu0
      %v1876 = vadd.f32 0.0, %v1875
      %v1877 = vpop.f32.mrb[0].mxu0
      %v1878 = vpop.f32.mrb[0].mxu0
      %v1879 = vadd.f32 0.0, %v1878
      %v1880 = vpop.f32.mrb[0].mxu0
      %1881 = vmatprep.mubr.bf16.mxu0 0
      %1882 = vmatmul.mubr.bf16.gmra.mrb[0].mxu0 %v1727
      %v1883 = vpop.f32.mrb[0].mxu0
      %v1884 = vadd.f32 0.0, %v1883
      %v1885 = vpop.f32.mrb[0].mxu0
      %v1886 = vpop.f32.mrb[0].mxu0
      %v1887 = vadd.f32 0.0, %v1886
      %v1888 = vpop.f32.mrb[0].mxu0
      %1889 = vdwg.mxu0
      %1890 = vrot.lane.b32.xlu0 %v1063, 8
      %v1891 = vpop.permute.xlu0 %1890
      %v1892 = vunpack.c.l.b16 %v277
      %v1893 = vunpack.c.l.b16 %v278
      %v1894 = vpack.c.b16 %v1893, %v1892
      %1895 = vrot.lane.b32.xlu0 %v1894, 16
      %v1896 = vpop.permute.xlu0 %1895
      %v1897 = vunpack.c.l.b16 %v877
      %v1898 = vunpack.c.l.b16 %v887
      %v1899 = vpack.c.b16 %v1898, %v1897
      %1900 = vrot.lane.b32.xlu0 %v1899, 24
      %v1901 = vpop.permute.xlu0 %1900
      %v1904 = vsel %vm1096, %v1028, %v1891
      %v1906 = vsel %vm1145, %v1904, %v1896
      %v1908 = vsel %vm1178, %v1906, %v1901
      %s1909 = scalar_lea.vmem %s1, 32
      %v1910 = vld [vmem:[%s1909] sm:$0xf]
      %v1911 = vld [vmem:[%s1909 + $0x4] sm:$0xf]
      %v1912 = vld [vmem:[%s1909 + $0x8] sm:$0xf]
      %v1913 = vld [vmem:[%s1909 + $0xc] sm:$0xf]
      %v1918 = vunpack.c.l.b16 %v1910
      %v1919 = vunpack.c.l.b16 %v1911
      %v1920 = vunpack.c.l.b16 %v1912
      %v1921 = vunpack.c.l.b16 %v1913
      %v1922 = vpack.c.b16 %v1919, %v1918
      %v1923 = vpack.c.b16 %v1921, %v1920
      %v1926 = vsel %vm1227, %v1908, 0
      %1928 = vmatprep.subr.bf16.mxu0 0
      %1929 = vmatpush1.bf16.msra.mxu0 %v1922
      %1930 = vmatprep.subr.bf16.mxu0 0
      %1931 = vmatpush1.bf16.msra.mxu0 %v1923
      %1932 = vmatprep.subr.bf16.mxu0 0
      %1933 = vmatpush1.bf16.msra.mxu0 0
      %1934 = vmatprep.subr.bf16.mxu0 0
      %1935 = vmatpush1.bf16.msra.mxu0 0
      %1936 = vmatprep.subr.bf16.mxu0 0
      %1937 = vmatpush1.bf16.msra.mxu0 0
      %1938 = vmatprep.subr.bf16.mxu0 0
      %1939 = vmatpush1.bf16.msra.mxu0 0
      %1940 = vmatprep.subr.bf16.mxu0 0
      %1941 = vmatpush1.bf16.msra.mxu0 0
      %1942 = vmatprep.subr.bf16.mxu0 0
      %1943 = vmatpush1.bf16.msra.mxu0 0
      %1944 = vmatprep.subr.bf16.mxu0 0
      %1945 = vmatpush1.bf16.msra.mxu0 0
      %1946 = vmatprep.subr.bf16.mxu0 0
      %1947 = vmatpush1.bf16.msra.mxu0 0
      %1948 = vmatprep.subr.bf16.mxu0 0
      %1949 = vmatpush1.bf16.msra.mxu0 0
      %1950 = vmatprep.subr.bf16.mxu0 0
      %1951 = vmatpush1.bf16.msra.mxu0 0
      %1952 = vmatprep.subr.bf16.mxu0 0
      %1953 = vmatpush1.bf16.msra.mxu0 0
      %1954 = vmatprep.subr.bf16.mxu0 0
      %1955 = vmatpush1.bf16.msra.mxu0 0
      %1956 = vmatprep.subr.bf16.mxu0 0
      %1957 = vmatpush1.bf16.msra.mxu0 0
      %1958 = vmatprep.subr.bf16.mxu0 0
      %1959 = vmatpush1.bf16.msra.mxu0 0
      %1960 = vmatprep.mubr.bf16.mxu0 0
      %1961 = vmatmul.mubr.bf16.gmra.mrb[0].mxu0 %v1230
      %v1962 = vpop.f32.mrb[0].mxu0
      %v1963 = vadd.f32 0.0, %v1962
      %v1964 = vpop.f32.mrb[0].mxu0
      %v1965 = vpop.f32.mrb[0].mxu0
      %v1966 = vadd.f32 0.0, %v1965
      %v1967 = vpop.f32.mrb[0].mxu0
      %1968 = vmatprep.mubr.bf16.mxu0 0
      %1969 = vmatmul.mubr.bf16.gmra.mrb[0].mxu0 %v1232
      %v1970 = vpop.f32.mrb[0].mxu0
      %v1971 = vadd.f32 0.0, %v1970
      %v1972 = vpop.f32.mrb[0].mxu0
      %v1973 = vpop.f32.mrb[0].mxu0
      %v1974 = vadd.f32 0.0, %v1973
      %v1975 = vpop.f32.mrb[0].mxu0
      %1976 = vmatprep.mubr.bf16.mxu0 0
      %1977 = vmatmul.mubr.bf16.gmra.mrb[0].mxu0 %v1234
      %v1978 = vpop.f32.mrb[0].mxu0
      %v1979 = vadd.f32 0.0, %v1978
      %v1980 = vpop.f32.mrb[0].mxu0
      %v1981 = vpop.f32.mrb[0].mxu0
      %v1982 = vadd.f32 0.0, %v1981
      %v1983 = vpop.f32.mrb[0].mxu0
      %1984 = vmatprep.mubr.bf16.mxu0 0
      %1985 = vmatmul.mubr.bf16.gmra.mrb[0].mxu0 %v1236
      %v1986 = vpop.f32.mrb[0].mxu0
      %v1987 = vadd.f32 0.0, %v1986
      %v1988 = vpop.f32.mrb[0].mxu0
      %v1989 = vpop.f32.mrb[0].mxu0
      %v1990 = vadd.f32 0.0, %v1989
      %v1991 = vpop.f32.mrb[0].mxu0
      %1992 = vmatprep.mubr.bf16.mxu0 0
      %1993 = vmatmul.mubr.bf16.gmra.mrb[0].mxu0 %v1238
      %v1994 = vpop.f32.mrb[0].mxu0
      %v1995 = vadd.f32 0.0, %v1994
      %v1996 = vpop.f32.mrb[0].mxu0
      %v1997 = vpop.f32.mrb[0].mxu0
      %v1998 = vadd.f32 0.0, %v1997
      %v1999 = vpop.f32.mrb[0].mxu0
      %2000 = vmatprep.mubr.bf16.mxu0 0
      %2001 = vmatmul.mubr.bf16.gmra.mrb[0].mxu0 %v1240
      %v2002 = vpop.f32.mrb[0].mxu0
      %v2003 = vadd.f32 0.0, %v2002
      %v2004 = vpop.f32.mrb[0].mxu0
      %v2005 = vpop.f32.mrb[0].mxu0
      %v2006 = vadd.f32 0.0, %v2005
      %v2007 = vpop.f32.mrb[0].mxu0
      %2008 = vmatprep.mubr.bf16.mxu0 0
      %2009 = vmatmul.mubr.bf16.gmra.mrb[0].mxu0 %v1242
      %v2010 = vpop.f32.mrb[0].mxu0
      %v2011 = vadd.f32 0.0, %v2010
      %v2012 = vpop.f32.mrb[0].mxu0
      %v2013 = vpop.f32.mrb[0].mxu0
      %v2014 = vadd.f32 0.0, %v2013
      %v2015 = vpop.f32.mrb[0].mxu0
      %2016 = vmatprep.mubr.bf16.mxu0 0
      %2017 = vmatmul.mubr.bf16.gmra.mrb[0].mxu0 %v1244
      %v2018 = vpop.f32.mrb[0].mxu0
      %v2019 = vadd.f32 0.0, %v2018
      %v2020 = vpop.f32.mrb[0].mxu0
      %v2021 = vpop.f32.mrb[0].mxu0
      %v2022 = vadd.f32 0.0, %v2021
      %v2023 = vpop.f32.mrb[0].mxu0
      %2024 = vmatprep.mubr.bf16.mxu0 0
      %2025 = vmatmul.mubr.bf16.gmra.mrb[0].mxu0 %v1246
      %v2026 = vpop.f32.mrb[0].mxu0
      %v2027 = vadd.f32 0.0, %v2026
      %v2028 = vpop.f32.mrb[0].mxu0
      %v2029 = vpop.f32.mrb[0].mxu0
      %v2030 = vadd.f32 0.0, %v2029
      %v2031 = vpop.f32.mrb[0].mxu0
      %2032 = vmatprep.mubr.bf16.mxu0 0
      %2033 = vmatmul.mubr.bf16.gmra.mrb[0].mxu0 %v1248
      %v2034 = vpop.f32.mrb[0].mxu0
      %v2035 = vadd.f32 0.0, %v2034
      %v2036 = vpop.f32.mrb[0].mxu0
      %v2037 = vpop.f32.mrb[0].mxu0
      %v2038 = vadd.f32 0.0, %v2037
      %v2039 = vpop.f32.mrb[0].mxu0
      %2040 = vmatprep.mubr.bf16.mxu0 0
      %2041 = vmatmul.mubr.bf16.gmra.mrb[0].mxu0 %v1250
      %v2042 = vpop.f32.mrb[0].mxu0
      %v2043 = vadd.f32 0.0, %v2042
      %v2044 = vpop.f32.mrb[0].mxu0
      %v2045 = vpop.f32.mrb[0].mxu0
      %v2046 = vadd.f32 0.0, %v2045
      %v2047 = vpop.f32.mrb[0].mxu0
      %2048 = vmatprep.mubr.bf16.mxu0 0
      %2049 = vmatmul.mubr.bf16.gmra.mrb[0].mxu0 %v1252
      %v2050 = vpop.f32.mrb[0].mxu0
      %v2051 = vadd.f32 0.0, %v2050
      %v2052 = vpop.f32.mrb[0].mxu0
      %v2053 = vpop.f32.mrb[0].mxu0
      %v2054 = vadd.f32 0.0, %v2053
      %v2055 = vpop.f32.mrb[0].mxu0
      %2056 = vmatprep.mubr.bf16.mxu0 0
      %2057 = vmatmul.mubr.bf16.gmra.mrb[0].mxu0 %v1254
      %v2058 = vpop.f32.mrb[0].mxu0
      %v2059 = vadd.f32 0.0, %v2058
      %v2060 = vpop.f32.mrb[0].mxu0
      %v2061 = vpop.f32.mrb[0].mxu0
      %v2062 = vadd.f32 0.0, %v2061
      %v2063 = vpop.f32.mrb[0].mxu0
      %2064 = vmatprep.mubr.bf16.mxu0 0
      %2065 = vmatmul.mubr.bf16.gmra.mrb[0].mxu0 %v1256
      %v2066 = vpop.f32.mrb[0].mxu0
      %v2067 = vadd.f32 0.0, %v2066
      %v2068 = vpop.f32.mrb[0].mxu0
      %v2069 = vpop.f32.mrb[0].mxu0
      %v2070 = vadd.f32 0.0, %v2069
      %v2071 = vpop.f32.mrb[0].mxu0
      %2072 = vmatprep.mubr.bf16.mxu0 0
      %2073 = vmatmul.mubr.bf16.gmra.mrb[0].mxu0 %v1258
      %v2074 = vpop.f32.mrb[0].mxu0
      %v2075 = vadd.f32 0.0, %v2074
      %v2076 = vpop.f32.mrb[0].mxu0
      %v2077 = vpop.f32.mrb[0].mxu0
      %v2078 = vadd.f32 0.0, %v2077
      %v2079 = vpop.f32.mrb[0].mxu0
      %2080 = vmatprep.mubr.bf16.mxu0 0
      %2081 = vmatmul.mubr.bf16.gmra.mrb[0].mxu0 %v1926
      %v2082 = vpop.f32.mrb[0].mxu0
      %v2083 = vadd.f32 0.0, %v2082
      %v2084 = vpop.f32.mrb[0].mxu0
      %v2085 = vpop.f32.mrb[0].mxu0
      %v2086 = vadd.f32 0.0, %v2085
      %v2087 = vpop.f32.mrb[0].mxu0
      %2088 = vdwg.mxu0
      %2089 = vrot.lane.b32.xlu0 %v1535, 8
      %v2090 = vpop.permute.xlu0 %2089
      %2091 = vrot.lane.b32.xlu0 %v1899, 16
      %v2092 = vpop.permute.xlu0 %2091
      %v2093 = vunpack.c.l.b16 %v894
      %v2094 = vunpack.c.l.b16 %v897
      %v2095 = vpack.c.b16 %v2094, %v2093
      %2096 = vrot.lane.b32.xlu0 %v2095, 24
      %v2097 = vpop.permute.xlu0 %2096
      %v2100 = vsel %vm1096, %v1063, %v2090
      %v2102 = vsel %vm1145, %v2100, %v2092
      %v2104 = vsel %vm1178, %v2102, %v2097
      %s2105 = scalar_lea.vmem %s1, 48
      %v2106 = vld [vmem:[%s2105] sm:$0xf]
      %v2107 = vld [vmem:[%s2105 + $0x4] sm:$0xf]
      %v2108 = vld [vmem:[%s2105 + $0x8] sm:$0xf]
      %v2109 = vld [vmem:[%s2105 + $0xc] sm:$0xf]
      %v2114 = vunpack.c.l.b16 %v2106
      %v2115 = vunpack.c.l.b16 %v2107
      %v2116 = vunpack.c.l.b16 %v2108
      %v2117 = vunpack.c.l.b16 %v2109
      %v2118 = vpack.c.b16 %v2115, %v2114
      %v2119 = vpack.c.b16 %v2117, %v2116
      %v2122 = vsel %vm1227, %v2104, 0
      %2124 = vmatprep.subr.bf16.mxu0 0
      %2125 = vmatpush1.bf16.msra.mxu0 %v2118
      %2126 = vmatprep.subr.bf16.mxu0 0
      %2127 = vmatpush1.bf16.msra.mxu0 %v2119
      %2128 = vmatprep.subr.bf16.mxu0 0
      %2129 = vmatpush1.bf16.msra.mxu0 0
      %2130 = vmatprep.subr.bf16.mxu0 0
      %2131 = vmatpush1.bf16.msra.mxu0 0
      %2132 = vmatprep.subr.bf16.mxu0 0
      %2133 = vmatpush1.bf16.msra.mxu0 0
      %2134 = vmatprep.subr.bf16.mxu0 0
      %2135 = vmatpush1.bf16.msra.mxu0 0
      %2136 = vmatprep.subr.bf16.mxu0 0
      %2137 = vmatpush1.bf16.msra.mxu0 0
      %2138 = vmatprep.subr.bf16.mxu0 0
      %2139 = vmatpush1.bf16.msra.mxu0 0
      %2140 = vmatprep.subr.bf16.mxu0 0
      %2141 = vmatpush1.bf16.msra.mxu0 0
      %2142 = vmatprep.subr.bf16.mxu0 0
      %2143 = vmatpush1.bf16.msra.mxu0 0
      %2144 = vmatprep.subr.bf16.mxu0 0
      %2145 = vmatpush1.bf16.msra.mxu0 0
      %2146 = vmatprep.subr.bf16.mxu0 0
      %2147 = vmatpush1.bf16.msra.mxu0 0
      %2148 = vmatprep.subr.bf16.mxu0 0
      %2149 = vmatpush1.bf16.msra.mxu0 0
      %2150 = vmatprep.subr.bf16.mxu0 0
      %2151 = vmatpush1.bf16.msra.mxu0 0
      %2152 = vmatprep.subr.bf16.mxu0 0
      %2153 = vmatpush1.bf16.msra.mxu0 0
      %2154 = vmatprep.subr.bf16.mxu0 0
      %2155 = vmatpush1.bf16.msra.mxu0 0
      %2156 = vmatprep.mubr.bf16.mxu0 0
      %2157 = vmatmul.mubr.bf16.gmra.mrb[0].mxu0 %v1699
      %v2158 = vpop.f32.mrb[0].mxu0
      %v2159 = vadd.f32 0.0, %v2158
      %v2160 = vpop.f32.mrb[0].mxu0
      %v2161 = vpop.f32.mrb[0].mxu0
      %v2162 = vadd.f32 0.0, %v2161
      %v2163 = vpop.f32.mrb[0].mxu0
      %2164 = vmatprep.mubr.bf16.mxu0 0
      %2165 = vmatmul.mubr.bf16.gmra.mrb[0].mxu0 %v1701
      %v2166 = vpop.f32.mrb[0].mxu0
      %v2167 = vadd.f32 0.0, %v2166
      %v2168 = vpop.f32.mrb[0].mxu0
      %v2169 = vpop.f32.mrb[0].mxu0
      %v2170 = vadd.f32 0.0, %v2169
      %v2171 = vpop.f32.mrb[0].mxu0
      %2172 = vmatprep.mubr.bf16.mxu0 0
      %2173 = vmatmul.mubr.bf16.gmra.mrb[0].mxu0 %v1703
      %v2174 = vpop.f32.mrb[0].mxu0
      %v2175 = vadd.f32 0.0, %v2174
      %v2176 = vpop.f32.mrb[0].mxu0
      %v2177 = vpop.f32.mrb[0].mxu0
      %v2178 = vadd.f32 0.0, %v2177
      %v2179 = vpop.f32.mrb[0].mxu0
      %2180 = vmatprep.mubr.bf16.mxu0 0
      %2181 = vmatmul.mubr.bf16.gmra.mrb[0].mxu0 %v1705
      %v2182 = vpop.f32.mrb[0].mxu0
      %v2183 = vadd.f32 0.0, %v2182
      %v2184 = vpop.f32.mrb[0].mxu0
      %v2185 = vpop.f32.mrb[0].mxu0
      %v2186 = vadd.f32 0.0, %v2185
      %v2187 = vpop.f32.mrb[0].mxu0
      %2188 = vmatprep.mubr.bf16.mxu0 0
      %2189 = vmatmul.mubr.bf16.gmra.mrb[0].mxu0 %v1707
      %v2190 = vpop.f32.mrb[0].mxu0
      %v2191 = vadd.f32 0.0, %v2190
      %v2192 = vpop.f32.mrb[0].mxu0
      %v2193 = vpop.f32.mrb[0].mxu0
      %v2194 = vadd.f32 0.0, %v2193
      %v2195 = vpop.f32.mrb[0].mxu0
      %2196 = vmatprep.mubr.bf16.mxu0 0
      %2197 = vmatmul.mubr.bf16.gmra.mrb[0].mxu0 %v1709
      %v2198 = vpop.f32.mrb[0].mxu0
      %v2199 = vadd.f32 0.0, %v2198
      %v2200 = vpop.f32.mrb[0].mxu0
      %v2201 = vpop.f32.mrb[0].mxu0
      %v2202 = vadd.f32 0.0, %v2201
      %v2203 = vpop.f32.mrb[0].mxu0
      %2204 = vmatprep.mubr.bf16.mxu0 0
      %2205 = vmatmul.mubr.bf16.gmra.mrb[0].mxu0 %v1711
      %v2206 = vpop.f32.mrb[0].mxu0
      %v2207 = vadd.f32 0.0, %v2206
      %v2208 = vpop.f32.mrb[0].mxu0
      %v2209 = vpop.f32.mrb[0].mxu0
      %v2210 = vadd.f32 0.0, %v2209
      %v2211 = vpop.f32.mrb[0].mxu0
      %2212 = vmatprep.mubr.bf16.mxu0 0
      %2213 = vmatmul.mubr.bf16.gmra.mrb[0].mxu0 %v1713
      %v2214 = vpop.f32.mrb[0].mxu0
      %v2215 = vadd.f32 0.0, %v2214
      %v2216 = vpop.f32.mrb[0].mxu0
      %v2217 = vpop.f32.mrb[0].mxu0
      %v2218 = vadd.f32 0.0, %v2217
      %v2219 = vpop.f32.mrb[0].mxu0
      %2220 = vmatprep.mubr.bf16.mxu0 0
      %2221 = vmatmul.mubr.bf16.gmra.mrb[0].mxu0 %v1715
      %v2222 = vpop.f32.mrb[0].mxu0
      %v2223 = vadd.f32 0.0, %v2222
      %v2224 = vpop.f32.mrb[0].mxu0
      %v2225 = vpop.f32.mrb[0].mxu0
      %v2226 = vadd.f32 0.0, %v2225
      %v2227 = vpop.f32.mrb[0].mxu0
      %2228 = vmatprep.mubr.bf16.mxu0 0
      %2229 = vmatmul.mubr.bf16.gmra.mrb[0].mxu0 %v1717
      %v2230 = vpop.f32.mrb[0].mxu0
      %v2231 = vadd.f32 0.0, %v2230
      %v2232 = vpop.f32.mrb[0].mxu0
      %v2233 = vpop.f32.mrb[0].mxu0
      %v2234 = vadd.f32 0.0, %v2233
      %v2235 = vpop.f32.mrb[0].mxu0
      %2236 = vmatprep.mubr.bf16.mxu0 0
      %2237 = vmatmul.mubr.bf16.gmra.mrb[0].mxu0 %v1719
      %v2238 = vpop.f32.mrb[0].mxu0
      %v2239 = vadd.f32 0.0, %v2238
      %v2240 = vpop.f32.mrb[0].mxu0
      %v2241 = vpop.f32.mrb[0].mxu0
      %v2242 = vadd.f32 0.0, %v2241
      %v2243 = vpop.f32.mrb[0].mxu0
      %2244 = vmatprep.mubr.bf16.mxu0 0
      %2245 = vmatmul.mubr.bf16.gmra.mrb[0].mxu0 %v1721
      %v2246 = vpop.f32.mrb[0].mxu0
      %v2247 = vadd.f32 0.0, %v2246
      %v2248 = vpop.f32.mrb[0].mxu0
      %v2249 = vpop.f32.mrb[0].mxu0
      %v2250 = vadd.f32 0.0, %v2249
      %v2251 = vpop.f32.mrb[0].mxu0
      %2252 = vmatprep.mubr.bf16.mxu0 0
      %2253 = vmatmul.mubr.bf16.gmra.mrb[0].mxu0 %v1723
      %v2254 = vpop.f32.mrb[0].mxu0
      %v2255 = vadd.f32 0.0, %v2254
      %v2256 = vpop.f32.mrb[0].mxu0
      %v2257 = vpop.f32.mrb[0].mxu0
      %v2258 = vadd.f32 0.0, %v2257
      %v2259 = vpop.f32.mrb[0].mxu0
      %2260 = vmatprep.mubr.bf16.mxu0 0
      %2261 = vmatmul.mubr.bf16.gmra.mrb[0].mxu0 %v1725
      %v2262 = vpop.f32.mrb[0].mxu0
      %v2263 = vadd.f32 0.0, %v2262
      %v2264 = vpop.f32.mrb[0].mxu0
      %v2265 = vpop.f32.mrb[0].mxu0
      %v2266 = vadd.f32 0.0, %v2265
      %v2267 = vpop.f32.mrb[0].mxu0
      %2268 = vmatprep.mubr.bf16.mxu0 0
      %2269 = vmatmul.mubr.bf16.gmra.mrb[0].mxu0 %v1727
      %v2270 = vpop.f32.mrb[0].mxu0
      %v2271 = vadd.f32 0.0, %v2270
      %v2272 = vpop.f32.mrb[0].mxu0
      %v2273 = vpop.f32.mrb[0].mxu0
      %v2274 = vadd.f32 0.0, %v2273
      %v2275 = vpop.f32.mrb[0].mxu0
      %2276 = vmatprep.mubr.bf16.mxu0 0
      %2277 = vmatmul.mubr.bf16.gmra.mrb[0].mxu0 %v2122
      %v2278 = vpop.f32.mrb[0].mxu0
      %v2279 = vadd.f32 0.0, %v2278
      %v2280 = vpop.f32.mrb[0].mxu0
      %v2281 = vpop.f32.mrb[0].mxu0
      %v2282 = vadd.f32 0.0, %v2281
      %v2283 = vpop.f32.mrb[0].mxu0
      %2284 = vdwg.mxu0
      %v2285 = vld [vmem:[%s2] sm:$0x7]
      %vm2286 = vcmask 31744
      %v2287 = vsel %vm2286, %v1295, 0.0
      %v2288 = vsel %vm2286, %v1298, 0.0
      %v2289 = vadd.f32 %v2287, %v2288
      %v2290 = vsel %vm2286, %v1303, 0.0
      %v2291 = vadd.f32 %v2289, %v2290
      %v2292 = vsel %vm2286, %v1306, 0.0
      %v2293 = vadd.f32 %v2291, %v2292
      %v2294 = vsel %vm2286, %v1311, 0.0
      %v2295 = vadd.f32 %v2293, %v2294
      %v2296 = vsel %vm2286, %v1314, 0.0
      %v2297 = vadd.f32 %v2295, %v2296
      %v2298 = vsel %vm2286, %v1319, 0.0
      %v2299 = vadd.f32 %v2297, %v2298
      %v2300 = vsel %vm2286, %v1322, 0.0
      %v2301 = vadd.f32 %v2299, %v2300
      %v2302 = vsel %vm2286, %v1327, 0.0
      %v2303 = vadd.f32 %v2301, %v2302
      %v2304 = vsel %vm2286, %v1330, 0.0
      %v2305 = vadd.f32 %v2303, %v2304
      %v2306 = vsel %vm2286, %v1335, 0.0
      %v2307 = vadd.f32 %v2305, %v2306
      %v2308 = vsel %vm2286, %v1338, 0.0
      %v2309 = vadd.f32 %v2307, %v2308
      %v2310 = vsel %vm2286, %v1343, 0.0
      %v2311 = vadd.f32 %v2309, %v2310
      %v2312 = vsel %vm2286, %v1346, 0.0
      %v2313 = vadd.f32 %v2311, %v2312
      %v2314 = vsel %vm2286, %v1351, 0.0
      %v2315 = vadd.f32 %v2313, %v2314
      %v2316 = vsel %vm2286, %v1354, 0.0
      %v2317 = vadd.f32 %v2315, %v2316
      %v2318 = vsel %vm2286, %v1359, 0.0
      %v2319 = vadd.f32 %v2317, %v2318
      %v2320 = vsel %vm2286, %v1362, 0.0
      %v2321 = vadd.f32 %v2319, %v2320
      %v2322 = vsel %vm2286, %v1367, 0.0
      %v2323 = vadd.f32 %v2321, %v2322
      %v2324 = vsel %vm2286, %v1370, 0.0
      %v2325 = vadd.f32 %v2323, %v2324
      %v2326 = vsel %vm2286, %v1375, 0.0
      %v2327 = vadd.f32 %v2325, %v2326
      %v2328 = vsel %vm2286, %v1378, 0.0
      %v2329 = vadd.f32 %v2327, %v2328
      %v2330 = vsel %vm2286, %v1383, 0.0
      %v2331 = vadd.f32 %v2329, %v2330
      %v2332 = vsel %vm2286, %v1386, 0.0
      %v2333 = vadd.f32 %v2331, %v2332
      %v2334 = vsel %vm2286, %v1391, 0.0
      %v2335 = vadd.f32 %v2333, %v2334
      %v2336 = vsel %vm2286, %v1394, 0.0
      %v2337 = vadd.f32 %v2335, %v2336
      %v2338 = vsel %vm2286, %v1399, 0.0
      %v2339 = vadd.f32 %v2337, %v2338
      %v2340 = vsel %vm2286, %v1402, 0.0
      %v2341 = vadd.f32 %v2339, %v2340
      %v2342 = vsel %vm2286, %v1407, 0.0
      %v2343 = vadd.f32 %v2341, %v2342
      %v2344 = vsel %vm2286, %v1410, 0.0
      %v2345 = vadd.f32 %v2343, %v2344
      %v2346 = vsel %vm2286, %v1415, 0.0
      %v2347 = vadd.f32 %v2345, %v2346
      %v2348 = vsel %vm2286, %v1418, 0.0
      %v2349 = vadd.f32 %v2347, %v2348
      %v2350 = vrot.slane %v2349, 4
      %v2351 = vadd.f32 %v2349, %v2350
      %v2352 = vrot.slane %v2351, 2
      %v2353 = vadd.f32 %v2351, %v2352
      %v2354 = vrot.slane %v2353, 1
      %v2355 = vadd.f32 %v2353, %v2354
      %v2356 = vadd.f32 %v2355, 0.0
      %v2357 = vsel %vm2286, %v1764, 0.0
      %v2358 = vsel %vm2286, %v1767, 0.0
      %v2359 = vadd.f32 %v2357, %v2358
      %v2360 = vsel %vm2286, %v1772, 0.0
      %v2361 = vadd.f32 %v2359, %v2360
      %v2362 = vsel %vm2286, %v1775, 0.0
      %v2363 = vadd.f32 %v2361, %v2362
      %v2364 = vsel %vm2286, %v1780, 0.0
      %v2365 = vadd.f32 %v2363, %v2364
      %v2366 = vsel %vm2286, %v1783, 0.0
      %v2367 = vadd.f32 %v2365, %v2366
      %v2368 = vsel %vm2286, %v1788, 0.0
      %v2369 = vadd.f32 %v2367, %v2368
      %v2370 = vsel %vm2286, %v1791, 0.0
      %v2371 = vadd.f32 %v2369, %v2370
      %v2372 = vsel %vm2286, %v1796, 0.0
      %v2373 = vadd.f32 %v2371, %v2372
      %v2374 = vsel %vm2286, %v1799, 0.0
      %v2375 = vadd.f32 %v2373, %v2374
      %v2376 = vsel %vm2286, %v1804, 0.0
      %v2377 = vadd.f32 %v2375, %v2376
      %v2378 = vsel %vm2286, %v1807, 0.0
      %v2379 = vadd.f32 %v2377, %v2378
      %v2380 = vsel %vm2286, %v1812, 0.0
      %v2381 = vadd.f32 %v2379, %v2380
      %v2382 = vsel %vm2286, %v1815, 0.0
      %v2383 = vadd.f32 %v2381, %v2382
      %v2384 = vsel %vm2286, %v1820, 0.0
      %v2385 = vadd.f32 %v2383, %v2384
      %v2386 = vsel %vm2286, %v1823, 0.0
      %v2387 = vadd.f32 %v2385, %v2386
      %v2388 = vsel %vm2286, %v1828, 0.0
      %v2389 = vadd.f32 %v2387, %v2388
      %v2390 = vsel %vm2286, %v1831, 0.0
      %v2391 = vadd.f32 %v2389, %v2390
      %v2392 = vsel %vm2286, %v1836, 0.0
      %v2393 = vadd.f32 %v2391, %v2392
      %v2394 = vsel %vm2286, %v1839, 0.0
      %v2395 = vadd.f32 %v2393, %v2394
      %v2396 = vsel %vm2286, %v1844, 0.0
      %v2397 = vadd.f32 %v2395, %v2396
      %v2398 = vsel %vm2286, %v1847, 0.0
      %v2399 = vadd.f32 %v2397, %v2398
      %v2400 = vsel %vm2286, %v1852, 0.0
      %v2401 = vadd.f32 %v2399, %v2400
      %v2402 = vsel %vm2286, %v1855, 0.0
      %v2403 = vadd.f32 %v2401, %v2402
      %v2404 = vsel %vm2286, %v1860, 0.0
      %v2405 = vadd.f32 %v2403, %v2404
      %v2406 = vsel %vm2286, %v1863, 0.0
      %v2407 = vadd.f32 %v2405, %v2406
      %v2408 = vsel %vm2286, %v1868, 0.0
      %v2409 = vadd.f32 %v2407, %v2408
      %v2410 = vsel %vm2286, %v1871, 0.0
      %v2411 = vadd.f32 %v2409, %v2410
      %v2412 = vsel %vm2286, %v1876, 0.0
      %v2413 = vadd.f32 %v2411, %v2412
      %v2414 = vsel %vm2286, %v1879, 0.0
      %v2415 = vadd.f32 %v2413, %v2414
      %v2416 = vsel %vm2286, %v1884, 0.0
      %v2417 = vadd.f32 %v2415, %v2416
      %v2418 = vsel %vm2286, %v1887, 0.0
      %v2419 = vadd.f32 %v2417, %v2418
      %v2420 = vrot.slane %v2419, 4
      %v2421 = vadd.f32 %v2419, %v2420
      %v2422 = vrot.slane %v2421, 2
      %v2423 = vadd.f32 %v2421, %v2422
      %v2424 = vrot.slane %v2423, 1
      %v2425 = vadd.f32 %v2423, %v2424
      %v2426 = vadd.f32 %v2356, %v2425
      %v2427 = vsel %vm2286, %v1963, 0.0
      %v2428 = vsel %vm2286, %v1966, 0.0
      %v2429 = vadd.f32 %v2427, %v2428
      %v2430 = vsel %vm2286, %v1971, 0.0
      %v2431 = vadd.f32 %v2429, %v2430
      %v2432 = vsel %vm2286, %v1974, 0.0
      %v2433 = vadd.f32 %v2431, %v2432
      %v2434 = vsel %vm2286, %v1979, 0.0
      %v2435 = vadd.f32 %v2433, %v2434
      %v2436 = vsel %vm2286, %v1982, 0.0
      %v2437 = vadd.f32 %v2435, %v2436
      %v2438 = vsel %vm2286, %v1987, 0.0
      %v2439 = vadd.f32 %v2437, %v2438
      %v2440 = vsel %vm2286, %v1990, 0.0
      %v2441 = vadd.f32 %v2439, %v2440
      %v2442 = vsel %vm2286, %v1995, 0.0
      %v2443 = vadd.f32 %v2441, %v2442
      %v2444 = vsel %vm2286, %v1998, 0.0
      %v2445 = vadd.f32 %v2443, %v2444
      %v2446 = vsel %vm2286, %v2003, 0.0
      %v2447 = vadd.f32 %v2445, %v2446
      %v2448 = vsel %vm2286, %v2006, 0.0
      %v2449 = vadd.f32 %v2447, %v2448
      %v2450 = vsel %vm2286, %v2011, 0.0
      %v2451 = vadd.f32 %v2449, %v2450
      %v2452 = vsel %vm2286, %v2014, 0.0
      %v2453 = vadd.f32 %v2451, %v2452
      %v2454 = vsel %vm2286, %v2019, 0.0
      %v2455 = vadd.f32 %v2453, %v2454
      %v2456 = vsel %vm2286, %v2022, 0.0
      %v2457 = vadd.f32 %v2455, %v2456
      %v2458 = vsel %vm2286, %v2027, 0.0
      %v2459 = vadd.f32 %v2457, %v2458
      %v2460 = vsel %vm2286, %v2030, 0.0
      %v2461 = vadd.f32 %v2459, %v2460
      %v2462 = vsel %vm2286, %v2035, 0.0
      %v2463 = vadd.f32 %v2461, %v2462
      %v2464 = vsel %vm2286, %v2038, 0.0
      %v2465 = vadd.f32 %v2463, %v2464
      %v2466 = vsel %vm2286, %v2043, 0.0
      %v2467 = vadd.f32 %v2465, %v2466
      %v2468 = vsel %vm2286, %v2046, 0.0
      %v2469 = vadd.f32 %v2467, %v2468
      %v2470 = vsel %vm2286, %v2051, 0.0
      %v2471 = vadd.f32 %v2469, %v2470
      %v2472 = vsel %vm2286, %v2054, 0.0
      %v2473 = vadd.f32 %v2471, %v2472
      %v2474 = vsel %vm2286, %v2059, 0.0
      %v2475 = vadd.f32 %v2473, %v2474
      %v2476 = vsel %vm2286, %v2062, 0.0
      %v2477 = vadd.f32 %v2475, %v2476
      %v2478 = vsel %vm2286, %v2067, 0.0
      %v2479 = vadd.f32 %v2477, %v2478
      %v2480 = vsel %vm2286, %v2070, 0.0
      %v2481 = vadd.f32 %v2479, %v2480
      %v2482 = vsel %vm2286, %v2075, 0.0
      %v2483 = vadd.f32 %v2481, %v2482
      %v2484 = vsel %vm2286, %v2078, 0.0
      %v2485 = vadd.f32 %v2483, %v2484
      %v2486 = vsel %vm2286, %v2083, 0.0
      %v2487 = vadd.f32 %v2485, %v2486
      %v2488 = vsel %vm2286, %v2086, 0.0
      %v2489 = vadd.f32 %v2487, %v2488
      %v2490 = vrot.slane %v2489, 4
      %v2491 = vadd.f32 %v2489, %v2490
      %v2492 = vrot.slane %v2491, 2
      %v2493 = vadd.f32 %v2491, %v2492
      %v2494 = vrot.slane %v2493, 1
      %v2495 = vadd.f32 %v2493, %v2494
      %v2496 = vadd.f32 %v2426, %v2495
      %v2497 = vsel %vm2286, %v2159, 0.0
      %v2498 = vsel %vm2286, %v2162, 0.0
      %v2499 = vadd.f32 %v2497, %v2498
      %v2500 = vsel %vm2286, %v2167, 0.0
      %v2501 = vadd.f32 %v2499, %v2500
      %v2502 = vsel %vm2286, %v2170, 0.0
      %v2503 = vadd.f32 %v2501, %v2502
      %v2504 = vsel %vm2286, %v2175, 0.0
      %v2505 = vadd.f32 %v2503, %v2504
      %v2506 = vsel %vm2286, %v2178, 0.0
      %v2507 = vadd.f32 %v2505, %v2506
      %v2508 = vsel %vm2286, %v2183, 0.0
      %v2509 = vadd.f32 %v2507, %v2508
      %v2510 = vsel %vm2286, %v2186, 0.0
      %v2511 = vadd.f32 %v2509, %v2510
      %v2512 = vsel %vm2286, %v2191, 0.0
      %v2513 = vadd.f32 %v2511, %v2512
      %v2514 = vsel %vm2286, %v2194, 0.0
      %v2515 = vadd.f32 %v2513, %v2514
      %v2516 = vsel %vm2286, %v2199, 0.0
      %v2517 = vadd.f32 %v2515, %v2516
      %v2518 = vsel %vm2286, %v2202, 0.0
      %v2519 = vadd.f32 %v2517, %v2518
      %v2520 = vsel %vm2286, %v2207, 0.0
      %v2521 = vadd.f32 %v2519, %v2520
      %v2522 = vsel %vm2286, %v2210, 0.0
      %v2523 = vadd.f32 %v2521, %v2522
      %v2524 = vsel %vm2286, %v2215, 0.0
      %v2525 = vadd.f32 %v2523, %v2524
      %v2526 = vsel %vm2286, %v2218, 0.0
      %v2527 = vadd.f32 %v2525, %v2526
      %v2528 = vsel %vm2286, %v2223, 0.0
      %v2529 = vadd.f32 %v2527, %v2528
      %v2530 = vsel %vm2286, %v2226, 0.0
      %v2531 = vadd.f32 %v2529, %v2530
      %v2532 = vsel %vm2286, %v2231, 0.0
      %v2533 = vadd.f32 %v2531, %v2532
      %v2534 = vsel %vm2286, %v2234, 0.0
      %v2535 = vadd.f32 %v2533, %v2534
      %v2536 = vsel %vm2286, %v2239, 0.0
      %v2537 = vadd.f32 %v2535, %v2536
      %v2538 = vsel %vm2286, %v2242, 0.0
      %v2539 = vadd.f32 %v2537, %v2538
      %v2540 = vsel %vm2286, %v2247, 0.0
      %v2541 = vadd.f32 %v2539, %v2540
      %v2542 = vsel %vm2286, %v2250, 0.0
      %v2543 = vadd.f32 %v2541, %v2542
      %v2544 = vsel %vm2286, %v2255, 0.0
      %v2545 = vadd.f32 %v2543, %v2544
      %v2546 = vsel %vm2286, %v2258, 0.0
      %v2547 = vadd.f32 %v2545, %v2546
      %v2548 = vsel %vm2286, %v2263, 0.0
      %v2549 = vadd.f32 %v2547, %v2548
      %v2550 = vsel %vm2286, %v2266, 0.0
      %v2551 = vadd.f32 %v2549, %v2550
      %v2552 = vsel %vm2286, %v2271, 0.0
      %v2553 = vadd.f32 %v2551, %v2552
      %v2554 = vsel %vm2286, %v2274, 0.0
      %v2555 = vadd.f32 %v2553, %v2554
      %v2556 = vsel %vm2286, %v2279, 0.0
      %v2557 = vadd.f32 %v2555, %v2556
      %v2558 = vsel %vm2286, %v2282, 0.0
      %v2559 = vadd.f32 %v2557, %v2558
      %v2560 = vrot.slane %v2559, 4
      %v2561 = vadd.f32 %v2559, %v2560
      %v2562 = vrot.slane %v2561, 2
      %v2563 = vadd.f32 %v2561, %v2562
      %v2564 = vrot.slane %v2563, 1
      %v2565 = vadd.f32 %v2563, %v2564
      %v2566 = vadd.f32 %v2496, %v2565
      %v2567 = vmul.f32 %v1295, %v1295
      %v2568 = vmul.f32 %v1298, %v1298
      %v2569 = vmul.f32 %v1303, %v1303
      %v2570 = vmul.f32 %v1306, %v1306
      %v2571 = vmul.f32 %v1311, %v1311
      %v2572 = vmul.f32 %v1314, %v1314
      %v2573 = vmul.f32 %v1319, %v1319
      %v2574 = vmul.f32 %v1322, %v1322
      %v2575 = vmul.f32 %v1327, %v1327
      %v2576 = vmul.f32 %v1330, %v1330
      %v2577 = vmul.f32 %v1335, %v1335
      %v2578 = vmul.f32 %v1338, %v1338
      %v2579 = vmul.f32 %v1343, %v1343
      %v2580 = vmul.f32 %v1346, %v1346
      %v2581 = vmul.f32 %v1351, %v1351
      %v2582 = vmul.f32 %v1354, %v1354
      %v2583 = vmul.f32 %v1359, %v1359
      %v2584 = vmul.f32 %v1362, %v1362
      %v2585 = vmul.f32 %v1367, %v1367
      %v2586 = vmul.f32 %v1370, %v1370
      %v2587 = vmul.f32 %v1375, %v1375
      %v2588 = vmul.f32 %v1378, %v1378
      %v2589 = vmul.f32 %v1383, %v1383
      %v2590 = vmul.f32 %v1386, %v1386
      %v2591 = vmul.f32 %v1391, %v1391
      %v2592 = vmul.f32 %v1394, %v1394
      %v2593 = vmul.f32 %v1399, %v1399
      %v2594 = vmul.f32 %v1402, %v1402
      %v2595 = vmul.f32 %v1407, %v1407
      %v2596 = vmul.f32 %v1410, %v1410
      %v2597 = vmul.f32 %v1415, %v1415
      %v2598 = vmul.f32 %v1418, %v1418
      %v2599 = vsel %vm2286, %v2567, 0.0
      %v2600 = vsel %vm2286, %v2568, 0.0
      %v2601 = vadd.f32 %v2599, %v2600
      %v2602 = vsel %vm2286, %v2569, 0.0
      %v2603 = vadd.f32 %v2601, %v2602
      %v2604 = vsel %vm2286, %v2570, 0.0
      %v2605 = vadd.f32 %v2603, %v2604
      %v2606 = vsel %vm2286, %v2571, 0.0
      %v2607 = vadd.f32 %v2605, %v2606
      %v2608 = vsel %vm2286, %v2572, 0.0
      %v2609 = vadd.f32 %v2607, %v2608
      %v2610 = vsel %vm2286, %v2573, 0.0
      %v2611 = vadd.f32 %v2609, %v2610
      %v2612 = vsel %vm2286, %v2574, 0.0
      %v2613 = vadd.f32 %v2611, %v2612
      %v2614 = vsel %vm2286, %v2575, 0.0
      %v2615 = vadd.f32 %v2613, %v2614
      %v2616 = vsel %vm2286, %v2576, 0.0
      %v2617 = vadd.f32 %v2615, %v2616
      %v2618 = vsel %vm2286, %v2577, 0.0
      %v2619 = vadd.f32 %v2617, %v2618
      %v2620 = vsel %vm2286, %v2578, 0.0
      %v2621 = vadd.f32 %v2619, %v2620
      %v2622 = vsel %vm2286, %v2579, 0.0
      %v2623 = vadd.f32 %v2621, %v2622
      %v2624 = vsel %vm2286, %v2580, 0.0
      %v2625 = vadd.f32 %v2623, %v2624
      %v2626 = vsel %vm2286, %v2581, 0.0
      %v2627 = vadd.f32 %v2625, %v2626
      %v2628 = vsel %vm2286, %v2582, 0.0
      %v2629 = vadd.f32 %v2627, %v2628
      %v2630 = vsel %vm2286, %v2583, 0.0
      %v2631 = vadd.f32 %v2629, %v2630
      %v2632 = vsel %vm2286, %v2584, 0.0
      %v2633 = vadd.f32 %v2631, %v2632
      %v2634 = vsel %vm2286, %v2585, 0.0
      %v2635 = vadd.f32 %v2633, %v2634
      %v2636 = vsel %vm2286, %v2586, 0.0
      %v2637 = vadd.f32 %v2635, %v2636
      %v2638 = vsel %vm2286, %v2587, 0.0
      %v2639 = vadd.f32 %v2637, %v2638
      %v2640 = vsel %vm2286, %v2588, 0.0
      %v2641 = vadd.f32 %v2639, %v2640
      %v2642 = vsel %vm2286, %v2589, 0.0
      %v2643 = vadd.f32 %v2641, %v2642
      %v2644 = vsel %vm2286, %v2590, 0.0
      %v2645 = vadd.f32 %v2643, %v2644
      %v2646 = vsel %vm2286, %v2591, 0.0
      %v2647 = vadd.f32 %v2645, %v2646
      %v2648 = vsel %vm2286, %v2592, 0.0
      %v2649 = vadd.f32 %v2647, %v2648
      %v2650 = vsel %vm2286, %v2593, 0.0
      %v2651 = vadd.f32 %v2649, %v2650
      %v2652 = vsel %vm2286, %v2594, 0.0
      %v2653 = vadd.f32 %v2651, %v2652
      %v2654 = vsel %vm2286, %v2595, 0.0
      %v2655 = vadd.f32 %v2653, %v2654
      %v2656 = vsel %vm2286, %v2596, 0.0
      %v2657 = vadd.f32 %v2655, %v2656
      %v2658 = vsel %vm2286, %v2597, 0.0
      %v2659 = vadd.f32 %v2657, %v2658
      %v2660 = vsel %vm2286, %v2598, 0.0
      %v2661 = vadd.f32 %v2659, %v2660
      %v2662 = vrot.slane %v2661, 4
      %v2663 = vadd.f32 %v2661, %v2662
      %v2664 = vrot.slane %v2663, 2
      %v2665 = vadd.f32 %v2663, %v2664
      %v2666 = vrot.slane %v2665, 1
      %v2667 = vadd.f32 %v2665, %v2666
      %v2668 = vadd.f32 %v2667, 0.0
      %v2669 = vmul.f32 %v1764, %v1764
      %v2670 = vmul.f32 %v1767, %v1767
      %v2671 = vmul.f32 %v1772, %v1772
      %v2672 = vmul.f32 %v1775, %v1775
      %v2673 = vmul.f32 %v1780, %v1780
      %v2674 = vmul.f32 %v1783, %v1783
      %v2675 = vmul.f32 %v1788, %v1788
      %v2676 = vmul.f32 %v1791, %v1791
      %v2677 = vmul.f32 %v1796, %v1796
      %v2678 = vmul.f32 %v1799, %v1799
      %v2679 = vmul.f32 %v1804, %v1804
      %v2680 = vmul.f32 %v1807, %v1807
      %v2681 = vmul.f32 %v1812, %v1812
      %v2682 = vmul.f32 %v1815, %v1815
      %v2683 = vmul.f32 %v1820, %v1820
      %v2684 = vmul.f32 %v1823, %v1823
      %v2685 = vmul.f32 %v1828, %v1828
      %v2686 = vmul.f32 %v1831, %v1831
      %v2687 = vmul.f32 %v1836, %v1836
      %v2688 = vmul.f32 %v1839, %v1839
      %v2689 = vmul.f32 %v1844, %v1844
      %v2690 = vmul.f32 %v1847, %v1847
      %v2691 = vmul.f32 %v1852, %v1852
      %v2692 = vmul.f32 %v1855, %v1855
      %v2693 = vmul.f32 %v1860, %v1860
      %v2694 = vmul.f32 %v1863, %v1863
      %v2695 = vmul.f32 %v1868, %v1868
      %v2696 = vmul.f32 %v1871, %v1871
      %v2697 = vmul.f32 %v1876, %v1876
      %v2698 = vmul.f32 %v1879, %v1879
      %v2699 = vmul.f32 %v1884, %v1884
      %v2700 = vmul.f32 %v1887, %v1887
      %v2701 = vsel %vm2286, %v2669, 0.0
      %v2702 = vsel %vm2286, %v2670, 0.0
      %v2703 = vadd.f32 %v2701, %v2702
      %v2704 = vsel %vm2286, %v2671, 0.0
      %v2705 = vadd.f32 %v2703, %v2704
      %v2706 = vsel %vm2286, %v2672, 0.0
      %v2707 = vadd.f32 %v2705, %v2706
      %v2708 = vsel %vm2286, %v2673, 0.0
      %v2709 = vadd.f32 %v2707, %v2708
      %v2710 = vsel %vm2286, %v2674, 0.0
      %v2711 = vadd.f32 %v2709, %v2710
      %v2712 = vsel %vm2286, %v2675, 0.0
      %v2713 = vadd.f32 %v2711, %v2712
      %v2714 = vsel %vm2286, %v2676, 0.0
      %v2715 = vadd.f32 %v2713, %v2714
      %v2716 = vsel %vm2286, %v2677, 0.0
      %v2717 = vadd.f32 %v2715, %v2716
      %v2718 = vsel %vm2286, %v2678, 0.0
      %v2719 = vadd.f32 %v2717, %v2718
      %v2720 = vsel %vm2286, %v2679, 0.0
      %v2721 = vadd.f32 %v2719, %v2720
      %v2722 = vsel %vm2286, %v2680, 0.0
      %v2723 = vadd.f32 %v2721, %v2722
      %v2724 = vsel %vm2286, %v2681, 0.0
      %v2725 = vadd.f32 %v2723, %v2724
      %v2726 = vsel %vm2286, %v2682, 0.0
      %v2727 = vadd.f32 %v2725, %v2726
      %v2728 = vsel %vm2286, %v2683, 0.0
      %v2729 = vadd.f32 %v2727, %v2728
      %v2730 = vsel %vm2286, %v2684, 0.0
      %v2731 = vadd.f32 %v2729, %v2730
      %v2732 = vsel %vm2286, %v2685, 0.0
      %v2733 = vadd.f32 %v2731, %v2732
      %v2734 = vsel %vm2286, %v2686, 0.0
      %v2735 = vadd.f32 %v2733, %v2734
      %v2736 = vsel %vm2286, %v2687, 0.0
      %v2737 = vadd.f32 %v2735, %v2736
      %v2738 = vsel %vm2286, %v2688, 0.0
      %v2739 = vadd.f32 %v2737, %v2738
      %v2740 = vsel %vm2286, %v2689, 0.0
      %v2741 = vadd.f32 %v2739, %v2740
      %v2742 = vsel %vm2286, %v2690, 0.0
      %v2743 = vadd.f32 %v2741, %v2742
      %v2744 = vsel %vm2286, %v2691, 0.0
      %v2745 = vadd.f32 %v2743, %v2744
      %v2746 = vsel %vm2286, %v2692, 0.0
      %v2747 = vadd.f32 %v2745, %v2746
      %v2748 = vsel %vm2286, %v2693, 0.0
      %v2749 = vadd.f32 %v2747, %v2748
      %v2750 = vsel %vm2286, %v2694, 0.0
      %v2751 = vadd.f32 %v2749, %v2750
      %v2752 = vsel %vm2286, %v2695, 0.0
      %v2753 = vadd.f32 %v2751, %v2752
      %v2754 = vsel %vm2286, %v2696, 0.0
      %v2755 = vadd.f32 %v2753, %v2754
      %v2756 = vsel %vm2286, %v2697, 0.0
      %v2757 = vadd.f32 %v2755, %v2756
      %v2758 = vsel %vm2286, %v2698, 0.0
      %v2759 = vadd.f32 %v2757, %v2758
      %v2760 = vsel %vm2286, %v2699, 0.0
      %v2761 = vadd.f32 %v2759, %v2760
      %v2762 = vsel %vm2286, %v2700, 0.0
      %v2763 = vadd.f32 %v2761, %v2762
      %v2764 = vrot.slane %v2763, 4
      %v2765 = vadd.f32 %v2763, %v2764
      %v2766 = vrot.slane %v2765, 2
      %v2767 = vadd.f32 %v2765, %v2766
      %v2768 = vrot.slane %v2767, 1
      %v2769 = vadd.f32 %v2767, %v2768
      %v2770 = vadd.f32 %v2668, %v2769
      %v2771 = vmul.f32 %v1963, %v1963
      %v2772 = vmul.f32 %v1966, %v1966
      %v2773 = vmul.f32 %v1971, %v1971
      %v2774 = vmul.f32 %v1974, %v1974
      %v2775 = vmul.f32 %v1979, %v1979
      %v2776 = vmul.f32 %v1982, %v1982
      %v2777 = vmul.f32 %v1987, %v1987
      %v2778 = vmul.f32 %v1990, %v1990
      %v2779 = vmul.f32 %v1995, %v1995
      %v2780 = vmul.f32 %v1998, %v1998
      %v2781 = vmul.f32 %v2003, %v2003
      %v2782 = vmul.f32 %v2006, %v2006
      %v2783 = vmul.f32 %v2011, %v2011
      %v2784 = vmul.f32 %v2014, %v2014
      %v2785 = vmul.f32 %v2019, %v2019
      %v2786 = vmul.f32 %v2022, %v2022
      %v2787 = vmul.f32 %v2027, %v2027
      %v2788 = vmul.f32 %v2030, %v2030
      %v2789 = vmul.f32 %v2035, %v2035
      %v2790 = vmul.f32 %v2038, %v2038
      %v2791 = vmul.f32 %v2043, %v2043
      %v2792 = vmul.f32 %v2046, %v2046
      %v2793 = vmul.f32 %v2051, %v2051
      %v2794 = vmul.f32 %v2054, %v2054
      %v2795 = vmul.f32 %v2059, %v2059
      %v2796 = vmul.f32 %v2062, %v2062
      %v2797 = vmul.f32 %v2067, %v2067
      %v2798 = vmul.f32 %v2070, %v2070
      %v2799 = vmul.f32 %v2075, %v2075
      %v2800 = vmul.f32 %v2078, %v2078
      %v2801 = vmul.f32 %v2083, %v2083
      %v2802 = vmul.f32 %v2086, %v2086
      %v2803 = vsel %vm2286, %v2771, 0.0
      %v2804 = vsel %vm2286, %v2772, 0.0
      %v2805 = vadd.f32 %v2803, %v2804
      %v2806 = vsel %vm2286, %v2773, 0.0
      %v2807 = vadd.f32 %v2805, %v2806
      %v2808 = vsel %vm2286, %v2774, 0.0
      %v2809 = vadd.f32 %v2807, %v2808
      %v2810 = vsel %vm2286, %v2775, 0.0
      %v2811 = vadd.f32 %v2809, %v2810
      %v2812 = vsel %vm2286, %v2776, 0.0
      %v2813 = vadd.f32 %v2811, %v2812
      %v2814 = vsel %vm2286, %v2777, 0.0
      %v2815 = vadd.f32 %v2813, %v2814
      %v2816 = vsel %vm2286, %v2778, 0.0
      %v2817 = vadd.f32 %v2815, %v2816
      %v2818 = vsel %vm2286, %v2779, 0.0
      %v2819 = vadd.f32 %v2817, %v2818
      %v2820 = vsel %vm2286, %v2780, 0.0
      %v2821 = vadd.f32 %v2819, %v2820
      %v2822 = vsel %vm2286, %v2781, 0.0
      %v2823 = vadd.f32 %v2821, %v2822
      %v2824 = vsel %vm2286, %v2782, 0.0
      %v2825 = vadd.f32 %v2823, %v2824
      %v2826 = vsel %vm2286, %v2783, 0.0
      %v2827 = vadd.f32 %v2825, %v2826
      %v2828 = vsel %vm2286, %v2784, 0.0
      %v2829 = vadd.f32 %v2827, %v2828
      %v2830 = vsel %vm2286, %v2785, 0.0
      %v2831 = vadd.f32 %v2829, %v2830
      %v2832 = vsel %vm2286, %v2786, 0.0
      %v2833 = vadd.f32 %v2831, %v2832
      %v2834 = vsel %vm2286, %v2787, 0.0
      %v2835 = vadd.f32 %v2833, %v2834
      %v2836 = vsel %vm2286, %v2788, 0.0
      %v2837 = vadd.f32 %v2835, %v2836
      %v2838 = vsel %vm2286, %v2789, 0.0
      %v2839 = vadd.f32 %v2837, %v2838
      %v2840 = vsel %vm2286, %v2790, 0.0
      %v2841 = vadd.f32 %v2839, %v2840
      %v2842 = vsel %vm2286, %v2791, 0.0
      %v2843 = vadd.f32 %v2841, %v2842
      %v2844 = vsel %vm2286, %v2792, 0.0
      %v2845 = vadd.f32 %v2843, %v2844
      %v2846 = vsel %vm2286, %v2793, 0.0
      %v2847 = vadd.f32 %v2845, %v2846
      %v2848 = vsel %vm2286, %v2794, 0.0
      %v2849 = vadd.f32 %v2847, %v2848
      %v2850 = vsel %vm2286, %v2795, 0.0
      %v2851 = vadd.f32 %v2849, %v2850
      %v2852 = vsel %vm2286, %v2796, 0.0
      %v2853 = vadd.f32 %v2851, %v2852
      %v2854 = vsel %vm2286, %v2797, 0.0
      %v2855 = vadd.f32 %v2853, %v2854
      %v2856 = vsel %vm2286, %v2798, 0.0
      %v2857 = vadd.f32 %v2855, %v2856
      %v2858 = vsel %vm2286, %v2799, 0.0
      %v2859 = vadd.f32 %v2857, %v2858
      %v2860 = vsel %vm2286, %v2800, 0.0
      %v2861 = vadd.f32 %v2859, %v2860
      %v2862 = vsel %vm2286, %v2801, 0.0
      %v2863 = vadd.f32 %v2861, %v2862
      %v2864 = vsel %vm2286, %v2802, 0.0
      %v2865 = vadd.f32 %v2863, %v2864
      %v2866 = vrot.slane %v2865, 4
      %v2867 = vadd.f32 %v2865, %v2866
      %v2868 = vrot.slane %v2867, 2
      %v2869 = vadd.f32 %v2867, %v2868
      %v2870 = vrot.slane %v2869, 1
      %v2871 = vadd.f32 %v2869, %v2870
      %v2872 = vadd.f32 %v2770, %v2871
      %v2873 = vmul.f32 %v2159, %v2159
      %v2874 = vmul.f32 %v2162, %v2162
      %v2875 = vmul.f32 %v2167, %v2167
      %v2876 = vmul.f32 %v2170, %v2170
      %v2877 = vmul.f32 %v2175, %v2175
      %v2878 = vmul.f32 %v2178, %v2178
      %v2879 = vmul.f32 %v2183, %v2183
      %v2880 = vmul.f32 %v2186, %v2186
      %v2881 = vmul.f32 %v2191, %v2191
      %v2882 = vmul.f32 %v2194, %v2194
      %v2883 = vmul.f32 %v2199, %v2199
      %v2884 = vmul.f32 %v2202, %v2202
      %v2885 = vmul.f32 %v2207, %v2207
      %v2886 = vmul.f32 %v2210, %v2210
      %v2887 = vmul.f32 %v2215, %v2215
      %v2888 = vmul.f32 %v2218, %v2218
      %v2889 = vmul.f32 %v2223, %v2223
      %v2890 = vmul.f32 %v2226, %v2226
      %v2891 = vmul.f32 %v2231, %v2231
      %v2892 = vmul.f32 %v2234, %v2234
      %v2893 = vmul.f32 %v2239, %v2239
      %v2894 = vmul.f32 %v2242, %v2242
      %v2895 = vmul.f32 %v2247, %v2247
      %v2896 = vmul.f32 %v2250, %v2250
      %v2897 = vmul.f32 %v2255, %v2255
      %v2898 = vmul.f32 %v2258, %v2258
      %v2899 = vmul.f32 %v2263, %v2263
      %v2900 = vmul.f32 %v2266, %v2266
      %v2901 = vmul.f32 %v2271, %v2271
      %v2902 = vmul.f32 %v2274, %v2274
      %v2903 = vmul.f32 %v2279, %v2279
      %v2904 = vmul.f32 %v2282, %v2282
      %v2905 = vsel %vm2286, %v2873, 0.0
      %v2906 = vsel %vm2286, %v2874, 0.0
      %v2907 = vadd.f32 %v2905, %v2906
      %v2908 = vsel %vm2286, %v2875, 0.0
      %v2909 = vadd.f32 %v2907, %v2908
      %v2910 = vsel %vm2286, %v2876, 0.0
      %v2911 = vadd.f32 %v2909, %v2910
      %v2912 = vsel %vm2286, %v2877, 0.0
      %v2913 = vadd.f32 %v2911, %v2912
      %v2914 = vsel %vm2286, %v2878, 0.0
      %v2915 = vadd.f32 %v2913, %v2914
      %v2916 = vsel %vm2286, %v2879, 0.0
      %v2917 = vadd.f32 %v2915, %v2916
      %v2918 = vsel %vm2286, %v2880, 0.0
      %v2919 = vadd.f32 %v2917, %v2918
      %v2920 = vsel %vm2286, %v2881, 0.0
      %v2921 = vadd.f32 %v2919, %v2920
      %v2922 = vsel %vm2286, %v2882, 0.0
      %v2923 = vadd.f32 %v2921, %v2922
      %v2924 = vsel %vm2286, %v2883, 0.0
      %v2925 = vadd.f32 %v2923, %v2924
      %v2926 = vsel %vm2286, %v2884, 0.0
      %v2927 = vadd.f32 %v2925, %v2926
      %v2928 = vsel %vm2286, %v2885, 0.0
      %v2929 = vadd.f32 %v2927, %v2928
      %v2930 = vsel %vm2286, %v2886, 0.0
      %v2931 = vadd.f32 %v2929, %v2930
      %v2932 = vsel %vm2286, %v2887, 0.0
      %v2933 = vadd.f32 %v2931, %v2932
      %v2934 = vsel %vm2286, %v2888, 0.0
      %v2935 = vadd.f32 %v2933, %v2934
      %v2936 = vsel %vm2286, %v2889, 0.0
      %v2937 = vadd.f32 %v2935, %v2936
      %v2938 = vsel %vm2286, %v2890, 0.0
      %v2939 = vadd.f32 %v2937, %v2938
      %v2940 = vsel %vm2286, %v2891, 0.0
      %v2941 = vadd.f32 %v2939, %v2940
      %v2942 = vsel %vm2286, %v2892, 0.0
      %v2943 = vadd.f32 %v2941, %v2942
      %v2944 = vsel %vm2286, %v2893, 0.0
      %v2945 = vadd.f32 %v2943, %v2944
      %v2946 = vsel %vm2286, %v2894, 0.0
      %v2947 = vadd.f32 %v2945, %v2946
      %v2948 = vsel %vm2286, %v2895, 0.0
      %v2949 = vadd.f32 %v2947, %v2948
      %v2950 = vsel %vm2286, %v2896, 0.0
      %v2951 = vadd.f32 %v2949, %v2950
      %v2952 = vsel %vm2286, %v2897, 0.0
      %v2953 = vadd.f32 %v2951, %v2952
      %v2954 = vsel %vm2286, %v2898, 0.0
      %v2955 = vadd.f32 %v2953, %v2954
      %v2956 = vsel %vm2286, %v2899, 0.0
      %v2957 = vadd.f32 %v2955, %v2956
      %v2958 = vsel %vm2286, %v2900, 0.0
      %v2959 = vadd.f32 %v2957, %v2958
      %v2960 = vsel %vm2286, %v2901, 0.0
      %v2961 = vadd.f32 %v2959, %v2960
      %v2962 = vsel %vm2286, %v2902, 0.0
      %v2963 = vadd.f32 %v2961, %v2962
      %v2964 = vsel %vm2286, %v2903, 0.0
      %v2965 = vadd.f32 %v2963, %v2964
      %v2966 = vsel %vm2286, %v2904, 0.0
      %v2967 = vadd.f32 %v2965, %v2966
      %v2968 = vrot.slane %v2967, 4
      %v2969 = vadd.f32 %v2967, %v2968
      %v2970 = vrot.slane %v2969, 2
      %v2971 = vadd.f32 %v2969, %v2970
      %v2972 = vrot.slane %v2971, 1
      %v2973 = vadd.f32 %v2971, %v2972
      %v2974 = vadd.f32 %v2872, %v2973
      %v2975 = vmul.f32 %v2566, 0.0009765625
      %v2976 = vmul.f32 %v2974, 0.0009765625
      %v2977 = vmul.f32 %v2975, %v2975
      %v2978 = vsub.f32 %v2976, %v2977
      %v2979 = vmax.f32 %v2978, 0.0
      %v2980 = vadd.f32 %v2979, 1e-05
      %v2981 = vrsqrt.pop %v2980
      %v2982 = vmul.f32 %v2285, %v2981
      %v2983 = vmul.f32 %v2975, %v2982
      %v2985 = vrot.slane %v2983, 7
      %v2987 = vsub.f32 %v2285, %v2985
      %v2988 = vlaneseq
      %v2989 = vshrl.u32 %v2988, 7
      %v2990 = vsub.s32 1, %v2989
      %v2991 = vrot.slane %v2982, %v2990
      %v2992 = vmul.f32 %v1295, %v2991
      %v2993 = vmul.f32 %v1298, %v2991
      %v2994 = vmul.f32 %v1303, %v2991
      %v2995 = vmul.f32 %v1306, %v2991
      %v2996 = vmul.f32 %v1311, %v2991
      %v2997 = vmul.f32 %v1314, %v2991
      %v2998 = vmul.f32 %v1319, %v2991
      %v2999 = vmul.f32 %v1322, %v2991
      %v3000 = vmul.f32 %v1327, %v2991
      %v3001 = vmul.f32 %v1330, %v2991
      %v3002 = vmul.f32 %v1335, %v2991
      %v3003 = vmul.f32 %v1338, %v2991
      %v3004 = vmul.f32 %v1343, %v2991
      %v3005 = vmul.f32 %v1346, %v2991
      %v3006 = vmul.f32 %v1351, %v2991
      %v3007 = vmul.f32 %v1354, %v2991
      %v3008 = vmul.f32 %v1359, %v2991
      %v3009 = vmul.f32 %v1362, %v2991
      %v3010 = vmul.f32 %v1367, %v2991
      %v3011 = vmul.f32 %v1370, %v2991
      %v3012 = vmul.f32 %v1375, %v2991
      %v3013 = vmul.f32 %v1378, %v2991
      %v3014 = vmul.f32 %v1383, %v2991
      %v3015 = vmul.f32 %v1386, %v2991
      %v3016 = vmul.f32 %v1391, %v2991
      %v3017 = vmul.f32 %v1394, %v2991
      %v3018 = vmul.f32 %v1399, %v2991
      %v3019 = vmul.f32 %v1402, %v2991
      %v3020 = vmul.f32 %v1407, %v2991
      %v3021 = vmul.f32 %v1410, %v2991
      %v3022 = vmul.f32 %v1415, %v2991
      %v3023 = vmul.f32 %v1418, %v2991
      %v3024 = vlaneseq
      %v3025 = vshrl.u32 %v3024, 7
      %v3026 = vsub.s32 2, %v3025
      %v3027 = vrot.slane %v2987, %v3026
      %v3028 = vadd.f32 %v2992, %v3027
      %v3029 = vadd.f32 %v2993, %v3027
      %v3030 = vadd.f32 %v2994, %v3027
      %v3031 = vadd.f32 %v2995, %v3027
      %v3032 = vadd.f32 %v2996, %v3027
      %v3033 = vadd.f32 %v2997, %v3027
      %v3034 = vadd.f32 %v2998, %v3027
      %v3035 = vadd.f32 %v2999, %v3027
      %v3036 = vadd.f32 %v3000, %v3027
      %v3037 = vadd.f32 %v3001, %v3027
      %v3038 = vadd.f32 %v3002, %v3027
      %v3039 = vadd.f32 %v3003, %v3027
      %v3040 = vadd.f32 %v3004, %v3027
      %v3041 = vadd.f32 %v3005, %v3027
      %v3042 = vadd.f32 %v3006, %v3027
      %v3043 = vadd.f32 %v3007, %v3027
      %v3044 = vadd.f32 %v3008, %v3027
      %v3045 = vadd.f32 %v3009, %v3027
      %v3046 = vadd.f32 %v3010, %v3027
      %v3047 = vadd.f32 %v3011, %v3027
      %v3048 = vadd.f32 %v3012, %v3027
      %v3049 = vadd.f32 %v3013, %v3027
      %v3050 = vadd.f32 %v3014, %v3027
      %v3051 = vadd.f32 %v3015, %v3027
      %v3052 = vadd.f32 %v3016, %v3027
      %v3053 = vadd.f32 %v3017, %v3027
      %v3054 = vadd.f32 %v3018, %v3027
      %v3055 = vadd.f32 %v3019, %v3027
      %v3056 = vadd.f32 %v3020, %v3027
      %v3057 = vadd.f32 %v3021, %v3027
      %v3058 = vadd.f32 %v3022, %v3027
      %v3059 = vadd.f32 %v3023, %v3027
      %v3060 = vmul.f32 %v1764, %v2991
      %v3061 = vmul.f32 %v1767, %v2991
      %v3062 = vmul.f32 %v1772, %v2991
      %v3063 = vmul.f32 %v1775, %v2991
      %v3064 = vmul.f32 %v1780, %v2991
      %v3065 = vmul.f32 %v1783, %v2991
      %v3066 = vmul.f32 %v1788, %v2991
      %v3067 = vmul.f32 %v1791, %v2991
      %v3068 = vmul.f32 %v1796, %v2991
      %v3069 = vmul.f32 %v1799, %v2991
      %v3070 = vmul.f32 %v1804, %v2991
      %v3071 = vmul.f32 %v1807, %v2991
      %v3072 = vmul.f32 %v1812, %v2991
      %v3073 = vmul.f32 %v1815, %v2991
      %v3074 = vmul.f32 %v1820, %v2991
      %v3075 = vmul.f32 %v1823, %v2991
      %v3076 = vmul.f32 %v1828, %v2991
      %v3077 = vmul.f32 %v1831, %v2991
      %v3078 = vmul.f32 %v1836, %v2991
      %v3079 = vmul.f32 %v1839, %v2991
      %v3080 = vmul.f32 %v1844, %v2991
      %v3081 = vmul.f32 %v1847, %v2991
      %v3082 = vmul.f32 %v1852, %v2991
      %v3083 = vmul.f32 %v1855, %v2991
      %v3084 = vmul.f32 %v1860, %v2991
      %v3085 = vmul.f32 %v1863, %v2991
      %v3086 = vmul.f32 %v1868, %v2991
      %v3087 = vmul.f32 %v1871, %v2991
      %v3088 = vmul.f32 %v1876, %v2991
      %v3089 = vmul.f32 %v1879, %v2991
      %v3090 = vmul.f32 %v1884, %v2991
      %v3091 = vmul.f32 %v1887, %v2991
      %v3092 = vadd.f32 %v3060, %v3027
      %v3093 = vadd.f32 %v3061, %v3027
      %v3094 = vadd.f32 %v3062, %v3027
      %v3095 = vadd.f32 %v3063, %v3027
      %v3096 = vadd.f32 %v3064, %v3027
      %v3097 = vadd.f32 %v3065, %v3027
      %v3098 = vadd.f32 %v3066, %v3027
      %v3099 = vadd.f32 %v3067, %v3027
      %v3100 = vadd.f32 %v3068, %v3027
      %v3101 = vadd.f32 %v3069, %v3027
      %v3102 = vadd.f32 %v3070, %v3027
      %v3103 = vadd.f32 %v3071, %v3027
      %v3104 = vadd.f32 %v3072, %v3027
      %v3105 = vadd.f32 %v3073, %v3027
      %v3106 = vadd.f32 %v3074, %v3027
      %v3107 = vadd.f32 %v3075, %v3027
      %v3108 = vadd.f32 %v3076, %v3027
      %v3109 = vadd.f32 %v3077, %v3027
      %v3110 = vadd.f32 %v3078, %v3027
      %v3111 = vadd.f32 %v3079, %v3027
      %v3112 = vadd.f32 %v3080, %v3027
      %v3113 = vadd.f32 %v3081, %v3027
      %v3114 = vadd.f32 %v3082, %v3027
      %v3115 = vadd.f32 %v3083, %v3027
      %v3116 = vadd.f32 %v3084, %v3027
      %v3117 = vadd.f32 %v3085, %v3027
      %v3118 = vadd.f32 %v3086, %v3027
      %v3119 = vadd.f32 %v3087, %v3027
      %v3120 = vadd.f32 %v3088, %v3027
      %v3121 = vadd.f32 %v3089, %v3027
      %v3122 = vadd.f32 %v3090, %v3027
      %v3123 = vadd.f32 %v3091, %v3027
      %v3124 = vmul.f32 %v1963, %v2991
      %v3125 = vmul.f32 %v1966, %v2991
      %v3126 = vmul.f32 %v1971, %v2991
      %v3127 = vmul.f32 %v1974, %v2991
      %v3128 = vmul.f32 %v1979, %v2991
      %v3129 = vmul.f32 %v1982, %v2991
      %v3130 = vmul.f32 %v1987, %v2991
      %v3131 = vmul.f32 %v1990, %v2991
      %v3132 = vmul.f32 %v1995, %v2991
      %v3133 = vmul.f32 %v1998, %v2991
      %v3134 = vmul.f32 %v2003, %v2991
      %v3135 = vmul.f32 %v2006, %v2991
      %v3136 = vmul.f32 %v2011, %v2991
      %v3137 = vmul.f32 %v2014, %v2991
      %v3138 = vmul.f32 %v2019, %v2991
      %v3139 = vmul.f32 %v2022, %v2991
      %v3140 = vmul.f32 %v2027, %v2991
      %v3141 = vmul.f32 %v2030, %v2991
      %v3142 = vmul.f32 %v2035, %v2991
      %v3143 = vmul.f32 %v2038, %v2991
      %v3144 = vmul.f32 %v2043, %v2991
      %v3145 = vmul.f32 %v2046, %v2991
      %v3146 = vmul.f32 %v2051, %v2991
      %v3147 = vmul.f32 %v2054, %v2991
      %v3148 = vmul.f32 %v2059, %v2991
      %v3149 = vmul.f32 %v2062, %v2991
      %v3150 = vmul.f32 %v2067, %v2991
      %v3151 = vmul.f32 %v2070, %v2991
      %v3152 = vmul.f32 %v2075, %v2991
      %v3153 = vmul.f32 %v2078, %v2991
      %v3154 = vmul.f32 %v2083, %v2991
      %v3155 = vmul.f32 %v2086, %v2991
      %v3156 = vadd.f32 %v3124, %v3027
      %v3157 = vadd.f32 %v3125, %v3027
      %v3158 = vadd.f32 %v3126, %v3027
      %v3159 = vadd.f32 %v3127, %v3027
      %v3160 = vadd.f32 %v3128, %v3027
      %v3161 = vadd.f32 %v3129, %v3027
      %v3162 = vadd.f32 %v3130, %v3027
      %v3163 = vadd.f32 %v3131, %v3027
      %v3164 = vadd.f32 %v3132, %v3027
      %v3165 = vadd.f32 %v3133, %v3027
      %v3166 = vadd.f32 %v3134, %v3027
      %v3167 = vadd.f32 %v3135, %v3027
      %v3168 = vadd.f32 %v3136, %v3027
      %v3169 = vadd.f32 %v3137, %v3027
      %v3170 = vadd.f32 %v3138, %v3027
      %v3171 = vadd.f32 %v3139, %v3027
      %v3172 = vadd.f32 %v3140, %v3027
      %v3173 = vadd.f32 %v3141, %v3027
      %v3174 = vadd.f32 %v3142, %v3027
      %v3175 = vadd.f32 %v3143, %v3027
      %v3176 = vadd.f32 %v3144, %v3027
      %v3177 = vadd.f32 %v3145, %v3027
      %v3178 = vadd.f32 %v3146, %v3027
      %v3179 = vadd.f32 %v3147, %v3027
      %v3180 = vadd.f32 %v3148, %v3027
      %v3181 = vadd.f32 %v3149, %v3027
      %v3182 = vadd.f32 %v3150, %v3027
      %v3183 = vadd.f32 %v3151, %v3027
      %v3184 = vadd.f32 %v3152, %v3027
      %v3185 = vadd.f32 %v3153, %v3027
      %v3186 = vadd.f32 %v3154, %v3027
      %v3187 = vadd.f32 %v3155, %v3027
      %v3188 = vmul.f32 %v2159, %v2991
      %v3189 = vmul.f32 %v2162, %v2991
      %v3190 = vmul.f32 %v2167, %v2991
      %v3191 = vmul.f32 %v2170, %v2991
      %v3192 = vmul.f32 %v2175, %v2991
      %v3193 = vmul.f32 %v2178, %v2991
      %v3194 = vmul.f32 %v2183, %v2991
      %v3195 = vmul.f32 %v2186, %v2991
      %v3196 = vmul.f32 %v2191, %v2991
      %v3197 = vmul.f32 %v2194, %v2991
      %v3198 = vmul.f32 %v2199, %v2991
      %v3199 = vmul.f32 %v2202, %v2991
      %v3200 = vmul.f32 %v2207, %v2991
      %v3201 = vmul.f32 %v2210, %v2991
      %v3202 = vmul.f32 %v2215, %v2991
      %v3203 = vmul.f32 %v2218, %v2991
      %v3204 = vmul.f32 %v2223, %v2991
      %v3205 = vmul.f32 %v2226, %v2991
      %v3206 = vmul.f32 %v2231, %v2991
      %v3207 = vmul.f32 %v2234, %v2991
      %v3208 = vmul.f32 %v2239, %v2991
      %v3209 = vmul.f32 %v2242, %v2991
      %v3210 = vmul.f32 %v2247, %v2991
      %v3211 = vmul.f32 %v2250, %v2991
      %v3212 = vmul.f32 %v2255, %v2991
      %v3213 = vmul.f32 %v2258, %v2991
      %v3214 = vmul.f32 %v2263, %v2991
      %v3215 = vmul.f32 %v2266, %v2991
      %v3216 = vmul.f32 %v2271, %v2991
      %v3217 = vmul.f32 %v2274, %v2991
      %v3218 = vmul.f32 %v2279, %v2991
      %v3219 = vmul.f32 %v2282, %v2991
      %v3220 = vadd.f32 %v3188, %v3027
      %v3221 = vadd.f32 %v3189, %v3027
      %v3222 = vadd.f32 %v3190, %v3027
      %v3223 = vadd.f32 %v3191, %v3027
      %v3224 = vadd.f32 %v3192, %v3027
      %v3225 = vadd.f32 %v3193, %v3027
      %v3226 = vadd.f32 %v3194, %v3027
      %v3227 = vadd.f32 %v3195, %v3027
      %v3228 = vadd.f32 %v3196, %v3027
      %v3229 = vadd.f32 %v3197, %v3027
      %v3230 = vadd.f32 %v3198, %v3027
      %v3231 = vadd.f32 %v3199, %v3027
      %v3232 = vadd.f32 %v3200, %v3027
      %v3233 = vadd.f32 %v3201, %v3027
      %v3234 = vadd.f32 %v3202, %v3027
      %v3235 = vadd.f32 %v3203, %v3027
      %v3236 = vadd.f32 %v3204, %v3027
      %v3237 = vadd.f32 %v3205, %v3027
      %v3238 = vadd.f32 %v3206, %v3027
      %v3239 = vadd.f32 %v3207, %v3027
      %v3240 = vadd.f32 %v3208, %v3027
      %v3241 = vadd.f32 %v3209, %v3027
      %v3242 = vadd.f32 %v3210, %v3027
      %v3243 = vadd.f32 %v3211, %v3027
      %v3244 = vadd.f32 %v3212, %v3027
      %v3245 = vadd.f32 %v3213, %v3027
      %v3246 = vadd.f32 %v3214, %v3027
      %v3247 = vadd.f32 %v3215, %v3027
      %v3248 = vadd.f32 %v3216, %v3027
      %v3249 = vadd.f32 %v3217, %v3027
      %v3250 = vadd.f32 %v3218, %v3027
      %v3251 = vadd.f32 %v3219, %v3027
      %3284 = vrot.lane.b32.xlu0 %v3092, 4
      %v3285 = vpop.permute.xlu0 %3284
      %3286 = vrot.lane.b32.xlu0 %v3093, 4
      %v3287 = vpop.permute.xlu0 %3286
      %3288 = vrot.lane.b32.xlu0 %v3094, 4
      %v3289 = vpop.permute.xlu0 %3288
      %3290 = vrot.lane.b32.xlu0 %v3095, 4
      %v3291 = vpop.permute.xlu0 %3290
      %3292 = vrot.lane.b32.xlu0 %v3096, 4
      %v3293 = vpop.permute.xlu0 %3292
      %3294 = vrot.lane.b32.xlu0 %v3097, 4
      %v3295 = vpop.permute.xlu0 %3294
      %3296 = vrot.lane.b32.xlu0 %v3098, 4
      %v3297 = vpop.permute.xlu0 %3296
      %3298 = vrot.lane.b32.xlu0 %v3099, 4
      %v3299 = vpop.permute.xlu0 %3298
      %3300 = vrot.lane.b32.xlu0 %v3100, 4
      %v3301 = vpop.permute.xlu0 %3300
      %3302 = vrot.lane.b32.xlu0 %v3101, 4
      %v3303 = vpop.permute.xlu0 %3302
      %3304 = vrot.lane.b32.xlu0 %v3102, 4
      %v3305 = vpop.permute.xlu0 %3304
      %3306 = vrot.lane.b32.xlu0 %v3103, 4
      %v3307 = vpop.permute.xlu0 %3306
      %3308 = vrot.lane.b32.xlu0 %v3104, 4
      %v3309 = vpop.permute.xlu0 %3308
      %3310 = vrot.lane.b32.xlu0 %v3105, 4
      %v3311 = vpop.permute.xlu0 %3310
      %3312 = vrot.lane.b32.xlu0 %v3106, 4
      %v3313 = vpop.permute.xlu0 %3312
      %3314 = vrot.lane.b32.xlu0 %v3107, 4
      %v3315 = vpop.permute.xlu0 %3314
      %3316 = vrot.lane.b32.xlu0 %v3108, 4
      %v3317 = vpop.permute.xlu0 %3316
      %3318 = vrot.lane.b32.xlu0 %v3109, 4
      %v3319 = vpop.permute.xlu0 %3318
      %3320 = vrot.lane.b32.xlu0 %v3110, 4
      %v3321 = vpop.permute.xlu0 %3320
      %3322 = vrot.lane.b32.xlu0 %v3111, 4
      %v3323 = vpop.permute.xlu0 %3322
      %3324 = vrot.lane.b32.xlu0 %v3112, 4
      %v3325 = vpop.permute.xlu0 %3324
      %3326 = vrot.lane.b32.xlu0 %v3113, 4
      %v3327 = vpop.permute.xlu0 %3326
      %3328 = vrot.lane.b32.xlu0 %v3114, 4
      %v3329 = vpop.permute.xlu0 %3328
      %3330 = vrot.lane.b32.xlu0 %v3115, 4
      %v3331 = vpop.permute.xlu0 %3330
      %3332 = vrot.lane.b32.xlu0 %v3116, 4
      %v3333 = vpop.permute.xlu0 %3332
      %3334 = vrot.lane.b32.xlu0 %v3117, 4
      %v3335 = vpop.permute.xlu0 %3334
      %3336 = vrot.lane.b32.xlu0 %v3118, 4
      %v3337 = vpop.permute.xlu0 %3336
      %3338 = vrot.lane.b32.xlu0 %v3119, 4
      %v3339 = vpop.permute.xlu0 %3338
      %3340 = vrot.lane.b32.xlu0 %v3120, 4
      %v3341 = vpop.permute.xlu0 %3340
      %3342 = vrot.lane.b32.xlu0 %v3121, 4
      %v3343 = vpop.permute.xlu0 %3342
      %3344 = vrot.lane.b32.xlu0 %v3122, 4
      %v3345 = vpop.permute.xlu0 %3344
      %3346 = vrot.lane.b32.xlu0 %v3123, 4
      %v3347 = vpop.permute.xlu0 %3346
      %3412 = vrot.lane.b32.xlu0 %v3156, 8
      %v3413 = vpop.permute.xlu0 %3412
      %3414 = vrot.lane.b32.xlu0 %v3157, 8
      %v3415 = vpop.permute.xlu0 %3414
      %3416 = vrot.lane.b32.xlu0 %v3158, 8
      %v3417 = vpop.permute.xlu0 %3416
      %3418 = vrot.lane.b32.xlu0 %v3159, 8
      %v3419 = vpop.permute.xlu0 %3418
      %3420 = vrot.lane.b32.xlu0 %v3160, 8
      %v3421 = vpop.permute.xlu0 %3420
      %3422 = vrot.lane.b32.xlu0 %v3161, 8
      %v3423 = vpop.permute.xlu0 %3422
      %3424 = vrot.lane.b32.xlu0 %v3162, 8
      %v3425 = vpop.permute.xlu0 %3424
      %3426 = vrot.lane.b32.xlu0 %v3163, 8
      %v3427 = vpop.permute.xlu0 %3426
      %3428 = vrot.lane.b32.xlu0 %v3164, 8
      %v3429 = vpop.permute.xlu0 %3428
      %3430 = vrot.lane.b32.xlu0 %v3165, 8
      %v3431 = vpop.permute.xlu0 %3430
      %3432 = vrot.lane.b32.xlu0 %v3166, 8
      %v3433 = vpop.permute.xlu0 %3432
      %3434 = vrot.lane.b32.xlu0 %v3167, 8
      %v3435 = vpop.permute.xlu0 %3434
      %3436 = vrot.lane.b32.xlu0 %v3168, 8
      %v3437 = vpop.permute.xlu0 %3436
      %3438 = vrot.lane.b32.xlu0 %v3169, 8
      %v3439 = vpop.permute.xlu0 %3438
      %3440 = vrot.lane.b32.xlu0 %v3170, 8
      %v3441 = vpop.permute.xlu0 %3440
      %3442 = vrot.lane.b32.xlu0 %v3171, 8
      %v3443 = vpop.permute.xlu0 %3442
      %3444 = vrot.lane.b32.xlu0 %v3172, 8
      %v3445 = vpop.permute.xlu0 %3444
      %3446 = vrot.lane.b32.xlu0 %v3173, 8
      %v3447 = vpop.permute.xlu0 %3446
      %3448 = vrot.lane.b32.xlu0 %v3174, 8
      %v3449 = vpop.permute.xlu0 %3448
      %3450 = vrot.lane.b32.xlu0 %v3175, 8
      %v3451 = vpop.permute.xlu0 %3450
      %3452 = vrot.lane.b32.xlu0 %v3176, 8
      %v3453 = vpop.permute.xlu0 %3452
      %3454 = vrot.lane.b32.xlu0 %v3177, 8
      %v3455 = vpop.permute.xlu0 %3454
      %3456 = vrot.lane.b32.xlu0 %v3178, 8
      %v3457 = vpop.permute.xlu0 %3456
      %3458 = vrot.lane.b32.xlu0 %v3179, 8
      %v3459 = vpop.permute.xlu0 %3458
      %3460 = vrot.lane.b32.xlu0 %v3180, 8
      %v3461 = vpop.permute.xlu0 %3460
      %3462 = vrot.lane.b32.xlu0 %v3181, 8
      %v3463 = vpop.permute.xlu0 %3462
      %3464 = vrot.lane.b32.xlu0 %v3182, 8
      %v3465 = vpop.permute.xlu0 %3464
      %3466 = vrot.lane.b32.xlu0 %v3183, 8
      %v3467 = vpop.permute.xlu0 %3466
      %3468 = vrot.lane.b32.xlu0 %v3184, 8
      %v3469 = vpop.permute.xlu0 %3468
      %3470 = vrot.lane.b32.xlu0 %v3185, 8
      %v3471 = vpop.permute.xlu0 %3470
      %3472 = vrot.lane.b32.xlu0 %v3186, 8
      %v3473 = vpop.permute.xlu0 %3472
      %3474 = vrot.lane.b32.xlu0 %v3187, 8
      %v3475 = vpop.permute.xlu0 %3474
      %3540 = vrot.lane.b32.xlu0 %v3220, 12
      %v3541 = vpop.permute.xlu0 %3540
      %3542 = vrot.lane.b32.xlu0 %v3221, 12
      %v3543 = vpop.permute.xlu0 %3542
      %3544 = vrot.lane.b32.xlu0 %v3222, 12
      %v3545 = vpop.permute.xlu0 %3544
      %3546 = vrot.lane.b32.xlu0 %v3223, 12
      %v3547 = vpop.permute.xlu0 %3546
      %3548 = vrot.lane.b32.xlu0 %v3224, 12
      %v3549 = vpop.permute.xlu0 %3548
      %3550 = vrot.lane.b32.xlu0 %v3225, 12
      %v3551 = vpop.permute.xlu0 %3550
      %3552 = vrot.lane.b32.xlu0 %v3226, 12
      %v3553 = vpop.permute.xlu0 %3552
      %3554 = vrot.lane.b32.xlu0 %v3227, 12
      %v3555 = vpop.permute.xlu0 %3554
      %3556 = vrot.lane.b32.xlu0 %v3228, 12
      %v3557 = vpop.permute.xlu0 %3556
      %3558 = vrot.lane.b32.xlu0 %v3229, 12
      %v3559 = vpop.permute.xlu0 %3558
      %3560 = vrot.lane.b32.xlu0 %v3230, 12
      %v3561 = vpop.permute.xlu0 %3560
      %3562 = vrot.lane.b32.xlu0 %v3231, 12
      %v3563 = vpop.permute.xlu0 %3562
      %3564 = vrot.lane.b32.xlu0 %v3232, 12
      %v3565 = vpop.permute.xlu0 %3564
      %3566 = vrot.lane.b32.xlu0 %v3233, 12
      %v3567 = vpop.permute.xlu0 %3566
      %3568 = vrot.lane.b32.xlu0 %v3234, 12
      %v3569 = vpop.permute.xlu0 %3568
      %3570 = vrot.lane.b32.xlu0 %v3235, 12
      %v3571 = vpop.permute.xlu0 %3570
      %3572 = vrot.lane.b32.xlu0 %v3236, 12
      %v3573 = vpop.permute.xlu0 %3572
      %3574 = vrot.lane.b32.xlu0 %v3237, 12
      %v3575 = vpop.permute.xlu0 %3574
      %3576 = vrot.lane.b32.xlu0 %v3238, 12
      %v3577 = vpop.permute.xlu0 %3576
      %3578 = vrot.lane.b32.xlu0 %v3239, 12
      %v3579 = vpop.permute.xlu0 %3578
      %3580 = vrot.lane.b32.xlu0 %v3240, 12
      %v3581 = vpop.permute.xlu0 %3580
      %3582 = vrot.lane.b32.xlu0 %v3241, 12
      %v3583 = vpop.permute.xlu0 %3582
      %3584 = vrot.lane.b32.xlu0 %v3242, 12
      %v3585 = vpop.permute.xlu0 %3584
      %3586 = vrot.lane.b32.xlu0 %v3243, 12
      %v3587 = vpop.permute.xlu0 %3586
      %3588 = vrot.lane.b32.xlu0 %v3244, 12
      %v3589 = vpop.permute.xlu0 %3588
      %3590 = vrot.lane.b32.xlu0 %v3245, 12
      %v3591 = vpop.permute.xlu0 %3590
      %3592 = vrot.lane.b32.xlu0 %v3246, 12
      %v3593 = vpop.permute.xlu0 %3592
      %3594 = vrot.lane.b32.xlu0 %v3247, 12
      %v3595 = vpop.permute.xlu0 %3594
      %3596 = vrot.lane.b32.xlu0 %v3248, 12
      %v3597 = vpop.permute.xlu0 %3596
      %3598 = vrot.lane.b32.xlu0 %v3249, 12
      %v3599 = vpop.permute.xlu0 %3598
      %3600 = vrot.lane.b32.xlu0 %v3250, 12
      %v3601 = vpop.permute.xlu0 %3600
      %3602 = vrot.lane.b32.xlu0 %v3251, 12
      %v3603 = vpop.permute.xlu0 %3602
      %v3636 = vsel %vm2286, %v3028, %v3285
      %v3637 = vsel %vm2286, %v3029, %v3287
      %v3638 = vsel %vm2286, %v3030, %v3289
      %v3639 = vsel %vm2286, %v3031, %v3291
      %v3640 = vsel %vm2286, %v3032, %v3293
      %v3641 = vsel %vm2286, %v3033, %v3295
      %v3642 = vsel %vm2286, %v3034, %v3297
      %v3643 = vsel %vm2286, %v3035, %v3299
      %v3644 = vsel %vm2286, %v3036, %v3301
      %v3645 = vsel %vm2286, %v3037, %v3303
      %v3646 = vsel %vm2286, %v3038, %v3305
      %v3647 = vsel %vm2286, %v3039, %v3307
      %v3648 = vsel %vm2286, %v3040, %v3309
      %v3649 = vsel %vm2286, %v3041, %v3311
      %v3650 = vsel %vm2286, %v3042, %v3313
      %v3651 = vsel %vm2286, %v3043, %v3315
      %v3652 = vsel %vm2286, %v3044, %v3317
      %v3653 = vsel %vm2286, %v3045, %v3319
      %v3654 = vsel %vm2286, %v3046, %v3321
      %v3655 = vsel %vm2286, %v3047, %v3323
      %v3656 = vsel %vm2286, %v3048, %v3325
      %v3657 = vsel %vm2286, %v3049, %v3327
      %v3658 = vsel %vm2286, %v3050, %v3329
      %v3659 = vsel %vm2286, %v3051, %v3331
      %v3660 = vsel %vm2286, %v3052, %v3333
      %v3661 = vsel %vm2286, %v3053, %v3335
      %v3662 = vsel %vm2286, %v3054, %v3337
      %v3663 = vsel %vm2286, %v3055, %v3339
      %v3664 = vsel %vm2286, %v3056, %v3341
      %v3665 = vsel %vm2286, %v3057, %v3343
      %v3666 = vsel %vm2286, %v3058, %v3345
      %v3667 = vsel %vm2286, %v3059, %v3347
      %v3668 = vsel %vm1096, %v3636, %v3413
      %v3669 = vsel %vm1096, %v3637, %v3415
      %v3670 = vsel %vm1096, %v3638, %v3417
      %v3671 = vsel %vm1096, %v3639, %v3419
      %v3672 = vsel %vm1096, %v3640, %v3421
      %v3673 = vsel %vm1096, %v3641, %v3423
      %v3674 = vsel %vm1096, %v3642, %v3425
      %v3675 = vsel %vm1096, %v3643, %v3427
      %v3676 = vsel %vm1096, %v3644, %v3429
      %v3677 = vsel %vm1096, %v3645, %v3431
      %v3678 = vsel %vm1096, %v3646, %v3433
      %v3679 = vsel %vm1096, %v3647, %v3435
      %v3680 = vsel %vm1096, %v3648, %v3437
      %v3681 = vsel %vm1096, %v3649, %v3439
      %v3682 = vsel %vm1096, %v3650, %v3441
      %v3683 = vsel %vm1096, %v3651, %v3443
      %v3684 = vsel %vm1096, %v3652, %v3445
      %v3685 = vsel %vm1096, %v3653, %v3447
      %v3686 = vsel %vm1096, %v3654, %v3449
      %v3687 = vsel %vm1096, %v3655, %v3451
      %v3688 = vsel %vm1096, %v3656, %v3453
      %v3689 = vsel %vm1096, %v3657, %v3455
      %v3690 = vsel %vm1096, %v3658, %v3457
      %v3691 = vsel %vm1096, %v3659, %v3459
      %v3692 = vsel %vm1096, %v3660, %v3461
      %v3693 = vsel %vm1096, %v3661, %v3463
      %v3694 = vsel %vm1096, %v3662, %v3465
      %v3695 = vsel %vm1096, %v3663, %v3467
      %v3696 = vsel %vm1096, %v3664, %v3469
      %v3697 = vsel %vm1096, %v3665, %v3471
      %v3698 = vsel %vm1096, %v3666, %v3473
      %v3699 = vsel %vm1096, %v3667, %v3475
      %vm3700 = vcmask 97280
      %v3701 = vsel %vm3700, %v3668, %v3541
      %v3702 = vsel %vm3700, %v3669, %v3543
      %v3703 = vsel %vm3700, %v3670, %v3545
      %v3704 = vsel %vm3700, %v3671, %v3547
      %v3705 = vsel %vm3700, %v3672, %v3549
      %v3706 = vsel %vm3700, %v3673, %v3551
      %v3707 = vsel %vm3700, %v3674, %v3553
      %v3708 = vsel %vm3700, %v3675, %v3555
      %v3709 = vsel %vm3700, %v3676, %v3557
      %v3710 = vsel %vm3700, %v3677, %v3559
      %v3711 = vsel %vm3700, %v3678, %v3561
      %v3712 = vsel %vm3700, %v3679, %v3563
      %v3713 = vsel %vm3700, %v3680, %v3565
      %v3714 = vsel %vm3700, %v3681, %v3567
      %v3715 = vsel %vm3700, %v3682, %v3569
      %v3716 = vsel %vm3700, %v3683, %v3571
      %v3717 = vsel %vm3700, %v3684, %v3573
      %v3718 = vsel %vm3700, %v3685, %v3575
      %v3719 = vsel %vm3700, %v3686, %v3577
      %v3720 = vsel %vm3700, %v3687, %v3579
      %v3721 = vsel %vm3700, %v3688, %v3581
      %v3722 = vsel %vm3700, %v3689, %v3583
      %v3723 = vsel %vm3700, %v3690, %v3585
      %v3724 = vsel %vm3700, %v3691, %v3587
      %v3725 = vsel %vm3700, %v3692, %v3589
      %v3726 = vsel %vm3700, %v3693, %v3591
      %v3727 = vsel %vm3700, %v3694, %v3593
      %v3728 = vsel %vm3700, %v3695, %v3595
      %v3729 = vsel %vm3700, %v3696, %v3597
      %v3730 = vsel %vm3700, %v3697, %v3599
      %v3731 = vsel %vm3700, %v3698, %v3601
      %v3732 = vsel %vm3700, %v3699, %v3603
      %3733 = vst.msk [vmem:[%s170] sm:$0xff] %vm1145, %v3701
      %3734 = vst.msk [vmem:[%s170 + $0x8] sm:$0xff] %vm1145, %v3702
      %3735 = vst.msk [vmem:[%s170 + $0x10] sm:$0xff] %vm1145, %v3703
      %3736 = vst.msk [vmem:[%s170 + $0x18] sm:$0xff] %vm1145, %v3704
      %3737 = vst.msk [vmem:[%s170 + $0x20] sm:$0xff] %vm1145, %v3705
      %3738 = vst.msk [vmem:[%s170 + $0x28] sm:$0xff] %vm1145, %v3706
      %3739 = vst.msk [vmem:[%s170 + $0x30] sm:$0xff] %vm1145, %v3707
      %3740 = vst.msk [vmem:[%s170 + $0x38] sm:$0xff] %vm1145, %v3708
      %3741 = vst.msk [vmem:[%s170 + $0x40] sm:$0xff] %vm1145, %v3709
      %3742 = vst.msk [vmem:[%s170 + $0x48] sm:$0xff] %vm1145, %v3710
      %3743 = vst.msk [vmem:[%s170 + $0x50] sm:$0xff] %vm1145, %v3711
      %3744 = vst.msk [vmem:[%s170 + $0x58] sm:$0xff] %vm1145, %v3712
      %3745 = vst.msk [vmem:[%s170 + $0x60] sm:$0xff] %vm1145, %v3713
      %3746 = vst.msk [vmem:[%s170 + $0x68] sm:$0xff] %vm1145, %v3714
      %3747 = vst.msk [vmem:[%s170 + $0x70] sm:$0xff] %vm1145, %v3715
      %3748 = vst.msk [vmem:[%s170 + $0x78] sm:$0xff] %vm1145, %v3716
      %3749 = vst.msk [vmem:[%s170 + $0x80] sm:$0xff] %vm1145, %v3717
      %3750 = vst.msk [vmem:[%s170 + $0x88] sm:$0xff] %vm1145, %v3718
      %3751 = vst.msk [vmem:[%s170 + $0x90] sm:$0xff] %vm1145, %v3719
      %3752 = vst.msk [vmem:[%s170 + $0x98] sm:$0xff] %vm1145, %v3720
      %3753 = vst.msk [vmem:[%s170 + $0xa0] sm:$0xff] %vm1145, %v3721
      %3754 = vst.msk [vmem:[%s170 + $0xa8] sm:$0xff] %vm1145, %v3722
      %3755 = vst.msk [vmem:[%s170 + $0xb0] sm:$0xff] %vm1145, %v3723
      %3756 = vst.msk [vmem:[%s170 + $0xb8] sm:$0xff] %vm1145, %v3724
      %3757 = vst.msk [vmem:[%s170 + $0xc0] sm:$0xff] %vm1145, %v3725
      %3758 = vst.msk [vmem:[%s170 + $0xc8] sm:$0xff] %vm1145, %v3726
      %3759 = vst.msk [vmem:[%s170 + $0xd0] sm:$0xff] %vm1145, %v3727
      %3760 = vst.msk [vmem:[%s170 + $0xd8] sm:$0xff] %vm1145, %v3728
      %3761 = vst.msk [vmem:[%s170 + $0xe0] sm:$0xff] %vm1145, %v3729
      %3762 = vst.msk [vmem:[%s170 + $0xe8] sm:$0xff] %vm1145, %v3730
      %3763 = vst.msk [vmem:[%s170 + $0xf0] sm:$0xff] %vm1145, %v3731
      %3764 = vst.msk [vmem:[%s170 + $0xf8] sm:$0xff] %vm1145, %v3732
      %p3765 = scmp.lt.s32.totalorder %s14, 1
      %s3766 = scalar_select %p3765, %s14, 1
      %s3767 = smul.addr %s3766, 32
      %s3768 = smul.addr %s3767, 8
      %s3769 = scalar_lea.vmem %s3, %s3768
      // Predicated region
      $region33: #{tpu_custom_call.1} parent=31 // pred_check
        %p3770 = pneg %p100
      $region34: #{tpu_custom_call.1} parent=31 // pred_check_branch
        %3772 = sbr.rel (%p3770) target = $region36
      $region35: #{tpu_custom_call.1} parent=31 // pred_region
        _
      $region36: #{tpu_custom_call.1} parent=31 // pred_fallthru
        _
    $region32: #{tpu_custom_call.1} parent=5 // pred_fallthru
      _
    %p3773 = scmp.le.s32.totalorder 2, %s9
    // Predicated region
    $region37: #{tpu_custom_call.1} parent=5 // pred_check
      %p3774 = pneg %p3773
    $region38: #{tpu_custom_call.1} parent=5 // pred_check_branch
      %3776 = sbr.rel (%p3774) target = $region40
    $region39: #{tpu_custom_call.1} parent=5 // pred_region
      %s3777 = ssub.s32 %s9, 2
      // Predicated region
      $region41: #{tpu_custom_call.1} parent=39 // pred_check
        %p3778 = pneg %p106
      $region42: #{tpu_custom_call.1} parent=39 // pred_check_branch
        %3780 = sbr.rel (%p3778) target = $region44
      $region43: #{tpu_custom_call.1} parent=39 // pred_region
        %p3781 = scmp.lt.s32.totalorder %s15, 1
        %s3782 = scalar_select %p3781, %s15, 1
        %s3783 = smul.addr %s3782, 32
        %s3784 = smul.addr %s3783, 8
        %s3785 = scalar_lea.vmem %s3, %s3784
      $region44: #{tpu_custom_call.1} parent=39 // pred_fallthru
        _
    $region40: #{tpu_custom_call.1} parent=5 // pred_fallthru
      _
  $region6: #{tpu_custom_call.1} parent=0 // loop_footer
    %s13 = sadd.s32 1, %s9
  $region7: #{tpu_custom_call.1} parent=0 // loop_footer_branch
    %8 = sbr.rel target = $region3
  $region8: #{tpu_custom_call.1} parent=0 // loop_exit
    _

</llo_original>
